<compile_context>
chip_gen: v5e
topology: v5e:2x2
jax: 0.10.0
libtpu: 0.0.40
codegen_flags: <defaults>
</compile_context>

<pallas_src>
import functools

import jax
import jax.numpy as jnp
from jax import lax
from jax.experimental import pallas as pl
from jax.experimental.pallas import tpu as pltpu

LN_EPS = 1e-5


def _round_up(x, m):
    return (x + m - 1) // m * m


def _pad2(a, rows, cols):
    return jnp.pad(a, ((0, rows - a.shape[0]), (0, cols - a.shape[1])))


def _pad_gate_cols(w, d, dp):
    """Pad the trailing 4*d gate axis ([i|f|g|o], each d wide) to 4*dp, per gate."""
    lead = w.shape[:-1]
    w = w.reshape(lead + (4, d))
    w = jnp.pad(w, [(0, 0)] * len(lead) + [(0, 0), (0, dp - d)])
    return w.reshape(lead + (4 * dp,))


def decoder_kernel(x_ref, enc_ref, ctx_ref, w_gates_ref, b_gates_ref, w_out_ref,
                   out_ref, h_scr, c_scr, feed_scr, *, inv_n, dp, t_steps):
    # First time-block of a batch tile -> reset recurrent state, matching PyTorch:
    # prev_hidden = encoder_out, prev_cell = 0, input_feed = 0.
    @pl.when(pl.program_id(1) == 0)
    def _():
        h_scr[...] = enc_ref[...]
        c_scr[...] = jnp.zeros_like(c_scr)
        feed_scr[...] = jnp.zeros_like(feed_scr)

    w_gates = w_gates_ref[...]          # (3*dp, 4*dp)  LN-affine folded, ih+hh fused
    b_gates = b_gates_ref[...]          # (1, 4*dp)     b_ih + b_hh + ln_b @ W_ih
    w_out = w_out_ref[...]              # (dp, dp)      attention output proj (hidden half)
    ctx = ctx_ref[...]                  # (bb, dp)      precomputed attention context term

    # T timesteps per grid step; fully unrolled at trace time (small static T) to
    # amortize the per-grid-step overhead over T steps of the serial recurrence.
    for t in range(t_steps):
        x_t = x_ref[t]                  # (bb, dp)
        feed = feed_scr[...]
        h = h_scr[...]
        c = c_scr[...]

        # LayerNorm over the real 2*D features of concat([x_t, feed]): stats computed
        # analytically from the two halves (padded lanes are zero so sums are exact);
        # the affine (ln_w, ln_b) is folded into w_gates / b_gates in the wrapper.
        s1 = jnp.sum(x_t, axis=-1, keepdims=True) + jnp.sum(feed, axis=-1, keepdims=True)
        s2 = (jnp.sum(x_t * x_t, axis=-1, keepdims=True)
              + jnp.sum(feed * feed, axis=-1, keepdims=True))
        mean = s1 * inv_n
        var = s2 * inv_n - mean * mean
        rstd = lax.rsqrt(var + LN_EPS)
        xn = (x_t - mean) * rstd
        fn = (feed - mean) * rstd

        # Single fused gate matmul: [xn, fn, h] @ [ln_w*W_ih ; W_hh] + fused bias.
        op = jnp.concatenate([xn, fn, h], axis=1)                    # (bb, 3*dp)
        gates = jnp.dot(op.astype(w_gates.dtype), w_gates,
                        preferred_element_type=jnp.float32) + b_gates
        i_g = jax.nn.sigmoid(gates[:, 0 * dp:1 * dp])
        f_g = jax.nn.sigmoid(gates[:, 1 * dp:2 * dp])
        g_g = jnp.tanh(gates[:, 2 * dp:3 * dp])
        o_g = jax.nn.sigmoid(gates[:, 3 * dp:4 * dp])
        c_new = f_g * c + i_g * g_g
        h_new = o_g * jnp.tanh(c_new)

        # Attention with srclen == 1: softmax over the single source position is 1,
        # so ctx is loop-invariant (precomputed in the wrapper) and input_proj only
        # fed the cancelled scores (dead compute, removed from the kernel).
        out = jnp.tanh(jnp.dot(h_new.astype(w_out.dtype), w_out,
                               preferred_element_type=jnp.float32) + ctx)

        h_scr[...] = h_new
        c_scr[...] = c_new
        feed_scr[...] = out
        out_ref[t] = out


def lstm_decoder_forward(tokens, encoder_out, params, *, t_block=8,
                         matmul_dtype=jnp.float32):
    """Pallas forward. tokens: (bsz, seqlen) int32, encoder_out: (bsz, D) f32.
    Returns (bsz, seqlen, num_buckets) f32, matching the PyTorch forward (eval mode)."""
    bsz, seqlen = tokens.shape
    D = encoder_out.shape[-1]
    V = params["w_fc_t"].shape[-1]
    f32 = jnp.float32

    dp = _round_up(D, 128)            # lane-pad feature dim
    bsz_p = _round_up(bsz, 8)         # sublane-pad batch dim
    t_steps = min(t_block, seqlen)    # timesteps per grid step
    seqlen_p = _round_up(seqlen, t_steps)
    # Batch tile: split in two for big batches so the parallel grid axis can feed both
    # v7x TensorCores; small batches stay in one tile.
    bb = bsz_p // 2 if (bsz_p >= 16 and (bsz_p // 2) % 8 == 0) else bsz_p

    # ---- glue: embedding lookup (dropout_in is a no-op in eval mode) ----
    x = jnp.take(params["embed"], tokens, axis=0).astype(f32)      # (bsz, seqlen, D)
    x = jnp.transpose(x, (1, 0, 2))                                # (seqlen, bsz, D)
    x = jnp.pad(x, ((0, seqlen_p - seqlen), (0, bsz_p - bsz), (0, dp - D)))

    enc = jnp.pad(encoder_out.astype(f32), ((0, bsz_p - bsz), (0, dp - D)))

    # ---- loop-invariant precomputation (once, outside the recurrence) ----
    ln_w = params["ln_w"].astype(f32)
    ln_b = params["ln_b"].astype(f32)
    w_ih = params["w_ih_t"].astype(f32)                            # (2D, 4D)
    w_hh = params["w_hh_t"].astype(f32)                            # (D, 4D)
    w_x = _pad_gate_cols(ln_w[:D, None] * w_ih[:D], D, dp)         # x-half of LN-scaled W_ih
    w_f = _pad_gate_cols(ln_w[D:, None] * w_ih[D:], D, dp)         # feed-half
    w_h = _pad_gate_cols(w_hh, D, dp)
    w_gates = jnp.concatenate([_pad2(w_x, dp, 4 * dp),
                               _pad2(w_f, dp, 4 * dp),
                               _pad2(w_h, dp, 4 * dp)], axis=0)    # (3*dp, 4*dp)
    b_gates = _pad_gate_cols(params["b_ih"].astype(f32) + params["b_hh"].astype(f32)
                             + ln_b @ w_ih, D, dp)[None, :]        # (1, 4*dp)
    # srclen == 1 => softmax == 1 => context contribution is constant across timesteps.
    ctx = (encoder_out.astype(f32) @ params["w_enc_t"].astype(f32)) \
        @ params["w_out_t"][:D].astype(f32)                        # (bsz, D)
    ctx = jnp.pad(ctx, ((0, bsz_p - bsz), (0, dp - D)))            # (bsz_p, dp)
    w_out_h = _pad2(params["w_out_t"][D:].astype(f32), dp, dp)     # (dp, dp)

    grid = (bsz_p // bb, seqlen_p // t_steps)   # (parallel batch tiles, sequential time)
    kernel = functools.partial(decoder_kernel, inv_n=1.0 / (2 * D), dp=dp,
                               t_steps=t_steps)
    full = lambda s: pl.BlockSpec(s, lambda b, t: tuple(0 for _ in s))
    # NOTE: the weight specs below have constant index_maps so they are fetched only
    # once; at production sizes pass them untiled (memory_space=pltpu.MemorySpace.VMEM)
    # to also avoid the 2x double-buffer reservation (matters on v7x's 64 MiB VMEM).

    outs = pl.pallas_call(
        kernel,
        out_shape=jax.ShapeDtypeStruct((seqlen_p, bsz_p, dp), jnp.float32),
        grid_spec=pltpu.PrefetchScalarGridSpec(
            num_scalar_prefetch=0,
            grid=grid,
            in_specs=[
                pl.BlockSpec((t_steps, bb, dp), lambda b, t: (t, b, 0)),  # embedded tokens
                pl.BlockSpec((bb, dp), lambda b, t: (b, 0)),              # encoder_out
                pl.BlockSpec((bb, dp), lambda b, t: (b, 0)),              # precomputed ctx term
                full((3 * dp, 4 * dp)),                                   # fused/folded gate W
                full((1, 4 * dp)),                                        # fused gate bias
                full((dp, dp)),                                           # attn output proj (h half)
            ],
            out_specs=pl.BlockSpec((t_steps, bb, dp), lambda b, t: (t, b, 0)),
            scratch_shapes=[pltpu.VMEM((bb, dp), jnp.float32)] * 3,       # hidden, cell, input_feed
        ),
        compiler_params=pltpu.CompilerParams(
            dimension_semantics=("parallel", "arbitrary")),               # time is a recurrence
    )(x, enc, ctx, w_gates.astype(matmul_dtype), b_gates, w_out_h.astype(matmul_dtype))

    # ---- hoisted fc_out: one batched (bsz*seqlen, D) @ (D, V) matmul (XLA) ----
    outs = jnp.transpose(outs[:seqlen, :bsz, :D], (1, 0, 2))              # (bsz, seqlen, D)
    logits = jnp.dot(outs, params["w_fc_t"].astype(f32),
                     precision=lax.Precision.HIGHEST) + params["b_fc"].astype(f32)
    return logits                                                         # (bsz, seqlen, V)


def lstm_decoder_reference(tokens, encoder_out, params):
    """Pure-JAX reference that mirrors the PyTorch forward op-by-op (eval mode)."""
    bsz, seqlen = tokens.shape
    D = encoder_out.shape[-1]
    hp = lax.Precision.HIGHEST

    x = jnp.take(params["embed"], tokens, axis=0).astype(jnp.float32)     # (bsz, seqlen, D)
    x = jnp.transpose(x, (1, 0, 2))                                       # (seqlen, bsz, D)
    source_hids = encoder_out[None].astype(jnp.float32)                   # (srclen=1, bsz, D)

    h = encoder_out.astype(jnp.float32)
    c = jnp.zeros((bsz, D), jnp.float32)
    feed = jnp.zeros((bsz, D), jnp.float32)
    outs = []
    for j in range(seqlen):
        inp = jnp.concatenate([x[j], feed], axis=1)
        mean = jnp.mean(inp, axis=-1, keepdims=True)
        var = jnp.mean((inp - mean) ** 2, axis=-1, keepdims=True)
        inp_n = (inp - mean) / jnp.sqrt(var + LN_EPS) * params["ln_w"] + params["ln_b"]
        gates = (jnp.dot(inp_n, params["w_ih_t"], precision=hp) + params["b_ih"]
                 + jnp.dot(h, params["w_hh_t"], precision=hp) + params["b_hh"])
        i_g = jax.nn.sigmoid(gates[:, 0 * D:1 * D])
        f_g = jax.nn.sigmoid(gates[:, 1 * D:2 * D])
        g_g = jnp.tanh(gates[:, 2 * D:3 * D])
        o_g = jax.nn.sigmoid(gates[:, 3 * D:4 * D])
        c = f_g * c + i_g * g_g
        h = o_g * jnp.tanh(c)
        # AttentionLayer exactly as written in PyTorch (source_hids rebound to proj).
        xp = jnp.dot(h, params["w_inp_t"], precision=hp)                  # (bsz, D)
        sh = jnp.dot(source_hids, params["w_enc_t"], precision=hp)        # (1, bsz, D)
        scores = jnp.sum(sh * xp[None], axis=2)                           # (1, bsz)
        attn = jax.nn.softmax(scores.T, axis=1).T                         # == 1.0 (srclen 1)
        ctx = jnp.sum(attn[:, :, None] * sh, axis=0)                      # (bsz, D)
        out = jnp.tanh(jnp.dot(jnp.concatenate([ctx, h], axis=1),
                               params["w_out_t"], precision=hp))
        feed = out
        outs.append(out)
    outs = jnp.transpose(jnp.stack(outs, axis=0), (1, 0, 2))              # (bsz, seqlen, D)
    return jnp.dot(outs, params["w_fc_t"], precision=hp) + params["b_fc"]


def make_params(key, num_buckets, D):
    ks = jax.random.split(key, 12)
    s = 0.1
    embed = s * jax.random.normal(ks[0], (num_buckets, D), jnp.float32)
    embed = embed.at[0].set(0.0)          # padding_idx = 0
    return {
        "embed": embed,
        # LayerNorm(2D) affine (randomised so the in-wrapper weight folding is exercised).
        "ln_w": 1.0 + s * jax.random.normal(ks[1], (2 * D,), jnp.float32),
        "ln_b": s * jax.random.normal(ks[2], (2 * D,), jnp.float32),
        # LSTMCell(2D -> D); weights pre-transposed to (in_dim, 4D), gate order i,f,g,o.
        "w_ih_t": s * jax.random.normal(ks[3], (2 * D, 4 * D), jnp.float32),
        "b_ih": s * jax.random.normal(ks[4], (4 * D,), jnp.float32),
        "w_hh_t": s * jax.random.normal(ks[5], (D, 4 * D), jnp.float32),
        "b_hh": s * jax.random.normal(ks[6], (4 * D,), jnp.float32),
        # AttentionLayer projections (bias=False), pre-transposed.
        "w_inp_t": s * jax.random.normal(ks[7], (D, D), jnp.float32),   # only feeds softmax over srclen==1
        "w_enc_t": s * jax.random.normal(ks[8], (D, D), jnp.float32),
        "w_out_t": s * jax.random.normal(ks[9], (2 * D, D), jnp.float32),
        # fc_out: Linear(D, num_buckets), pre-transposed.
        "w_fc_t": s * jax.random.normal(ks[10], (D, num_buckets), jnp.float32),
        "b_fc": s * jax.random.normal(ks[11], (num_buckets,), jnp.float32),
    }


if __name__ == "__main__":
    bsz, seqlen, D, V = 2, 8, 32, 128   # D = encoder_embed_dim = embed_dim, V = num_buckets

    key = jax.random.PRNGKey(0)
    k_tok, k_enc, k_par = jax.random.split(key, 3)
    tokens = jax.random.randint(k_tok, (bsz, seqlen), 0, V, dtype=jnp.int32)
    encoder_out = jax.random.normal(k_enc, (bsz, D), jnp.float32)
    params = make_params(k_par, V, D)

    out = jax.block_until_ready(lstm_decoder_forward(tokens, encoder_out, params))
    ref = jax.block_until_ready(lstm_decoder_reference(tokens, encoder_out, params))

    assert out.shape == (bsz, seqlen, V), out.shape
    err = float(jnp.max(jnp.abs(out - ref)))
    assert jnp.allclose(out, ref, rtol=2e-3, atol=2e-3), err
    print("KERNEL_OK")
</pallas_src>

<mosaic_0001>
module attributes {stable_mosaic.version = 11 : i64} {
  func.func @decoder_kernel(%arg0: i32, %arg1: i32, %arg2: memref<8x8x128xf32, #tpu.memory_space<vmem>>, %arg3: memref<8x128xf32, #tpu.memory_space<vmem>>, %arg4: memref<8x128xf32, #tpu.memory_space<vmem>>, %arg5: memref<384x512xf32, #tpu.memory_space<vmem>>, %arg6: memref<1x512xf32, #tpu.memory_space<vmem>>, %arg7: memref<128x128xf32, #tpu.memory_space<vmem>>, %arg8: memref<8x8x128xf32, #tpu.memory_space<vmem>>, %arg9: memref<8x128xf32, #tpu.memory_space<vmem>>, %arg10: memref<8x128xf32, #tpu.memory_space<vmem>>, %arg11: memref<8x128xf32, #tpu.memory_space<vmem>>) attributes {dimension_semantics = [#tpu.dimension_semantics<parallel>, #tpu.dimension_semantics<arbitrary>], iteration_bounds = array<i64: 1, 1>, scalar_prefetch = 0 : i64, scratch_operands = 3 : i64, tpu.core_type = #tpu.core_type<tc>, window_params = [{transform_indices = @transform_0, window_bounds = array<i64: 8, 8, 128>}, {transform_indices = @transform_1, window_bounds = array<i64: 8, 128>}, {transform_indices = @transform_2, window_bounds = array<i64: 8, 128>}, {pipeline_mode = #tpu.pipeline_mode<synchronous>, transform_indices = @transform_3, window_bounds = array<i64: 384, 512>}, {pipeline_mode = #tpu.pipeline_mode<synchronous>, transform_indices = @transform_4, window_bounds = array<i64: 1, 512>}, {pipeline_mode = #tpu.pipeline_mode<synchronous>, transform_indices = @transform_5, window_bounds = array<i64: 128, 128>}, {transform_indices = @transform_6, window_bounds = array<i64: 8, 8, 128>}]} {
    %c0_i32 = arith.constant 0 : i32
    %0 = arith.cmpi eq, %arg1, %c0_i32 : i32
    %1 = arith.extui %0 : i1 to i32
    %c0_i32_0 = arith.constant 0 : i32
    %2 = arith.cmpi ne, %1, %c0_i32_0 : i32
    scf.if %2 {
      %c0_240 = arith.constant 0 : index
      %c0_241 = arith.constant 0 : index
      %583 = vector.load %arg3[%c0_240, %c0_241] : memref<8x128xf32, #tpu.memory_space<vmem>>, vector<8x128xf32>
      %c0_242 = arith.constant 0 : index
      %c0_243 = arith.constant 0 : index
      %584 = vector.load %arg9[%c0_242, %c0_243] : memref<8x128xf32, #tpu.memory_space<vmem>>, vector<8x128xf32>
      tpu.vector_store %arg9[%c0_242, %c0_243], %583 {strides = array<i32>} : memref<8x128xf32, #tpu.memory_space<vmem>>, vector<8x128xf32>,
      %cst_244 = arith.constant 0.000000e+00 : f32
      %585 = vector.broadcast %cst_244 : f32 to vector<8x128xf32>
      %c0_245 = arith.constant 0 : index
      %c0_246 = arith.constant 0 : index
      %586 = vector.load %arg10[%c0_245, %c0_246] : memref<8x128xf32, #tpu.memory_space<vmem>>, vector<8x128xf32>
      tpu.vector_store %arg10[%c0_245, %c0_246], %585 {strides = array<i32>} : memref<8x128xf32, #tpu.memory_space<vmem>>, vector<8x128xf32>,
      %cst_247 = arith.constant 0.000000e+00 : f32
      %587 = vector.broadcast %cst_247 : f32 to vector<8x128xf32>
      %c0_248 = arith.constant 0 : index
      %c0_249 = arith.constant 0 : index
      %588 = vector.load %arg11[%c0_248, %c0_249] : memref<8x128xf32, #tpu.memory_space<vmem>>, vector<8x128xf32>
      tpu.vector_store %arg11[%c0_248, %c0_249], %587 {strides = array<i32>} : memref<8x128xf32, #tpu.memory_space<vmem>>, vector<8x128xf32>,
    } else {
    }
    %c0 = arith.constant 0 : index
    %c0_1 = arith.constant 0 : index
    %3 = vector.load %arg5[%c0, %c0_1] : memref<384x512xf32, #tpu.memory_space<vmem>>, vector<384x512xf32>
    %c0_2 = arith.constant 0 : index
    %c0_3 = arith.constant 0 : index
    %4 = vector.load %arg6[%c0_2, %c0_3] : memref<1x512xf32, #tpu.memory_space<vmem>>, vector<1x512xf32>
    %c0_4 = arith.constant 0 : index
    %c0_5 = arith.constant 0 : index
    %5 = vector.load %arg7[%c0_4, %c0_5] : memref<128x128xf32, #tpu.memory_space<vmem>>, vector<128x128xf32>
    %c0_6 = arith.constant 0 : index
    %c0_7 = arith.constant 0 : index
    %6 = vector.load %arg4[%c0_6, %c0_7] : memref<8x128xf32, #tpu.memory_space<vmem>>, vector<8x128xf32>
    %c0_8 = arith.constant 0 : index
    %c0_9 = arith.constant 0 : index
    %c0_10 = arith.constant 0 : index
    %7 = vector.load %arg2[%c0_8, %c0_9, %c0_10] : memref<8x8x128xf32, #tpu.memory_space<vmem>>, vector<1x8x128xf32>
    %8 = vector.shape_cast %7 : vector<1x8x128xf32> to vector<8x128xf32>
    %c0_11 = arith.constant 0 : index
    %c0_12 = arith.constant 0 : index
    %9 = vector.load %arg11[%c0_11, %c0_12] : memref<8x128xf32, #tpu.memory_space<vmem>>, vector<8x128xf32>
    %c0_13 = arith.constant 0 : index
    %c0_14 = arith.constant 0 : index
    %10 = vector.load %arg9[%c0_13, %c0_14] : memref<8x128xf32, #tpu.memory_space<vmem>>, vector<8x128xf32>
    %c0_15 = arith.constant 0 : index
    %c0_16 = arith.constant 0 : index
    %11 = vector.load %arg10[%c0_15, %c0_16] : memref<8x128xf32, #tpu.memory_space<vmem>>, vector<8x128xf32>
    %cst = arith.constant dense<0.000000e+00> : vector<8xf32>
    %12 = vector.multi_reduction <add>, %8, %cst [1] : vector<8x128xf32> to vector<8xf32>
    %13 = vector.shape_cast %12 : vector<8xf32> to vector<8x1xf32>
    %cst_17 = arith.constant dense<0.000000e+00> : vector<8xf32>
    %14 = vector.multi_reduction <add>, %9, %cst_17 [1] : vector<8x128xf32> to vector<8xf32>
    %15 = vector.shape_cast %14 : vector<8xf32> to vector<8x1xf32>
    %16 = arith.addf %13, %15 : vector<8x1xf32>
    %17 = arith.mulf %8, %8 : vector<8x128xf32>
    %cst_18 = arith.constant dense<0.000000e+00> : vector<8xf32>
    %18 = vector.multi_reduction <add>, %17, %cst_18 [1] : vector<8x128xf32> to vector<8xf32>
    %19 = vector.shape_cast %18 : vector<8xf32> to vector<8x1xf32>
    %20 = arith.mulf %9, %9 : vector<8x128xf32>
    %cst_19 = arith.constant dense<0.000000e+00> : vector<8xf32>
    %21 = vector.multi_reduction <add>, %20, %cst_19 [1] : vector<8x128xf32> to vector<8xf32>
    %22 = vector.shape_cast %21 : vector<8xf32> to vector<8x1xf32>
    %23 = arith.addf %19, %22 : vector<8x1xf32>
    %cst_20 = arith.constant 1.562500e-02 : f32
    %24 = vector.broadcast %cst_20 : f32 to vector<8x1xf32>
    %25 = arith.mulf %16, %24 : vector<8x1xf32>
    %cst_21 = arith.constant 1.562500e-02 : f32
    %26 = vector.broadcast %cst_21 : f32 to vector<8x1xf32>
    %27 = arith.mulf %23, %26 : vector<8x1xf32>
    %28 = arith.mulf %25, %25 : vector<8x1xf32>
    %29 = arith.subf %27, %28 : vector<8x1xf32>
    %cst_22 = arith.constant 9.99999974E-6 : f32
    %30 = vector.broadcast %cst_22 : f32 to vector<8x1xf32>
    %31 = arith.addf %29, %30 : vector<8x1xf32>
    %32 = math.rsqrt %31 : vector<8x1xf32>
    %33 = vector.broadcast %25 : vector<8x1xf32> to vector<8x128xf32>
    %34 = arith.subf %8, %33 : vector<8x128xf32>
    %35 = vector.broadcast %32 : vector<8x1xf32> to vector<8x128xf32>
    %36 = arith.mulf %34, %35 : vector<8x128xf32>
    %37 = vector.broadcast %25 : vector<8x1xf32> to vector<8x128xf32>
    %38 = arith.subf %9, %37 : vector<8x128xf32>
    %39 = vector.broadcast %32 : vector<8x1xf32> to vector<8x128xf32>
    %40 = arith.mulf %38, %39 : vector<8x128xf32>
    %41 = tpu.concatenate %36, %40, %10 in 1 : vector<8x128xf32>, vector<8x128xf32>, vector<8x128xf32> -> vector<8x384xf32>
    %cst_23 = arith.constant dense<0.000000e+00> : vector<8x512xf32>
    %42 = tpu.matmul %41, %3, %cst_23 {dimension_numbers = #tpu.dot_dimension_numbers<[1], [0], [0], [1], [0, 0, 1, 1], [], []>} : vector<8x384xf32>, vector<384x512xf32>, vector<8x512xf32> -> vector<8x512xf32>
    %43 = vector.broadcast %4 : vector<1x512xf32> to vector<8x512xf32>
    %44 = arith.addf %42, %43 : vector<8x512xf32>
    %45 = vector.extract_strided_slice %44 {offsets = [0, 0], sizes = [8, 128], strides = [1, 1]} : vector<8x512xf32> to vector<8x128xf32>
    %46 = arith.negf %45 : vector<8x128xf32>
    %47 = math.exp %46 : vector<8x128xf32>
    %cst_24 = arith.constant 1.000000e+00 : f32
    %48 = vector.broadcast %cst_24 : f32 to vector<8x128xf32>
    %49 = arith.addf %48, %47 : vector<8x128xf32>
    %50 = arith.divf %48, %49 : vector<8x128xf32>
    %51 = vector.extract_strided_slice %44 {offsets = [0, 128], sizes = [8, 128], strides = [1, 1]} : vector<8x512xf32> to vector<8x128xf32>
    %52 = arith.negf %51 : vector<8x128xf32>
    %53 = math.exp %52 : vector<8x128xf32>
    %cst_25 = arith.constant 1.000000e+00 : f32
    %54 = vector.broadcast %cst_25 : f32 to vector<8x128xf32>
    %55 = arith.addf %54, %53 : vector<8x128xf32>
    %56 = arith.divf %54, %55 : vector<8x128xf32>
    %57 = vector.extract_strided_slice %44 {offsets = [0, 256], sizes = [8, 128], strides = [1, 1]} : vector<8x512xf32> to vector<8x128xf32>
    %58 = math.tanh %57 : vector<8x128xf32>
    %59 = vector.extract_strided_slice %44 {offsets = [0, 384], sizes = [8, 128], strides = [1, 1]} : vector<8x512xf32> to vector<8x128xf32>
    %60 = arith.negf %59 : vector<8x128xf32>
    %61 = math.exp %60 : vector<8x128xf32>
    %cst_26 = arith.constant 1.000000e+00 : f32
    %62 = vector.broadcast %cst_26 : f32 to vector<8x128xf32>
    %63 = arith.addf %62, %61 : vector<8x128xf32>
    %64 = arith.divf %62, %63 : vector<8x128xf32>
    %65 = arith.mulf %56, %11 : vector<8x128xf32>
    %66 = arith.mulf %50, %58 : vector<8x128xf32>
    %67 = arith.addf %65, %66 : vector<8x128xf32>
    %68 = math.tanh %67 : vector<8x128xf32>
    %69 = arith.mulf %64, %68 : vector<8x128xf32>
    %cst_27 = arith.constant dense<0.000000e+00> : vector<8x128xf32>
    %70 = tpu.matmul %69, %5, %cst_27 {dimension_numbers = #tpu.dot_dimension_numbers<[1], [0], [0], [1], [0, 0, 1, 1], [], []>} : vector<8x128xf32>, vector<128x128xf32>, vector<8x128xf32> -> vector<8x128xf32>
    %71 = arith.addf %70, %6 : vector<8x128xf32>
    %72 = math.tanh %71 : vector<8x128xf32>
    %c0_28 = arith.constant 0 : index
    %c0_29 = arith.constant 0 : index
    %73 = vector.load %arg9[%c0_28, %c0_29] : memref<8x128xf32, #tpu.memory_space<vmem>>, vector<8x128xf32>
    tpu.vector_store %arg9[%c0_28, %c0_29], %69 {strides = array<i32>} : memref<8x128xf32, #tpu.memory_space<vmem>>, vector<8x128xf32>,
    %c0_30 = arith.constant 0 : index
    %c0_31 = arith.constant 0 : index
    %74 = vector.load %arg10[%c0_30, %c0_31] : memref<8x128xf32, #tpu.memory_space<vmem>>, vector<8x128xf32>
    tpu.vector_store %arg10[%c0_30, %c0_31], %67 {strides = array<i32>} : memref<8x128xf32, #tpu.memory_space<vmem>>, vector<8x128xf32>,
    %c0_32 = arith.constant 0 : index
    %c0_33 = arith.constant 0 : index
    %75 = vector.load %arg11[%c0_32, %c0_33] : memref<8x128xf32, #tpu.memory_space<vmem>>, vector<8x128xf32>
    tpu.vector_store %arg11[%c0_32, %c0_33], %72 {strides = array<i32>} : memref<8x128xf32, #tpu.memory_space<vmem>>, vector<8x128xf32>,
    %c0_34 = arith.constant 0 : index
    %c0_35 = arith.constant 0 : index
    %c0_36 = arith.constant 0 : index
    %76 = vector.load %arg8[%c0_34, %c0_35, %c0_36] : memref<8x8x128xf32, #tpu.memory_space<vmem>>, vector<1x8x128xf32>
    %77 = vector.shape_cast %76 : vector<1x8x128xf32> to vector<8x128xf32>
    %78 = vector.shape_cast %72 : vector<8x128xf32> to vector<1x8x128xf32>
    tpu.vector_store %arg8[%c0_34, %c0_35, %c0_36], %78 {strides = array<i32>} : memref<8x8x128xf32, #tpu.memory_space<vmem>>, vector<1x8x128xf32>,
    %c1 = arith.constant 1 : index
    %c0_37 = arith.constant 0 : index
    %c0_38 = arith.constant 0 : index
    %79 = vector.load %arg2[%c1, %c0_37, %c0_38] : memref<8x8x128xf32, #tpu.memory_space<vmem>>, vector<1x8x128xf32>
    %80 = vector.shape_cast %79 : vector<1x8x128xf32> to vector<8x128xf32>
    %c0_39 = arith.constant 0 : index
    %c0_40 = arith.constant 0 : index
    %81 = vector.load %arg11[%c0_39, %c0_40] : memref<8x128xf32, #tpu.memory_space<vmem>>, vector<8x128xf32>
    %c0_41 = arith.constant 0 : index
    %c0_42 = arith.constant 0 : index
    %82 = vector.load %arg9[%c0_41, %c0_42] : memref<8x128xf32, #tpu.memory_space<vmem>>, vector<8x128xf32>
    %c0_43 = arith.constant 0 : index
    %c0_44 = arith.constant 0 : index
    %83 = vector.load %arg10[%c0_43, %c0_44] : memref<8x128xf32, #tpu.memory_space<vmem>>, vector<8x128xf32>
    %cst_45 = arith.constant dense<0.000000e+00> : vector<8xf32>
    %84 = vector.multi_reduction <add>, %80, %cst_45 [1] : vector<8x128xf32> to vector<8xf32>
    %85 = vector.shape_cast %84 : vector<8xf32> to vector<8x1xf32>
    %cst_46 = arith.constant dense<0.000000e+00> : vector<8xf32>
    %86 = vector.multi_reduction <add>, %81, %cst_46 [1] : vector<8x128xf32> to vector<8xf32>
    %87 = vector.shape_cast %86 : vector<8xf32> to vector<8x1xf32>
    %88 = arith.addf %85, %87 : vector<8x1xf32>
    %89 = arith.mulf %80, %80 : vector<8x128xf32>
    %cst_47 = arith.constant dense<0.000000e+00> : vector<8xf32>
    %90 = vector.multi_reduction <add>, %89, %cst_47 [1] : vector<8x128xf32> to vector<8xf32>
    %91 = vector.shape_cast %90 : vector<8xf32> to vector<8x1xf32>
    %92 = arith.mulf %81, %81 : vector<8x128xf32>
    %cst_48 = arith.constant dense<0.000000e+00> : vector<8xf32>
    %93 = vector.multi_reduction <add>, %92, %cst_48 [1] : vector<8x128xf32> to vector<8xf32>
    %94 = vector.shape_cast %93 : vector<8xf32> to vector<8x1xf32>
    %95 = arith.addf %91, %94 : vector<8x1xf32>
    %cst_49 = arith.constant 1.562500e-02 : f32
    %96 = vector.broadcast %cst_49 : f32 to vector<8x1xf32>
    %97 = arith.mulf %88, %96 : vector<8x1xf32>
    %cst_50 = arith.constant 1.562500e-02 : f32
    %98 = vector.broadcast %cst_50 : f32 to vector<8x1xf32>
    %99 = arith.mulf %95, %98 : vector<8x1xf32>
    %100 = arith.mulf %97, %97 : vector<8x1xf32>
    %101 = arith.subf %99, %100 : vector<8x1xf32>
    %cst_51 = arith.constant 9.99999974E-6 : f32
    %102 = vector.broadcast %cst_51 : f32 to vector<8x1xf32>
    %103 = arith.addf %101, %102 : vector<8x1xf32>
    %104 = math.rsqrt %103 : vector<8x1xf32>
    %105 = vector.broadcast %97 : vector<8x1xf32> to vector<8x128xf32>
    %106 = arith.subf %80, %105 : vector<8x128xf32>
    %107 = vector.broadcast %104 : vector<8x1xf32> to vector<8x128xf32>
    %108 = arith.mulf %106, %107 : vector<8x128xf32>
    %109 = vector.broadcast %97 : vector<8x1xf32> to vector<8x128xf32>
    %110 = arith.subf %81, %109 : vector<8x128xf32>
    %111 = vector.broadcast %104 : vector<8x1xf32> to vector<8x128xf32>
    %112 = arith.mulf %110, %111 : vector<8x128xf32>
    %113 = tpu.concatenate %108, %112, %82 in 1 : vector<8x128xf32>, vector<8x128xf32>, vector<8x128xf32> -> vector<8x384xf32>
    %cst_52 = arith.constant dense<0.000000e+00> : vector<8x512xf32>
    %114 = tpu.matmul %113, %3, %cst_52 {dimension_numbers = #tpu.dot_dimension_numbers<[1], [0], [0], [1], [0, 0, 1, 1], [], []>} : vector<8x384xf32>, vector<384x512xf32>, vector<8x512xf32> -> vector<8x512xf32>
    %115 = vector.broadcast %4 : vector<1x512xf32> to vector<8x512xf32>
    %116 = arith.addf %114, %115 : vector<8x512xf32>
    %117 = vector.extract_strided_slice %116 {offsets = [0, 0], sizes = [8, 128], strides = [1, 1]} : vector<8x512xf32> to vector<8x128xf32>
    %118 = arith.negf %117 : vector<8x128xf32>
    %119 = math.exp %118 : vector<8x128xf32>
    %cst_53 = arith.constant 1.000000e+00 : f32
    %120 = vector.broadcast %cst_53 : f32 to vector<8x128xf32>
    %121 = arith.addf %120, %119 : vector<8x128xf32>
    %122 = arith.divf %120, %121 : vector<8x128xf32>
    %123 = vector.extract_strided_slice %116 {offsets = [0, 128], sizes = [8, 128], strides = [1, 1]} : vector<8x512xf32> to vector<8x128xf32>
    %124 = arith.negf %123 : vector<8x128xf32>
    %125 = math.exp %124 : vector<8x128xf32>
    %cst_54 = arith.constant 1.000000e+00 : f32
    %126 = vector.broadcast %cst_54 : f32 to vector<8x128xf32>
    %127 = arith.addf %126, %125 : vector<8x128xf32>
    %128 = arith.divf %126, %127 : vector<8x128xf32>
    %129 = vector.extract_strided_slice %116 {offsets = [0, 256], sizes = [8, 128], strides = [1, 1]} : vector<8x512xf32> to vector<8x128xf32>
    %130 = math.tanh %129 : vector<8x128xf32>
    %131 = vector.extract_strided_slice %116 {offsets = [0, 384], sizes = [8, 128], strides = [1, 1]} : vector<8x512xf32> to vector<8x128xf32>
    %132 = arith.negf %131 : vector<8x128xf32>
    %133 = math.exp %132 : vector<8x128xf32>
    %cst_55 = arith.constant 1.000000e+00 : f32
    %134 = vector.broadcast %cst_55 : f32 to vector<8x128xf32>
    %135 = arith.addf %134, %133 : vector<8x128xf32>
    %136 = arith.divf %134, %135 : vector<8x128xf32>
    %137 = arith.mulf %128, %83 : vector<8x128xf32>
    %138 = arith.mulf %122, %130 : vector<8x128xf32>
    %139 = arith.addf %137, %138 : vector<8x128xf32>
    %140 = math.tanh %139 : vector<8x128xf32>
    %141 = arith.mulf %136, %140 : vector<8x128xf32>
    %cst_56 = arith.constant dense<0.000000e+00> : vector<8x128xf32>
    %142 = tpu.matmul %141, %5, %cst_56 {dimension_numbers = #tpu.dot_dimension_numbers<[1], [0], [0], [1], [0, 0, 1, 1], [], []>} : vector<8x128xf32>, vector<128x128xf32>, vector<8x128xf32> -> vector<8x128xf32>
    %143 = arith.addf %142, %6 : vector<8x128xf32>
    %144 = math.tanh %143 : vector<8x128xf32>
    %c0_57 = arith.constant 0 : index
    %c0_58 = arith.constant 0 : index
    %145 = vector.load %arg9[%c0_57, %c0_58] : memref<8x128xf32, #tpu.memory_space<vmem>>, vector<8x128xf32>
    tpu.vector_store %arg9[%c0_57, %c0_58], %141 {strides = array<i32>} : memref<8x128xf32, #tpu.memory_space<vmem>>, vector<8x128xf32>,
    %c0_59 = arith.constant 0 : index
    %c0_60 = arith.constant 0 : index
    %146 = vector.load %arg10[%c0_59, %c0_60] : memref<8x128xf32, #tpu.memory_space<vmem>>, vector<8x128xf32>
    tpu.vector_store %arg10[%c0_59, %c0_60], %139 {strides = array<i32>} : memref<8x128xf32, #tpu.memory_space<vmem>>, vector<8x128xf32>,
    %c0_61 = arith.constant 0 : index
    %c0_62 = arith.constant 0 : index
    %147 = vector.load %arg11[%c0_61, %c0_62] : memref<8x128xf32, #tpu.memory_space<vmem>>, vector<8x128xf32>
    tpu.vector_store %arg11[%c0_61, %c0_62], %144 {strides = array<i32>} : memref<8x128xf32, #tpu.memory_space<vmem>>, vector<8x128xf32>,
    %c1_63 = arith.constant 1 : index
    %c0_64 = arith.constant 0 : index
    %c0_65 = arith.constant 0 : index
    %148 = vector.load %arg8[%c1_63, %c0_64, %c0_65] : memref<8x8x128xf32, #tpu.memory_space<vmem>>, vector<1x8x128xf32>
    %149 = vector.shape_cast %148 : vector<1x8x128xf32> to vector<8x128xf32>
    %150 = vector.shape_cast %144 : vector<8x128xf32> to vector<1x8x128xf32>
    tpu.vector_store %arg8[%c1_63, %c0_64, %c0_65], %150 {strides = array<i32>} : memref<8x8x128xf32, #tpu.memory_space<vmem>>, vector<1x8x128xf32>,
    %c2 = arith.constant 2 : index
    %c0_66 = arith.constant 0 : index
    %c0_67 = arith.constant 0 : index
    %151 = vector.load %arg2[%c2, %c0_66, %c0_67] : memref<8x8x128xf32, #tpu.memory_space<vmem>>, vector<1x8x128xf32>
    %152 = vector.shape_cast %151 : vector<1x8x128xf32> to vector<8x128xf32>
    %c0_68 = arith.constant 0 : index
    %c0_69 = arith.constant 0 : index
    %153 = vector.load %arg11[%c0_68, %c0_69] : memref<8x128xf32, #tpu.memory_space<vmem>>, vector<8x128xf32>
    %c0_70 = arith.constant 0 : index
    %c0_71 = arith.constant 0 : index
    %154 = vector.load %arg9[%c0_70, %c0_71] : memref<8x128xf32, #tpu.memory_space<vmem>>, vector<8x128xf32>
    %c0_72 = arith.constant 0 : index
    %c0_73 = arith.constant 0 : index
    %155 = vector.load %arg10[%c0_72, %c0_73] : memref<8x128xf32, #tpu.memory_space<vmem>>, vector<8x128xf32>
    %cst_74 = arith.constant dense<0.000000e+00> : vector<8xf32>
    %156 = vector.multi_reduction <add>, %152, %cst_74 [1] : vector<8x128xf32> to vector<8xf32>
    %157 = vector.shape_cast %156 : vector<8xf32> to vector<8x1xf32>
    %cst_75 = arith.constant dense<0.000000e+00> : vector<8xf32>
    %158 = vector.multi_reduction <add>, %153, %cst_75 [1] : vector<8x128xf32> to vector<8xf32>
    %159 = vector.shape_cast %158 : vector<8xf32> to vector<8x1xf32>
    %160 = arith.addf %157, %159 : vector<8x1xf32>
    %161 = arith.mulf %152, %152 : vector<8x128xf32>
    %cst_76 = arith.constant dense<0.000000e+00> : vector<8xf32>
    %162 = vector.multi_reduction <add>, %161, %cst_76 [1] : vector<8x128xf32> to vector<8xf32>
    %163 = vector.shape_cast %162 : vector<8xf32> to vector<8x1xf32>
    %164 = arith.mulf %153, %153 : vector<8x128xf32>
    %cst_77 = arith.constant dense<0.000000e+00> : vector<8xf32>
    %165 = vector.multi_reduction <add>, %164, %cst_77 [1] : vector<8x128xf32> to vector<8xf32>
    %166 = vector.shape_cast %165 : vector<8xf32> to vector<8x1xf32>
    %167 = arith.addf %163, %166 : vector<8x1xf32>
    %cst_78 = arith.constant 1.562500e-02 : f32
    %168 = vector.broadcast %cst_78 : f32 to vector<8x1xf32>
    %169 = arith.mulf %160, %168 : vector<8x1xf32>
    %cst_79 = arith.constant 1.562500e-02 : f32
    %170 = vector.broadcast %cst_79 : f32 to vector<8x1xf32>
    %171 = arith.mulf %167, %170 : vector<8x1xf32>
    %172 = arith.mulf %169, %169 : vector<8x1xf32>
    %173 = arith.subf %171, %172 : vector<8x1xf32>
    %cst_80 = arith.constant 9.99999974E-6 : f32
    %174 = vector.broadcast %cst_80 : f32 to vector<8x1xf32>
    %175 = arith.addf %173, %174 : vector<8x1xf32>
    %176 = math.rsqrt %175 : vector<8x1xf32>
    %177 = vector.broadcast %169 : vector<8x1xf32> to vector<8x128xf32>
    %178 = arith.subf %152, %177 : vector<8x128xf32>
    %179 = vector.broadcast %176 : vector<8x1xf32> to vector<8x128xf32>
    %180 = arith.mulf %178, %179 : vector<8x128xf32>
    %181 = vector.broadcast %169 : vector<8x1xf32> to vector<8x128xf32>
    %182 = arith.subf %153, %181 : vector<8x128xf32>
    %183 = vector.broadcast %176 : vector<8x1xf32> to vector<8x128xf32>
    %184 = arith.mulf %182, %183 : vector<8x128xf32>
    %185 = tpu.concatenate %180, %184, %154 in 1 : vector<8x128xf32>, vector<8x128xf32>, vector<8x128xf32> -> vector<8x384xf32>
    %cst_81 = arith.constant dense<0.000000e+00> : vector<8x512xf32>
    %186 = tpu.matmul %185, %3, %cst_81 {dimension_numbers = #tpu.dot_dimension_numbers<[1], [0], [0], [1], [0, 0, 1, 1], [], []>} : vector<8x384xf32>, vector<384x512xf32>, vector<8x512xf32> -> vector<8x512xf32>
    %187 = vector.broadcast %4 : vector<1x512xf32> to vector<8x512xf32>
    %188 = arith.addf %186, %187 : vector<8x512xf32>
    %189 = vector.extract_strided_slice %188 {offsets = [0, 0], sizes = [8, 128], strides = [1, 1]} : vector<8x512xf32> to vector<8x128xf32>
    %190 = arith.negf %189 : vector<8x128xf32>
    %191 = math.exp %190 : vector<8x128xf32>
    %cst_82 = arith.constant 1.000000e+00 : f32
    %192 = vector.broadcast %cst_82 : f32 to vector<8x128xf32>
    %193 = arith.addf %192, %191 : vector<8x128xf32>
    %194 = arith.divf %192, %193 : vector<8x128xf32>
    %195 = vector.extract_strided_slice %188 {offsets = [0, 128], sizes = [8, 128], strides = [1, 1]} : vector<8x512xf32> to vector<8x128xf32>
    %196 = arith.negf %195 : vector<8x128xf32>
    %197 = math.exp %196 : vector<8x128xf32>
    %cst_83 = arith.constant 1.000000e+00 : f32
    %198 = vector.broadcast %cst_83 : f32 to vector<8x128xf32>
    %199 = arith.addf %198, %197 : vector<8x128xf32>
    %200 = arith.divf %198, %199 : vector<8x128xf32>
    %201 = vector.extract_strided_slice %188 {offsets = [0, 256], sizes = [8, 128], strides = [1, 1]} : vector<8x512xf32> to vector<8x128xf32>
    %202 = math.tanh %201 : vector<8x128xf32>
    %203 = vector.extract_strided_slice %188 {offsets = [0, 384], sizes = [8, 128], strides = [1, 1]} : vector<8x512xf32> to vector<8x128xf32>
    %204 = arith.negf %203 : vector<8x128xf32>
    %205 = math.exp %204 : vector<8x128xf32>
    %cst_84 = arith.constant 1.000000e+00 : f32
    %206 = vector.broadcast %cst_84 : f32 to vector<8x128xf32>
    %207 = arith.addf %206, %205 : vector<8x128xf32>
    %208 = arith.divf %206, %207 : vector<8x128xf32>
    %209 = arith.mulf %200, %155 : vector<8x128xf32>
    %210 = arith.mulf %194, %202 : vector<8x128xf32>
    %211 = arith.addf %209, %210 : vector<8x128xf32>
    %212 = math.tanh %211 : vector<8x128xf32>
    %213 = arith.mulf %208, %212 : vector<8x128xf32>
    %cst_85 = arith.constant dense<0.000000e+00> : vector<8x128xf32>
    %214 = tpu.matmul %213, %5, %cst_85 {dimension_numbers = #tpu.dot_dimension_numbers<[1], [0], [0], [1], [0, 0, 1, 1], [], []>} : vector<8x128xf32>, vector<128x128xf32>, vector<8x128xf32> -> vector<8x128xf32>
    %215 = arith.addf %214, %6 : vector<8x128xf32>
    %216 = math.tanh %215 : vector<8x128xf32>
    %c0_86 = arith.constant 0 : index
    %c0_87 = arith.constant 0 : index
    %217 = vector.load %arg9[%c0_86, %c0_87] : memref<8x128xf32, #tpu.memory_space<vmem>>, vector<8x128xf32>
    tpu.vector_store %arg9[%c0_86, %c0_87], %213 {strides = array<i32>} : memref<8x128xf32, #tpu.memory_space<vmem>>, vector<8x128xf32>,
    %c0_88 = arith.constant 0 : index
    %c0_89 = arith.constant 0 : index
    %218 = vector.load %arg10[%c0_88, %c0_89] : memref<8x128xf32, #tpu.memory_space<vmem>>, vector<8x128xf32>
    tpu.vector_store %arg10[%c0_88, %c0_89], %211 {strides = array<i32>} : memref<8x128xf32, #tpu.memory_space<vmem>>, vector<8x128xf32>,
    %c0_90 = arith.constant 0 : index
    %c0_91 = arith.constant 0 : index
    %219 = vector.load %arg11[%c0_90, %c0_91] : memref<8x128xf32, #tpu.memory_space<vmem>>, vector<8x128xf32>
    tpu.vector_store %arg11[%c0_90, %c0_91], %216 {strides = array<i32>} : memref<8x128xf32, #tpu.memory_space<vmem>>, vector<8x128xf32>,
    %c2_92 = arith.constant 2 : index
    %c0_93 = arith.constant 0 : index
    %c0_94 = arith.constant 0 : index
    %220 = vector.load %arg8[%c2_92, %c0_93, %c0_94] : memref<8x8x128xf32, #tpu.memory_space<vmem>>, vector<1x8x128xf32>
    %221 = vector.shape_cast %220 : vector<1x8x128xf32> to vector<8x128xf32>
    %222 = vector.shape_cast %216 : vector<8x128xf32> to vector<1x8x128xf32>
    tpu.vector_store %arg8[%c2_92, %c0_93, %c0_94], %222 {strides = array<i32>} : memref<8x8x128xf32, #tpu.memory_space<vmem>>, vector<1x8x128xf32>,
    %c3 = arith.constant 3 : index
    %c0_95 = arith.constant 0 : index
    %c0_96 = arith.constant 0 : index
    %223 = vector.load %arg2[%c3, %c0_95, %c0_96] : memref<8x8x128xf32, #tpu.memory_space<vmem>>, vector<1x8x128xf32>
    %224 = vector.shape_cast %223 : vector<1x8x128xf32> to vector<8x128xf32>
    %c0_97 = arith.constant 0 : index
    %c0_98 = arith.constant 0 : index
    %225 = vector.load %arg11[%c0_97, %c0_98] : memref<8x128xf32, #tpu.memory_space<vmem>>, vector<8x128xf32>
    %c0_99 = arith.constant 0 : index
    %c0_100 = arith.constant 0 : index
    %226 = vector.load %arg9[%c0_99, %c0_100] : memref<8x128xf32, #tpu.memory_space<vmem>>, vector<8x128xf32>
    %c0_101 = arith.constant 0 : index
    %c0_102 = arith.constant 0 : index
    %227 = vector.load %arg10[%c0_101, %c0_102] : memref<8x128xf32, #tpu.memory_space<vmem>>, vector<8x128xf32>
    %cst_103 = arith.constant dense<0.000000e+00> : vector<8xf32>
    %228 = vector.multi_reduction <add>, %224, %cst_103 [1] : vector<8x128xf32> to vector<8xf32>
    %229 = vector.shape_cast %228 : vector<8xf32> to vector<8x1xf32>
    %cst_104 = arith.constant dense<0.000000e+00> : vector<8xf32>
    %230 = vector.multi_reduction <add>, %225, %cst_104 [1] : vector<8x128xf32> to vector<8xf32>
    %231 = vector.shape_cast %230 : vector<8xf32> to vector<8x1xf32>
    %232 = arith.addf %229, %231 : vector<8x1xf32>
    %233 = arith.mulf %224, %224 : vector<8x128xf32>
    %cst_105 = arith.constant dense<0.000000e+00> : vector<8xf32>
    %234 = vector.multi_reduction <add>, %233, %cst_105 [1] : vector<8x128xf32> to vector<8xf32>
    %235 = vector.shape_cast %234 : vector<8xf32> to vector<8x1xf32>
    %236 = arith.mulf %225, %225 : vector<8x128xf32>
    %cst_106 = arith.constant dense<0.000000e+00> : vector<8xf32>
    %237 = vector.multi_reduction <add>, %236, %cst_106 [1] : vector<8x128xf32> to vector<8xf32>
    %238 = vector.shape_cast %237 : vector<8xf32> to vector<8x1xf32>
    %239 = arith.addf %235, %238 : vector<8x1xf32>
    %cst_107 = arith.constant 1.562500e-02 : f32
    %240 = vector.broadcast %cst_107 : f32 to vector<8x1xf32>
    %241 = arith.mulf %232, %240 : vector<8x1xf32>
    %cst_108 = arith.constant 1.562500e-02 : f32
    %242 = vector.broadcast %cst_108 : f32 to vector<8x1xf32>
    %243 = arith.mulf %239, %242 : vector<8x1xf32>
    %244 = arith.mulf %241, %241 : vector<8x1xf32>
    %245 = arith.subf %243, %244 : vector<8x1xf32>
    %cst_109 = arith.constant 9.99999974E-6 : f32
    %246 = vector.broadcast %cst_109 : f32 to vector<8x1xf32>
    %247 = arith.addf %245, %246 : vector<8x1xf32>
    %248 = math.rsqrt %247 : vector<8x1xf32>
    %249 = vector.broadcast %241 : vector<8x1xf32> to vector<8x128xf32>
    %250 = arith.subf %224, %249 : vector<8x128xf32>
    %251 = vector.broadcast %248 : vector<8x1xf32> to vector<8x128xf32>
    %252 = arith.mulf %250, %251 : vector<8x128xf32>
    %253 = vector.broadcast %241 : vector<8x1xf32> to vector<8x128xf32>
    %254 = arith.subf %225, %253 : vector<8x128xf32>
    %255 = vector.broadcast %248 : vector<8x1xf32> to vector<8x128xf32>
    %256 = arith.mulf %254, %255 : vector<8x128xf32>
    %257 = tpu.concatenate %252, %256, %226 in 1 : vector<8x128xf32>, vector<8x128xf32>, vector<8x128xf32> -> vector<8x384xf32>
    %cst_110 = arith.constant dense<0.000000e+00> : vector<8x512xf32>
    %258 = tpu.matmul %257, %3, %cst_110 {dimension_numbers = #tpu.dot_dimension_numbers<[1], [0], [0], [1], [0, 0, 1, 1], [], []>} : vector<8x384xf32>, vector<384x512xf32>, vector<8x512xf32> -> vector<8x512xf32>
    %259 = vector.broadcast %4 : vector<1x512xf32> to vector<8x512xf32>
    %260 = arith.addf %258, %259 : vector<8x512xf32>
    %261 = vector.extract_strided_slice %260 {offsets = [0, 0], sizes = [8, 128], strides = [1, 1]} : vector<8x512xf32> to vector<8x128xf32>
    %262 = arith.negf %261 : vector<8x128xf32>
    %263 = math.exp %262 : vector<8x128xf32>
    %cst_111 = arith.constant 1.000000e+00 : f32
    %264 = vector.broadcast %cst_111 : f32 to vector<8x128xf32>
    %265 = arith.addf %264, %263 : vector<8x128xf32>
    %266 = arith.divf %264, %265 : vector<8x128xf32>
    %267 = vector.extract_strided_slice %260 {offsets = [0, 128], sizes = [8, 128], strides = [1, 1]} : vector<8x512xf32> to vector<8x128xf32>
    %268 = arith.negf %267 : vector<8x128xf32>
    %269 = math.exp %268 : vector<8x128xf32>
    %cst_112 = arith.constant 1.000000e+00 : f32
    %270 = vector.broadcast %cst_112 : f32 to vector<8x128xf32>
    %271 = arith.addf %270, %269 : vector<8x128xf32>
    %272 = arith.divf %270, %271 : vector<8x128xf32>
    %273 = vector.extract_strided_slice %260 {offsets = [0, 256], sizes = [8, 128], strides = [1, 1]} : vector<8x512xf32> to vector<8x128xf32>
    %274 = math.tanh %273 : vector<8x128xf32>
    %275 = vector.extract_strided_slice %260 {offsets = [0, 384], sizes = [8, 128], strides = [1, 1]} : vector<8x512xf32> to vector<8x128xf32>
    %276 = arith.negf %275 : vector<8x128xf32>
    %277 = math.exp %276 : vector<8x128xf32>
    %cst_113 = arith.constant 1.000000e+00 : f32
    %278 = vector.broadcast %cst_113 : f32 to vector<8x128xf32>
    %279 = arith.addf %278, %277 : vector<8x128xf32>
    %280 = arith.divf %278, %279 : vector<8x128xf32>
    %281 = arith.mulf %272, %227 : vector<8x128xf32>
    %282 = arith.mulf %266, %274 : vector<8x128xf32>
    %283 = arith.addf %281, %282 : vector<8x128xf32>
    %284 = math.tanh %283 : vector<8x128xf32>
    %285 = arith.mulf %280, %284 : vector<8x128xf32>
    %cst_114 = arith.constant dense<0.000000e+00> : vector<8x128xf32>
    %286 = tpu.matmul %285, %5, %cst_114 {dimension_numbers = #tpu.dot_dimension_numbers<[1], [0], [0], [1], [0, 0, 1, 1], [], []>} : vector<8x128xf32>, vector<128x128xf32>, vector<8x128xf32> -> vector<8x128xf32>
    %287 = arith.addf %286, %6 : vector<8x128xf32>
    %288 = math.tanh %287 : vector<8x128xf32>
    %c0_115 = arith.constant 0 : index
    %c0_116 = arith.constant 0 : index
    %289 = vector.load %arg9[%c0_115, %c0_116] : memref<8x128xf32, #tpu.memory_space<vmem>>, vector<8x128xf32>
    tpu.vector_store %arg9[%c0_115, %c0_116], %285 {strides = array<i32>} : memref<8x128xf32, #tpu.memory_space<vmem>>, vector<8x128xf32>,
    %c0_117 = arith.constant 0 : index
    %c0_118 = arith.constant 0 : index
    %290 = vector.load %arg10[%c0_117, %c0_118] : memref<8x128xf32, #tpu.memory_space<vmem>>, vector<8x128xf32>
    tpu.vector_store %arg10[%c0_117, %c0_118], %283 {strides = array<i32>} : memref<8x128xf32, #tpu.memory_space<vmem>>, vector<8x128xf32>,
    %c0_119 = arith.constant 0 : index
    %c0_120 = arith.constant 0 : index
    %291 = vector.load %arg11[%c0_119, %c0_120] : memref<8x128xf32, #tpu.memory_space<vmem>>, vector<8x128xf32>
    tpu.vector_store %arg11[%c0_119, %c0_120], %288 {strides = array<i32>} : memref<8x128xf32, #tpu.memory_space<vmem>>, vector<8x128xf32>,
    %c3_121 = arith.constant 3 : index
    %c0_122 = arith.constant 0 : index
    %c0_123 = arith.constant 0 : index
    %292 = vector.load %arg8[%c3_121, %c0_122, %c0_123] : memref<8x8x128xf32, #tpu.memory_space<vmem>>, vector<1x8x128xf32>
    %293 = vector.shape_cast %292 : vector<1x8x128xf32> to vector<8x128xf32>
    %294 = vector.shape_cast %288 : vector<8x128xf32> to vector<1x8x128xf32>
    tpu.vector_store %arg8[%c3_121, %c0_122, %c0_123], %294 {strides = array<i32>} : memref<8x8x128xf32, #tpu.memory_space<vmem>>, vector<1x8x128xf32>,
    %c4 = arith.constant 4 : index
    %c0_124 = arith.constant 0 : index
    %c0_125 = arith.constant 0 : index
    %295 = vector.load %arg2[%c4, %c0_124, %c0_125] : memref<8x8x128xf32, #tpu.memory_space<vmem>>, vector<1x8x128xf32>
    %296 = vector.shape_cast %295 : vector<1x8x128xf32> to vector<8x128xf32>
    %c0_126 = arith.constant 0 : index
    %c0_127 = arith.constant 0 : index
    %297 = vector.load %arg11[%c0_126, %c0_127] : memref<8x128xf32, #tpu.memory_space<vmem>>, vector<8x128xf32>
    %c0_128 = arith.constant 0 : index
    %c0_129 = arith.constant 0 : index
    %298 = vector.load %arg9[%c0_128, %c0_129] : memref<8x128xf32, #tpu.memory_space<vmem>>, vector<8x128xf32>
    %c0_130 = arith.constant 0 : index
    %c0_131 = arith.constant 0 : index
    %299 = vector.load %arg10[%c0_130, %c0_131] : memref<8x128xf32, #tpu.memory_space<vmem>>, vector<8x128xf32>
    %cst_132 = arith.constant dense<0.000000e+00> : vector<8xf32>
    %300 = vector.multi_reduction <add>, %296, %cst_132 [1] : vector<8x128xf32> to vector<8xf32>
    %301 = vector.shape_cast %300 : vector<8xf32> to vector<8x1xf32>
    %cst_133 = arith.constant dense<0.000000e+00> : vector<8xf32>
    %302 = vector.multi_reduction <add>, %297, %cst_133 [1] : vector<8x128xf32> to vector<8xf32>
    %303 = vector.shape_cast %302 : vector<8xf32> to vector<8x1xf32>
    %304 = arith.addf %301, %303 : vector<8x1xf32>
    %305 = arith.mulf %296, %296 : vector<8x128xf32>
    %cst_134 = arith.constant dense<0.000000e+00> : vector<8xf32>
    %306 = vector.multi_reduction <add>, %305, %cst_134 [1] : vector<8x128xf32> to vector<8xf32>
    %307 = vector.shape_cast %306 : vector<8xf32> to vector<8x1xf32>
    %308 = arith.mulf %297, %297 : vector<8x128xf32>
    %cst_135 = arith.constant dense<0.000000e+00> : vector<8xf32>
    %309 = vector.multi_reduction <add>, %308, %cst_135 [1] : vector<8x128xf32> to vector<8xf32>
    %310 = vector.shape_cast %309 : vector<8xf32> to vector<8x1xf32>
    %311 = arith.addf %307, %310 : vector<8x1xf32>
    %cst_136 = arith.constant 1.562500e-02 : f32
    %312 = vector.broadcast %cst_136 : f32 to vector<8x1xf32>
    %313 = arith.mulf %304, %312 : vector<8x1xf32>
    %cst_137 = arith.constant 1.562500e-02 : f32
    %314 = vector.broadcast %cst_137 : f32 to vector<8x1xf32>
    %315 = arith.mulf %311, %314 : vector<8x1xf32>
    %316 = arith.mulf %313, %313 : vector<8x1xf32>
    %317 = arith.subf %315, %316 : vector<8x1xf32>
    %cst_138 = arith.constant 9.99999974E-6 : f32
    %318 = vector.broadcast %cst_138 : f32 to vector<8x1xf32>
    %319 = arith.addf %317, %318 : vector<8x1xf32>
    %320 = math.rsqrt %319 : vector<8x1xf32>
    %321 = vector.broadcast %313 : vector<8x1xf32> to vector<8x128xf32>
    %322 = arith.subf %296, %321 : vector<8x128xf32>
    %323 = vector.broadcast %320 : vector<8x1xf32> to vector<8x128xf32>
    %324 = arith.mulf %322, %323 : vector<8x128xf32>
    %325 = vector.broadcast %313 : vector<8x1xf32> to vector<8x128xf32>
    %326 = arith.subf %297, %325 : vector<8x128xf32>
    %327 = vector.broadcast %320 : vector<8x1xf32> to vector<8x128xf32>
    %328 = arith.mulf %326, %327 : vector<8x128xf32>
    %329 = tpu.concatenate %324, %328, %298 in 1 : vector<8x128xf32>, vector<8x128xf32>, vector<8x128xf32> -> vector<8x384xf32>
    %cst_139 = arith.constant dense<0.000000e+00> : vector<8x512xf32>
    %330 = tpu.matmul %329, %3, %cst_139 {dimension_numbers = #tpu.dot_dimension_numbers<[1], [0], [0], [1], [0, 0, 1, 1], [], []>} : vector<8x384xf32>, vector<384x512xf32>, vector<8x512xf32> -> vector<8x512xf32>
    %331 = vector.broadcast %4 : vector<1x512xf32> to vector<8x512xf32>
    %332 = arith.addf %330, %331 : vector<8x512xf32>
    %333 = vector.extract_strided_slice %332 {offsets = [0, 0], sizes = [8, 128], strides = [1, 1]} : vector<8x512xf32> to vector<8x128xf32>
    %334 = arith.negf %333 : vector<8x128xf32>
    %335 = math.exp %334 : vector<8x128xf32>
    %cst_140 = arith.constant 1.000000e+00 : f32
    %336 = vector.broadcast %cst_140 : f32 to vector<8x128xf32>
    %337 = arith.addf %336, %335 : vector<8x128xf32>
    %338 = arith.divf %336, %337 : vector<8x128xf32>
    %339 = vector.extract_strided_slice %332 {offsets = [0, 128], sizes = [8, 128], strides = [1, 1]} : vector<8x512xf32> to vector<8x128xf32>
    %340 = arith.negf %339 : vector<8x128xf32>
    %341 = math.exp %340 : vector<8x128xf32>
    %cst_141 = arith.constant 1.000000e+00 : f32
    %342 = vector.broadcast %cst_141 : f32 to vector<8x128xf32>
    %343 = arith.addf %342, %341 : vector<8x128xf32>
    %344 = arith.divf %342, %343 : vector<8x128xf32>
    %345 = vector.extract_strided_slice %332 {offsets = [0, 256], sizes = [8, 128], strides = [1, 1]} : vector<8x512xf32> to vector<8x128xf32>
    %346 = math.tanh %345 : vector<8x128xf32>
    %347 = vector.extract_strided_slice %332 {offsets = [0, 384], sizes = [8, 128], strides = [1, 1]} : vector<8x512xf32> to vector<8x128xf32>
    %348 = arith.negf %347 : vector<8x128xf32>
    %349 = math.exp %348 : vector<8x128xf32>
    %cst_142 = arith.constant 1.000000e+00 : f32
    %350 = vector.broadcast %cst_142 : f32 to vector<8x128xf32>
    %351 = arith.addf %350, %349 : vector<8x128xf32>
    %352 = arith.divf %350, %351 : vector<8x128xf32>
    %353 = arith.mulf %344, %299 : vector<8x128xf32>
    %354 = arith.mulf %338, %346 : vector<8x128xf32>
    %355 = arith.addf %353, %354 : vector<8x128xf32>
    %356 = math.tanh %355 : vector<8x128xf32>
    %357 = arith.mulf %352, %356 : vector<8x128xf32>
    %cst_143 = arith.constant dense<0.000000e+00> : vector<8x128xf32>
    %358 = tpu.matmul %357, %5, %cst_143 {dimension_numbers = #tpu.dot_dimension_numbers<[1], [0], [0], [1], [0, 0, 1, 1], [], []>} : vector<8x128xf32>, vector<128x128xf32>, vector<8x128xf32> -> vector<8x128xf32>
    %359 = arith.addf %358, %6 : vector<8x128xf32>
    %360 = math.tanh %359 : vector<8x128xf32>
    %c0_144 = arith.constant 0 : index
    %c0_145 = arith.constant 0 : index
    %361 = vector.load %arg9[%c0_144, %c0_145] : memref<8x128xf32, #tpu.memory_space<vmem>>, vector<8x128xf32>
    tpu.vector_store %arg9[%c0_144, %c0_145], %357 {strides = array<i32>} : memref<8x128xf32, #tpu.memory_space<vmem>>, vector<8x128xf32>,
    %c0_146 = arith.constant 0 : index
    %c0_147 = arith.constant 0 : index
    %362 = vector.load %arg10[%c0_146, %c0_147] : memref<8x128xf32, #tpu.memory_space<vmem>>, vector<8x128xf32>
    tpu.vector_store %arg10[%c0_146, %c0_147], %355 {strides = array<i32>} : memref<8x128xf32, #tpu.memory_space<vmem>>, vector<8x128xf32>,
    %c0_148 = arith.constant 0 : index
    %c0_149 = arith.constant 0 : index
    %363 = vector.load %arg11[%c0_148, %c0_149] : memref<8x128xf32, #tpu.memory_space<vmem>>, vector<8x128xf32>
    tpu.vector_store %arg11[%c0_148, %c0_149], %360 {strides = array<i32>} : memref<8x128xf32, #tpu.memory_space<vmem>>, vector<8x128xf32>,
    %c4_150 = arith.constant 4 : index
    %c0_151 = arith.constant 0 : index
    %c0_152 = arith.constant 0 : index
    %364 = vector.load %arg8[%c4_150, %c0_151, %c0_152] : memref<8x8x128xf32, #tpu.memory_space<vmem>>, vector<1x8x128xf32>
    %365 = vector.shape_cast %364 : vector<1x8x128xf32> to vector<8x128xf32>
    %366 = vector.shape_cast %360 : vector<8x128xf32> to vector<1x8x128xf32>
    tpu.vector_store %arg8[%c4_150, %c0_151, %c0_152], %366 {strides = array<i32>} : memref<8x8x128xf32, #tpu.memory_space<vmem>>, vector<1x8x128xf32>,
    %c5 = arith.constant 5 : index
    %c0_153 = arith.constant 0 : index
    %c0_154 = arith.constant 0 : index
    %367 = vector.load %arg2[%c5, %c0_153, %c0_154] : memref<8x8x128xf32, #tpu.memory_space<vmem>>, vector<1x8x128xf32>
    %368 = vector.shape_cast %367 : vector<1x8x128xf32> to vector<8x128xf32>
    %c0_155 = arith.constant 0 : index
    %c0_156 = arith.constant 0 : index
    %369 = vector.load %arg11[%c0_155, %c0_156] : memref<8x128xf32, #tpu.memory_space<vmem>>, vector<8x128xf32>
    %c0_157 = arith.constant 0 : index
    %c0_158 = arith.constant 0 : index
    %370 = vector.load %arg9[%c0_157, %c0_158] : memref<8x128xf32, #tpu.memory_space<vmem>>, vector<8x128xf32>
    %c0_159 = arith.constant 0 : index
    %c0_160 = arith.constant 0 : index
    %371 = vector.load %arg10[%c0_159, %c0_160] : memref<8x128xf32, #tpu.memory_space<vmem>>, vector<8x128xf32>
    %cst_161 = arith.constant dense<0.000000e+00> : vector<8xf32>
    %372 = vector.multi_reduction <add>, %368, %cst_161 [1] : vector<8x128xf32> to vector<8xf32>
    %373 = vector.shape_cast %372 : vector<8xf32> to vector<8x1xf32>
    %cst_162 = arith.constant dense<0.000000e+00> : vector<8xf32>
    %374 = vector.multi_reduction <add>, %369, %cst_162 [1] : vector<8x128xf32> to vector<8xf32>
    %375 = vector.shape_cast %374 : vector<8xf32> to vector<8x1xf32>
    %376 = arith.addf %373, %375 : vector<8x1xf32>
    %377 = arith.mulf %368, %368 : vector<8x128xf32>
    %cst_163 = arith.constant dense<0.000000e+00> : vector<8xf32>
    %378 = vector.multi_reduction <add>, %377, %cst_163 [1] : vector<8x128xf32> to vector<8xf32>
    %379 = vector.shape_cast %378 : vector<8xf32> to vector<8x1xf32>
    %380 = arith.mulf %369, %369 : vector<8x128xf32>
    %cst_164 = arith.constant dense<0.000000e+00> : vector<8xf32>
    %381 = vector.multi_reduction <add>, %380, %cst_164 [1] : vector<8x128xf32> to vector<8xf32>
    %382 = vector.shape_cast %381 : vector<8xf32> to vector<8x1xf32>
    %383 = arith.addf %379, %382 : vector<8x1xf32>
    %cst_165 = arith.constant 1.562500e-02 : f32
    %384 = vector.broadcast %cst_165 : f32 to vector<8x1xf32>
    %385 = arith.mulf %376, %384 : vector<8x1xf32>
    %cst_166 = arith.constant 1.562500e-02 : f32
    %386 = vector.broadcast %cst_166 : f32 to vector<8x1xf32>
    %387 = arith.mulf %383, %386 : vector<8x1xf32>
    %388 = arith.mulf %385, %385 : vector<8x1xf32>
    %389 = arith.subf %387, %388 : vector<8x1xf32>
    %cst_167 = arith.constant 9.99999974E-6 : f32
    %390 = vector.broadcast %cst_167 : f32 to vector<8x1xf32>
    %391 = arith.addf %389, %390 : vector<8x1xf32>
    %392 = math.rsqrt %391 : vector<8x1xf32>
    %393 = vector.broadcast %385 : vector<8x1xf32> to vector<8x128xf32>
    %394 = arith.subf %368, %393 : vector<8x128xf32>
    %395 = vector.broadcast %392 : vector<8x1xf32> to vector<8x128xf32>
    %396 = arith.mulf %394, %395 : vector<8x128xf32>
    %397 = vector.broadcast %385 : vector<8x1xf32> to vector<8x128xf32>
    %398 = arith.subf %369, %397 : vector<8x128xf32>
    %399 = vector.broadcast %392 : vector<8x1xf32> to vector<8x128xf32>
    %400 = arith.mulf %398, %399 : vector<8x128xf32>
    %401 = tpu.concatenate %396, %400, %370 in 1 : vector<8x128xf32>, vector<8x128xf32>, vector<8x128xf32> -> vector<8x384xf32>
    %cst_168 = arith.constant dense<0.000000e+00> : vector<8x512xf32>
    %402 = tpu.matmul %401, %3, %cst_168 {dimension_numbers = #tpu.dot_dimension_numbers<[1], [0], [0], [1], [0, 0, 1, 1], [], []>} : vector<8x384xf32>, vector<384x512xf32>, vector<8x512xf32> -> vector<8x512xf32>
    %403 = vector.broadcast %4 : vector<1x512xf32> to vector<8x512xf32>
    %404 = arith.addf %402, %403 : vector<8x512xf32>
    %405 = vector.extract_strided_slice %404 {offsets = [0, 0], sizes = [8, 128], strides = [1, 1]} : vector<8x512xf32> to vector<8x128xf32>
    %406 = arith.negf %405 : vector<8x128xf32>
    %407 = math.exp %406 : vector<8x128xf32>
    %cst_169 = arith.constant 1.000000e+00 : f32
    %408 = vector.broadcast %cst_169 : f32 to vector<8x128xf32>
    %409 = arith.addf %408, %407 : vector<8x128xf32>
    %410 = arith.divf %408, %409 : vector<8x128xf32>
    %411 = vector.extract_strided_slice %404 {offsets = [0, 128], sizes = [8, 128], strides = [1, 1]} : vector<8x512xf32> to vector<8x128xf32>
    %412 = arith.negf %411 : vector<8x128xf32>
    %413 = math.exp %412 : vector<8x128xf32>
    %cst_170 = arith.constant 1.000000e+00 : f32
    %414 = vector.broadcast %cst_170 : f32 to vector<8x128xf32>
    %415 = arith.addf %414, %413 : vector<8x128xf32>
    %416 = arith.divf %414, %415 : vector<8x128xf32>
    %417 = vector.extract_strided_slice %404 {offsets = [0, 256], sizes = [8, 128], strides = [1, 1]} : vector<8x512xf32> to vector<8x128xf32>
    %418 = math.tanh %417 : vector<8x128xf32>
    %419 = vector.extract_strided_slice %404 {offsets = [0, 384], sizes = [8, 128], strides = [1, 1]} : vector<8x512xf32> to vector<8x128xf32>
    %420 = arith.negf %419 : vector<8x128xf32>
    %421 = math.exp %420 : vector<8x128xf32>
    %cst_171 = arith.constant 1.000000e+00 : f32
    %422 = vector.broadcast %cst_171 : f32 to vector<8x128xf32>
    %423 = arith.addf %422, %421 : vector<8x128xf32>
    %424 = arith.divf %422, %423 : vector<8x128xf32>
    %425 = arith.mulf %416, %371 : vector<8x128xf32>
    %426 = arith.mulf %410, %418 : vector<8x128xf32>
    %427 = arith.addf %425, %426 : vector<8x128xf32>
    %428 = math.tanh %427 : vector<8x128xf32>
    %429 = arith.mulf %424, %428 : vector<8x128xf32>
    %cst_172 = arith.constant dense<0.000000e+00> : vector<8x128xf32>
    %430 = tpu.matmul %429, %5, %cst_172 {dimension_numbers = #tpu.dot_dimension_numbers<[1], [0], [0], [1], [0, 0, 1, 1], [], []>} : vector<8x128xf32>, vector<128x128xf32>, vector<8x128xf32> -> vector<8x128xf32>
    %431 = arith.addf %430, %6 : vector<8x128xf32>
    %432 = math.tanh %431 : vector<8x128xf32>
    %c0_173 = arith.constant 0 : index
    %c0_174 = arith.constant 0 : index
    %433 = vector.load %arg9[%c0_173, %c0_174] : memref<8x128xf32, #tpu.memory_space<vmem>>, vector<8x128xf32>
    tpu.vector_store %arg9[%c0_173, %c0_174], %429 {strides = array<i32>} : memref<8x128xf32, #tpu.memory_space<vmem>>, vector<8x128xf32>,
    %c0_175 = arith.constant 0 : index
    %c0_176 = arith.constant 0 : index
    %434 = vector.load %arg10[%c0_175, %c0_176] : memref<8x128xf32, #tpu.memory_space<vmem>>, vector<8x128xf32>
    tpu.vector_store %arg10[%c0_175, %c0_176], %427 {strides = array<i32>} : memref<8x128xf32, #tpu.memory_space<vmem>>, vector<8x128xf32>,
    %c0_177 = arith.constant 0 : index
    %c0_178 = arith.constant 0 : index
    %435 = vector.load %arg11[%c0_177, %c0_178] : memref<8x128xf32, #tpu.memory_space<vmem>>, vector<8x128xf32>
    tpu.vector_store %arg11[%c0_177, %c0_178], %432 {strides = array<i32>} : memref<8x128xf32, #tpu.memory_space<vmem>>, vector<8x128xf32>,
    %c5_179 = arith.constant 5 : index
    %c0_180 = arith.constant 0 : index
    %c0_181 = arith.constant 0 : index
    %436 = vector.load %arg8[%c5_179, %c0_180, %c0_181] : memref<8x8x128xf32, #tpu.memory_space<vmem>>, vector<1x8x128xf32>
    %437 = vector.shape_cast %436 : vector<1x8x128xf32> to vector<8x128xf32>
    %438 = vector.shape_cast %432 : vector<8x128xf32> to vector<1x8x128xf32>
    tpu.vector_store %arg8[%c5_179, %c0_180, %c0_181], %438 {strides = array<i32>} : memref<8x8x128xf32, #tpu.memory_space<vmem>>, vector<1x8x128xf32>,
    %c6 = arith.constant 6 : index
    %c0_182 = arith.constant 0 : index
    %c0_183 = arith.constant 0 : index
    %439 = vector.load %arg2[%c6, %c0_182, %c0_183] : memref<8x8x128xf32, #tpu.memory_space<vmem>>, vector<1x8x128xf32>
    %440 = vector.shape_cast %439 : vector<1x8x128xf32> to vector<8x128xf32>
    %c0_184 = arith.constant 0 : index
    %c0_185 = arith.constant 0 : index
    %441 = vector.load %arg11[%c0_184, %c0_185] : memref<8x128xf32, #tpu.memory_space<vmem>>, vector<8x128xf32>
    %c0_186 = arith.constant 0 : index
    %c0_187 = arith.constant 0 : index
    %442 = vector.load %arg9[%c0_186, %c0_187] : memref<8x128xf32, #tpu.memory_space<vmem>>, vector<8x128xf32>
    %c0_188 = arith.constant 0 : index
    %c0_189 = arith.constant 0 : index
    %443 = vector.load %arg10[%c0_188, %c0_189] : memref<8x128xf32, #tpu.memory_space<vmem>>, vector<8x128xf32>
    %cst_190 = arith.constant dense<0.000000e+00> : vector<8xf32>
    %444 = vector.multi_reduction <add>, %440, %cst_190 [1] : vector<8x128xf32> to vector<8xf32>
    %445 = vector.shape_cast %444 : vector<8xf32> to vector<8x1xf32>
    %cst_191 = arith.constant dense<0.000000e+00> : vector<8xf32>
    %446 = vector.multi_reduction <add>, %441, %cst_191 [1] : vector<8x128xf32> to vector<8xf32>
    %447 = vector.shape_cast %446 : vector<8xf32> to vector<8x1xf32>
    %448 = arith.addf %445, %447 : vector<8x1xf32>
    %449 = arith.mulf %440, %440 : vector<8x128xf32>
    %cst_192 = arith.constant dense<0.000000e+00> : vector<8xf32>
    %450 = vector.multi_reduction <add>, %449, %cst_192 [1] : vector<8x128xf32> to vector<8xf32>
    %451 = vector.shape_cast %450 : vector<8xf32> to vector<8x1xf32>
    %452 = arith.mulf %441, %441 : vector<8x128xf32>
    %cst_193 = arith.constant dense<0.000000e+00> : vector<8xf32>
    %453 = vector.multi_reduction <add>, %452, %cst_193 [1] : vector<8x128xf32> to vector<8xf32>
    %454 = vector.shape_cast %453 : vector<8xf32> to vector<8x1xf32>
    %455 = arith.addf %451, %454 : vector<8x1xf32>
    %cst_194 = arith.constant 1.562500e-02 : f32
    %456 = vector.broadcast %cst_194 : f32 to vector<8x1xf32>
    %457 = arith.mulf %448, %456 : vector<8x1xf32>
    %cst_195 = arith.constant 1.562500e-02 : f32
    %458 = vector.broadcast %cst_195 : f32 to vector<8x1xf32>
    %459 = arith.mulf %455, %458 : vector<8x1xf32>
    %460 = arith.mulf %457, %457 : vector<8x1xf32>
    %461 = arith.subf %459, %460 : vector<8x1xf32>
    %cst_196 = arith.constant 9.99999974E-6 : f32
    %462 = vector.broadcast %cst_196 : f32 to vector<8x1xf32>
    %463 = arith.addf %461, %462 : vector<8x1xf32>
    %464 = math.rsqrt %463 : vector<8x1xf32>
    %465 = vector.broadcast %457 : vector<8x1xf32> to vector<8x128xf32>
    %466 = arith.subf %440, %465 : vector<8x128xf32>
    %467 = vector.broadcast %464 : vector<8x1xf32> to vector<8x128xf32>
    %468 = arith.mulf %466, %467 : vector<8x128xf32>
    %469 = vector.broadcast %457 : vector<8x1xf32> to vector<8x128xf32>
    %470 = arith.subf %441, %469 : vector<8x128xf32>
    %471 = vector.broadcast %464 : vector<8x1xf32> to vector<8x128xf32>
    %472 = arith.mulf %470, %471 : vector<8x128xf32>
    %473 = tpu.concatenate %468, %472, %442 in 1 : vector<8x128xf32>, vector<8x128xf32>, vector<8x128xf32> -> vector<8x384xf32>
    %cst_197 = arith.constant dense<0.000000e+00> : vector<8x512xf32>
    %474 = tpu.matmul %473, %3, %cst_197 {dimension_numbers = #tpu.dot_dimension_numbers<[1], [0], [0], [1], [0, 0, 1, 1], [], []>} : vector<8x384xf32>, vector<384x512xf32>, vector<8x512xf32> -> vector<8x512xf32>
    %475 = vector.broadcast %4 : vector<1x512xf32> to vector<8x512xf32>
    %476 = arith.addf %474, %475 : vector<8x512xf32>
    %477 = vector.extract_strided_slice %476 {offsets = [0, 0], sizes = [8, 128], strides = [1, 1]} : vector<8x512xf32> to vector<8x128xf32>
    %478 = arith.negf %477 : vector<8x128xf32>
    %479 = math.exp %478 : vector<8x128xf32>
    %cst_198 = arith.constant 1.000000e+00 : f32
    %480 = vector.broadcast %cst_198 : f32 to vector<8x128xf32>
    %481 = arith.addf %480, %479 : vector<8x128xf32>
    %482 = arith.divf %480, %481 : vector<8x128xf32>
    %483 = vector.extract_strided_slice %476 {offsets = [0, 128], sizes = [8, 128], strides = [1, 1]} : vector<8x512xf32> to vector<8x128xf32>
    %484 = arith.negf %483 : vector<8x128xf32>
    %485 = math.exp %484 : vector<8x128xf32>
    %cst_199 = arith.constant 1.000000e+00 : f32
    %486 = vector.broadcast %cst_199 : f32 to vector<8x128xf32>
    %487 = arith.addf %486, %485 : vector<8x128xf32>
    %488 = arith.divf %486, %487 : vector<8x128xf32>
    %489 = vector.extract_strided_slice %476 {offsets = [0, 256], sizes = [8, 128], strides = [1, 1]} : vector<8x512xf32> to vector<8x128xf32>
    %490 = math.tanh %489 : vector<8x128xf32>
    %491 = vector.extract_strided_slice %476 {offsets = [0, 384], sizes = [8, 128], strides = [1, 1]} : vector<8x512xf32> to vector<8x128xf32>
    %492 = arith.negf %491 : vector<8x128xf32>
    %493 = math.exp %492 : vector<8x128xf32>
    %cst_200 = arith.constant 1.000000e+00 : f32
    %494 = vector.broadcast %cst_200 : f32 to vector<8x128xf32>
    %495 = arith.addf %494, %493 : vector<8x128xf32>
    %496 = arith.divf %494, %495 : vector<8x128xf32>
    %497 = arith.mulf %488, %443 : vector<8x128xf32>
    %498 = arith.mulf %482, %490 : vector<8x128xf32>
    %499 = arith.addf %497, %498 : vector<8x128xf32>
    %500 = math.tanh %499 : vector<8x128xf32>
    %501 = arith.mulf %496, %500 : vector<8x128xf32>
    %cst_201 = arith.constant dense<0.000000e+00> : vector<8x128xf32>
    %502 = tpu.matmul %501, %5, %cst_201 {dimension_numbers = #tpu.dot_dimension_numbers<[1], [0], [0], [1], [0, 0, 1, 1], [], []>} : vector<8x128xf32>, vector<128x128xf32>, vector<8x128xf32> -> vector<8x128xf32>
    %503 = arith.addf %502, %6 : vector<8x128xf32>
    %504 = math.tanh %503 : vector<8x128xf32>
    %c0_202 = arith.constant 0 : index
    %c0_203 = arith.constant 0 : index
    %505 = vector.load %arg9[%c0_202, %c0_203] : memref<8x128xf32, #tpu.memory_space<vmem>>, vector<8x128xf32>
    tpu.vector_store %arg9[%c0_202, %c0_203], %501 {strides = array<i32>} : memref<8x128xf32, #tpu.memory_space<vmem>>, vector<8x128xf32>,
    %c0_204 = arith.constant 0 : index
    %c0_205 = arith.constant 0 : index
    %506 = vector.load %arg10[%c0_204, %c0_205] : memref<8x128xf32, #tpu.memory_space<vmem>>, vector<8x128xf32>
    tpu.vector_store %arg10[%c0_204, %c0_205], %499 {strides = array<i32>} : memref<8x128xf32, #tpu.memory_space<vmem>>, vector<8x128xf32>,
    %c0_206 = arith.constant 0 : index
    %c0_207 = arith.constant 0 : index
    %507 = vector.load %arg11[%c0_206, %c0_207] : memref<8x128xf32, #tpu.memory_space<vmem>>, vector<8x128xf32>
    tpu.vector_store %arg11[%c0_206, %c0_207], %504 {strides = array<i32>} : memref<8x128xf32, #tpu.memory_space<vmem>>, vector<8x128xf32>,
    %c6_208 = arith.constant 6 : index
    %c0_209 = arith.constant 0 : index
    %c0_210 = arith.constant 0 : index
    %508 = vector.load %arg8[%c6_208, %c0_209, %c0_210] : memref<8x8x128xf32, #tpu.memory_space<vmem>>, vector<1x8x128xf32>
    %509 = vector.shape_cast %508 : vector<1x8x128xf32> to vector<8x128xf32>
    %510 = vector.shape_cast %504 : vector<8x128xf32> to vector<1x8x128xf32>
    tpu.vector_store %arg8[%c6_208, %c0_209, %c0_210], %510 {strides = array<i32>} : memref<8x8x128xf32, #tpu.memory_space<vmem>>, vector<1x8x128xf32>,
    %c7 = arith.constant 7 : index
    %c0_211 = arith.constant 0 : index
    %c0_212 = arith.constant 0 : index
    %511 = vector.load %arg2[%c7, %c0_211, %c0_212] : memref<8x8x128xf32, #tpu.memory_space<vmem>>, vector<1x8x128xf32>
    %512 = vector.shape_cast %511 : vector<1x8x128xf32> to vector<8x128xf32>
    %c0_213 = arith.constant 0 : index
    %c0_214 = arith.constant 0 : index
    %513 = vector.load %arg11[%c0_213, %c0_214] : memref<8x128xf32, #tpu.memory_space<vmem>>, vector<8x128xf32>
    %c0_215 = arith.constant 0 : index
    %c0_216 = arith.constant 0 : index
    %514 = vector.load %arg9[%c0_215, %c0_216] : memref<8x128xf32, #tpu.memory_space<vmem>>, vector<8x128xf32>
    %c0_217 = arith.constant 0 : index
    %c0_218 = arith.constant 0 : index
    %515 = vector.load %arg10[%c0_217, %c0_218] : memref<8x128xf32, #tpu.memory_space<vmem>>, vector<8x128xf32>
    %cst_219 = arith.constant dense<0.000000e+00> : vector<8xf32>
    %516 = vector.multi_reduction <add>, %512, %cst_219 [1] : vector<8x128xf32> to vector<8xf32>
    %517 = vector.shape_cast %516 : vector<8xf32> to vector<8x1xf32>
    %cst_220 = arith.constant dense<0.000000e+00> : vector<8xf32>
    %518 = vector.multi_reduction <add>, %513, %cst_220 [1] : vector<8x128xf32> to vector<8xf32>
    %519 = vector.shape_cast %518 : vector<8xf32> to vector<8x1xf32>
    %520 = arith.addf %517, %519 : vector<8x1xf32>
    %521 = arith.mulf %512, %512 : vector<8x128xf32>
    %cst_221 = arith.constant dense<0.000000e+00> : vector<8xf32>
    %522 = vector.multi_reduction <add>, %521, %cst_221 [1] : vector<8x128xf32> to vector<8xf32>
    %523 = vector.shape_cast %522 : vector<8xf32> to vector<8x1xf32>
    %524 = arith.mulf %513, %513 : vector<8x128xf32>
    %cst_222 = arith.constant dense<0.000000e+00> : vector<8xf32>
    %525 = vector.multi_reduction <add>, %524, %cst_222 [1] : vector<8x128xf32> to vector<8xf32>
    %526 = vector.shape_cast %525 : vector<8xf32> to vector<8x1xf32>
    %527 = arith.addf %523, %526 : vector<8x1xf32>
    %cst_223 = arith.constant 1.562500e-02 : f32
    %528 = vector.broadcast %cst_223 : f32 to vector<8x1xf32>
    %529 = arith.mulf %520, %528 : vector<8x1xf32>
    %cst_224 = arith.constant 1.562500e-02 : f32
    %530 = vector.broadcast %cst_224 : f32 to vector<8x1xf32>
    %531 = arith.mulf %527, %530 : vector<8x1xf32>
    %532 = arith.mulf %529, %529 : vector<8x1xf32>
    %533 = arith.subf %531, %532 : vector<8x1xf32>
    %cst_225 = arith.constant 9.99999974E-6 : f32
    %534 = vector.broadcast %cst_225 : f32 to vector<8x1xf32>
    %535 = arith.addf %533, %534 : vector<8x1xf32>
    %536 = math.rsqrt %535 : vector<8x1xf32>
    %537 = vector.broadcast %529 : vector<8x1xf32> to vector<8x128xf32>
    %538 = arith.subf %512, %537 : vector<8x128xf32>
    %539 = vector.broadcast %536 : vector<8x1xf32> to vector<8x128xf32>
    %540 = arith.mulf %538, %539 : vector<8x128xf32>
    %541 = vector.broadcast %529 : vector<8x1xf32> to vector<8x128xf32>
    %542 = arith.subf %513, %541 : vector<8x128xf32>
    %543 = vector.broadcast %536 : vector<8x1xf32> to vector<8x128xf32>
    %544 = arith.mulf %542, %543 : vector<8x128xf32>
    %545 = tpu.concatenate %540, %544, %514 in 1 : vector<8x128xf32>, vector<8x128xf32>, vector<8x128xf32> -> vector<8x384xf32>
    %cst_226 = arith.constant dense<0.000000e+00> : vector<8x512xf32>
    %546 = tpu.matmul %545, %3, %cst_226 {dimension_numbers = #tpu.dot_dimension_numbers<[1], [0], [0], [1], [0, 0, 1, 1], [], []>} : vector<8x384xf32>, vector<384x512xf32>, vector<8x512xf32> -> vector<8x512xf32>
    %547 = vector.broadcast %4 : vector<1x512xf32> to vector<8x512xf32>
    %548 = arith.addf %546, %547 : vector<8x512xf32>
    %549 = vector.extract_strided_slice %548 {offsets = [0, 0], sizes = [8, 128], strides = [1, 1]} : vector<8x512xf32> to vector<8x128xf32>
    %550 = arith.negf %549 : vector<8x128xf32>
    %551 = math.exp %550 : vector<8x128xf32>
    %cst_227 = arith.constant 1.000000e+00 : f32
    %552 = vector.broadcast %cst_227 : f32 to vector<8x128xf32>
    %553 = arith.addf %552, %551 : vector<8x128xf32>
    %554 = arith.divf %552, %553 : vector<8x128xf32>
    %555 = vector.extract_strided_slice %548 {offsets = [0, 128], sizes = [8, 128], strides = [1, 1]} : vector<8x512xf32> to vector<8x128xf32>
    %556 = arith.negf %555 : vector<8x128xf32>
    %557 = math.exp %556 : vector<8x128xf32>
    %cst_228 = arith.constant 1.000000e+00 : f32
    %558 = vector.broadcast %cst_228 : f32 to vector<8x128xf32>
    %559 = arith.addf %558, %557 : vector<8x128xf32>
    %560 = arith.divf %558, %559 : vector<8x128xf32>
    %561 = vector.extract_strided_slice %548 {offsets = [0, 256], sizes = [8, 128], strides = [1, 1]} : vector<8x512xf32> to vector<8x128xf32>
    %562 = math.tanh %561 : vector<8x128xf32>
    %563 = vector.extract_strided_slice %548 {offsets = [0, 384], sizes = [8, 128], strides = [1, 1]} : vector<8x512xf32> to vector<8x128xf32>
    %564 = arith.negf %563 : vector<8x128xf32>
    %565 = math.exp %564 : vector<8x128xf32>
    %cst_229 = arith.constant 1.000000e+00 : f32
    %566 = vector.broadcast %cst_229 : f32 to vector<8x128xf32>
    %567 = arith.addf %566, %565 : vector<8x128xf32>
    %568 = arith.divf %566, %567 : vector<8x128xf32>
    %569 = arith.mulf %560, %515 : vector<8x128xf32>
    %570 = arith.mulf %554, %562 : vector<8x128xf32>
    %571 = arith.addf %569, %570 : vector<8x128xf32>
    %572 = math.tanh %571 : vector<8x128xf32>
    %573 = arith.mulf %568, %572 : vector<8x128xf32>
    %cst_230 = arith.constant dense<0.000000e+00> : vector<8x128xf32>
    %574 = tpu.matmul %573, %5, %cst_230 {dimension_numbers = #tpu.dot_dimension_numbers<[1], [0], [0], [1], [0, 0, 1, 1], [], []>} : vector<8x128xf32>, vector<128x128xf32>, vector<8x128xf32> -> vector<8x128xf32>
    %575 = arith.addf %574, %6 : vector<8x128xf32>
    %576 = math.tanh %575 : vector<8x128xf32>
    %c0_231 = arith.constant 0 : index
    %c0_232 = arith.constant 0 : index
    %577 = vector.load %arg9[%c0_231, %c0_232] : memref<8x128xf32, #tpu.memory_space<vmem>>, vector<8x128xf32>
    tpu.vector_store %arg9[%c0_231, %c0_232], %573 {strides = array<i32>} : memref<8x128xf32, #tpu.memory_space<vmem>>, vector<8x128xf32>,
    %c0_233 = arith.constant 0 : index
    %c0_234 = arith.constant 0 : index
    %578 = vector.load %arg10[%c0_233, %c0_234] : memref<8x128xf32, #tpu.memory_space<vmem>>, vector<8x128xf32>
    tpu.vector_store %arg10[%c0_233, %c0_234], %571 {strides = array<i32>} : memref<8x128xf32, #tpu.memory_space<vmem>>, vector<8x128xf32>,
    %c0_235 = arith.constant 0 : index
    %c0_236 = arith.constant 0 : index
    %579 = vector.load %arg11[%c0_235, %c0_236] : memref<8x128xf32, #tpu.memory_space<vmem>>, vector<8x128xf32>
    tpu.vector_store %arg11[%c0_235, %c0_236], %576 {strides = array<i32>} : memref<8x128xf32, #tpu.memory_space<vmem>>, vector<8x128xf32>,
    %c7_237 = arith.constant 7 : index
    %c0_238 = arith.constant 0 : index
    %c0_239 = arith.constant 0 : index
    %580 = vector.load %arg8[%c7_237, %c0_238, %c0_239] : memref<8x8x128xf32, #tpu.memory_space<vmem>>, vector<1x8x128xf32>
    %581 = vector.shape_cast %580 : vector<1x8x128xf32> to vector<8x128xf32>
    %582 = vector.shape_cast %576 : vector<8x128xf32> to vector<1x8x128xf32>
    tpu.vector_store %arg8[%c7_237, %c0_238, %c0_239], %582 {strides = array<i32>} : memref<8x8x128xf32, #tpu.memory_space<vmem>>, vector<1x8x128xf32>,
    return
  }
  func.func @transform_0(%arg0: i32, %arg1: i32) -> (i32, i32, i32) {
    %c0_i32 = arith.constant 0 : i32
    %c0_i32_0 = arith.constant 0 : i32
    return %arg1, %arg0, %c0_i32 : i32, i32, i32
  }
  func.func @transform_1(%arg0: i32, %arg1: i32) -> (i32, i32) {
    %c0_i32 = arith.constant 0 : i32
    %c0_i32_0 = arith.constant 0 : i32
    return %arg0, %c0_i32 : i32, i32
  }
  func.func @transform_2(%arg0: i32, %arg1: i32) -> (i32, i32) {
    %c0_i32 = arith.constant 0 : i32
    %c0_i32_0 = arith.constant 0 : i32
    return %arg0, %c0_i32 : i32, i32
  }
  func.func @transform_3(%arg0: i32, %arg1: i32) -> (i32, i32) {
    %c0_i32 = arith.constant 0 : i32
    %c0_i32_0 = arith.constant 0 : i32
    %c0_i32_1 = arith.constant 0 : i32
    return %c0_i32, %c0_i32_0 : i32, i32
  }
  func.func @transform_4(%arg0: i32, %arg1: i32) -> (i32, i32) {
    %c0_i32 = arith.constant 0 : i32
    %c0_i32_0 = arith.constant 0 : i32
    %c0_i32_1 = arith.constant 0 : i32
    return %c0_i32, %c0_i32_0 : i32, i32
  }
  func.func @transform_5(%arg0: i32, %arg1: i32) -> (i32, i32) {
    %c0_i32 = arith.constant 0 : i32
    %c0_i32_0 = arith.constant 0 : i32
    %c0_i32_1 = arith.constant 0 : i32
    return %c0_i32, %c0_i32_0 : i32, i32
  }
  func.func @transform_6(%arg0: i32, %arg1: i32) -> (i32, i32, i32) {
    %c0_i32 = arith.constant 0 : i32
    %c0_i32_0 = arith.constant 0 : i32
    return %arg1, %arg0, %c0_i32 : i32, i32, i32
  }
}

</mosaic_0001>

<llo_original>
// kernel: tpu_custom_call.1
$region0: #{tpu_custom_call.1}
  #allocation0 [shape = 'u32[]', space=smem, size = 0x4, offset = 0x4, fixed_abs, tag = 'smem constant byte address 0x4 - core index']
  #allocation1 [shape = 'u32[72,128]{1,0:T(1,128)}', space=vmem, size = 0x9000, scoped, tag = 'internal scratch']
  #allocation2 [shape = 'f32[8,128]{1,0:T(8,128)}', space=vmem, size = 0x1000, scoped, tag = 'scratch operand']
  #allocation3 [shape = 'f32[8,128]{1,0:T(8,128)}', space=vmem, size = 0x1000, scoped, tag = 'scratch operand']
  #allocation4 [shape = 'f32[8,128]{1,0:T(8,128)}', space=vmem, size = 0x1000, scoped, tag = 'scratch operand']
  %s0 = inlined_call_operand.hbm [shape: f32[8,8,128], index: 0, kind: input, shape index: {}]
  %s1 = inlined_call_operand.hbm [shape: f32[8,128], index: 1, kind: input, shape index: {}]
  %s2 = inlined_call_operand.hbm [shape: f32[8,128], index: 2, kind: input, shape index: {}]
  %s3 = inlined_call_operand.hbm [shape: f32[384,512], index: 3, kind: input, shape index: {}]
  %s4 = inlined_call_operand.hbm [shape: f32[1,512], index: 4, kind: input, shape index: {}]
  %s5 = inlined_call_operand.hbm [shape: f32[128,128], index: 5, kind: input, shape index: {}]
  %s6 = inlined_call_operand.hbm [shape: f32[8,8,128], index: 6, kind: output, shape index: {}]
  %s7 = sld [smem:[#allocation0]]
  $region62: #{tpu_custom_call.1} parent=0
    _
  %s9 = ssub.s32 1, %s7
  %s10 = scalar_select 0, %s9, %s7
  $region1: #{tpu_custom_call.1} parent=0
    #allocation5 [shape = 'u8[32768]{0}', space=vmem, size = 0x8000, scoped, tag = 'input window, operand 0, single buffered']
    #allocation6 [shape = 's32[1]{0}', space=sflag, size = 0x4, scoped, tag = 'scoped memory for tpu_custom_call.1']
    #allocation7 [shape = 's32[1]{0}', space=sflag, size = 0x4, scoped, tag = 'scoped memory for tpu_custom_call.1']
    #allocation8 [shape = 'u8[4096]{0}', space=vmem, size = 0x1000, scoped, tag = 'input window, operand 1, single buffered']
    #allocation9 [shape = 's32[1]{0}', space=sflag, size = 0x4, scoped, tag = 'scoped memory for tpu_custom_call.1']
    #allocation10 [shape = 'u8[4096]{0}', space=vmem, size = 0x1000, scoped, tag = 'input window, operand 2, single buffered']
    #allocation11 [shape = 'u8[786432]{0}', space=vmem, size = 0xc0000, scoped, tag = 'input window, operand 3, single buffered']
    #allocation12 [shape = 's32[1]{0}', space=sflag, size = 0x4, scoped, tag = 'scoped memory for tpu_custom_call.1']
    #allocation13 [shape = 'u8[2048]{0}', space=vmem, size = 0x800, scoped, tag = 'input window, operand 4, single buffered']
    #allocation14 [shape = 'u8[65536]{0}', space=vmem, size = 0x10000, scoped, tag = 'input window, operand 5, single buffered']
    #allocation15 [shape = 's32[1]{0}', space=sflag, size = 0x4, scoped, tag = 'scoped memory for tpu_custom_call.1']
    #allocation16 [shape = 'u8[32768]{0}', space=vmem, size = 0x8000, scoped, tag = 'output window, operand 0, single buffered']
    %11 = vsyncpa [#allocation6], 0
    %12 = vsyncpa [#allocation9], 0
    %13 = vsyncpa [#allocation12], 0
    %14 = vsyncpa [#allocation15], 0
    %15 = vsyncpa [#allocation7], 0
    // Predicated region
    $region2: #{tpu_custom_call.1} parent=1 // pred_check
      _
    $region3: #{tpu_custom_call.1} parent=1 // pred_check_branch
      %17 = sbr.rel (0) target = $region5
    $region4: #{tpu_custom_call.1} parent=1 // pred_region
      %19 = vsyncadd [#allocation6], 0
      %s20 = sshll.u32 %s0, 4
      %s21 = int_to_ptr.hbm [resolvable:$true] %s20
      %s22 = sshll.u32 [#allocation5], 4
      %s23 = int_to_ptr.vmem [resolvable:$true] %s22
      %28 = dma.hbm_to_vmem [thread:$0]  %s21, 1024, %s23, [#allocation6], 128, 128, 8
    $region5: #{tpu_custom_call.1} parent=1 // pred_fallthru
      _
    // Predicated region
    $region6: #{tpu_custom_call.1} parent=1 // pred_check
      _
    $region7: #{tpu_custom_call.1} parent=1 // pred_check_branch
      %30 = sbr.rel (0) target = $region9
    $region8: #{tpu_custom_call.1} parent=1 // pred_region
      %32 = vsyncadd [#allocation9], 0
      %s34 = sshll.u32 %s1, 4
      %s35 = int_to_ptr.hbm [resolvable:$true] %s34
      %s36 = sshll.u32 [#allocation8], 4
      %s37 = int_to_ptr.vmem [resolvable:$true] %s36
      %39 = dma.hbm_to_vmem [thread:$0]  %s35, 128, %s37, [#allocation9]
    $region9: #{tpu_custom_call.1} parent=1 // pred_fallthru
      _
    // Predicated region
    $region10: #{tpu_custom_call.1} parent=1 // pred_check
      _
    $region11: #{tpu_custom_call.1} parent=1 // pred_check_branch
      %41 = sbr.rel (0) target = $region13
    $region12: #{tpu_custom_call.1} parent=1 // pred_region
      %43 = vsyncadd [#allocation9], 0
      %s45 = sshll.u32 %s2, 4
      %s46 = int_to_ptr.hbm [resolvable:$true] %s45
      %s47 = sshll.u32 [#allocation10], 4
      %s48 = int_to_ptr.vmem [resolvable:$true] %s47
      %50 = dma.hbm_to_vmem [thread:$0]  %s46, 128, %s48, [#allocation9]
    $region13: #{tpu_custom_call.1} parent=1 // pred_fallthru
      _
    // Predicated region
    $region14: #{tpu_custom_call.1} parent=1 // pred_check
      _
    $region15: #{tpu_custom_call.1} parent=1 // pred_check_branch
      %52 = sbr.rel (0) target = $region17
    $region16: #{tpu_custom_call.1} parent=1 // pred_region
      %54 = vsyncadd [#allocation12], 0
      %s55 = sshll.u32 %s3, 4
      %s56 = int_to_ptr.hbm [resolvable:$true] %s55
      %s57 = sshll.u32 [#allocation11], 4
      %s58 = int_to_ptr.vmem [resolvable:$true] %s57
      %63 = dma.hbm_to_vmem [thread:$0]  %s56, 24576, %s58, [#allocation12], 512, 512, 32
    $region17: #{tpu_custom_call.1} parent=1 // pred_fallthru
      _
    // Predicated region
    $region18: #{tpu_custom_call.1} parent=1 // pred_check
      _
    $region19: #{tpu_custom_call.1} parent=1 // pred_check_branch
      %65 = sbr.rel (0) target = $region21
    $region20: #{tpu_custom_call.1} parent=1 // pred_region
      %67 = vsyncadd [#allocation12], 0
      %s69 = sshll.u32 %s4, 4
      %s70 = int_to_ptr.hbm [resolvable:$true] %s69
      %s71 = sshll.u32 [#allocation13], 4
      %s72 = int_to_ptr.vmem [resolvable:$true] %s71
      %74 = dma.hbm_to_vmem [thread:$0]  %s70, 64, %s72, [#allocation12]
    $region21: #{tpu_custom_call.1} parent=1 // pred_fallthru
      _
    // Predicated region
    $region22: #{tpu_custom_call.1} parent=1 // pred_check
      _
    $region23: #{tpu_custom_call.1} parent=1 // pred_check_branch
      %76 = sbr.rel (0) target = $region25
    $region24: #{tpu_custom_call.1} parent=1 // pred_region
      %78 = vsyncadd [#allocation15], 0
      %s79 = sshll.u32 %s5, 4
      %s80 = int_to_ptr.hbm [resolvable:$true] %s79
      %s81 = sshll.u32 [#allocation14], 4
      %s82 = int_to_ptr.vmem [resolvable:$true] %s81
      %87 = dma.hbm_to_vmem [thread:$0]  %s80, 2048, %s82, [#allocation15], 128, 128, 8
    $region25: #{tpu_custom_call.1} parent=1 // pred_fallthru
      _
    // Predicated region
    $region26: #{tpu_custom_call.1} parent=1 // pred_check
      _
    $region27: #{tpu_custom_call.1} parent=1 // pred_check_branch
      %89 = sbr.rel (0) target = $region29
    $region28: #{tpu_custom_call.1} parent=1 // pred_region
      %91 = dma.done [#allocation6], 1024
    $region29: #{tpu_custom_call.1} parent=1 // pred_fallthru
      _
    // Predicated region
    $region30: #{tpu_custom_call.1} parent=1 // pred_check
      _
    $region31: #{tpu_custom_call.1} parent=1 // pred_check_branch
      %93 = sbr.rel (0) target = $region33
    $region32: #{tpu_custom_call.1} parent=1 // pred_region
      %95 = dma.done [#allocation9], 128
    $region33: #{tpu_custom_call.1} parent=1 // pred_fallthru
      _
    // Predicated region
    $region34: #{tpu_custom_call.1} parent=1 // pred_check
      _
    $region35: #{tpu_custom_call.1} parent=1 // pred_check_branch
      %97 = sbr.rel (0) target = $region37
    $region36: #{tpu_custom_call.1} parent=1 // pred_region
      %99 = dma.done [#allocation9], 128
    $region37: #{tpu_custom_call.1} parent=1 // pred_fallthru
      _
    // Predicated region
    $region38: #{tpu_custom_call.1} parent=1 // pred_check
      _
    $region39: #{tpu_custom_call.1} parent=1 // pred_check_branch
      %101 = sbr.rel (0) target = $region41
    $region40: #{tpu_custom_call.1} parent=1 // pred_region
      %103 = dma.done [#allocation12], 24576
    $region41: #{tpu_custom_call.1} parent=1 // pred_fallthru
      _
    // Predicated region
    $region42: #{tpu_custom_call.1} parent=1 // pred_check
      _
    $region43: #{tpu_custom_call.1} parent=1 // pred_check_branch
      %105 = sbr.rel (0) target = $region45
    $region44: #{tpu_custom_call.1} parent=1 // pred_region
      %107 = dma.done [#allocation12], 64
    $region45: #{tpu_custom_call.1} parent=1 // pred_fallthru
      _
    // Predicated region
    $region46: #{tpu_custom_call.1} parent=1 // pred_check
      _
    $region47: #{tpu_custom_call.1} parent=1 // pred_check_branch
      %109 = sbr.rel (0) target = $region49
    $region48: #{tpu_custom_call.1} parent=1 // pred_region
      %111 = dma.done [#allocation15], 2048
    $region49: #{tpu_custom_call.1} parent=1 // pred_fallthru
      _
    %p112 = scmp.eq.s32.totalorder 0, 0
    // Predicated region
    $region50: #{tpu_custom_call.1} parent=1 // pred_check
      %p113 = pneg %p112
    $region51: #{tpu_custom_call.1} parent=1 // pred_check_branch
      %115 = sbr.rel (%p113) target = $region53
    $region52: #{tpu_custom_call.1} parent=1 // pred_region
      %v116 = vld [vmem:[#allocation8] sm:$0xff]
      %117 = vst [vmem:[#allocation2] sm:$0xff] %v116
      %118 = vst [vmem:[#allocation3] sm:$0xff] 0.0
      %119 = vst [vmem:[#allocation4] sm:$0xff] 0.0
    $region53: #{tpu_custom_call.1} parent=1 // pred_fallthru
      _
    %v120 = vld [vmem:[#allocation11] sm:$0xff]
    %v121 = vld [vmem:[#allocation11 + $0x8] sm:$0xff]
    %v122 = vld [vmem:[#allocation11 + $0x10] sm:$0xff]
    %v123 = vld [vmem:[#allocation11 + $0x18] sm:$0xff]
    %v124 = vld [vmem:[#allocation11 + $0x20] sm:$0xff]
    %v125 = vld [vmem:[#allocation11 + $0x28] sm:$0xff]
    %v126 = vld [vmem:[#allocation11 + $0x30] sm:$0xff]
    %v127 = vld [vmem:[#allocation11 + $0x38] sm:$0xff]
    %v128 = vld [vmem:[#allocation11 + $0x40] sm:$0xff]
    %v129 = vld [vmem:[#allocation11 + $0x48] sm:$0xff]
    %v130 = vld [vmem:[#allocation11 + $0x50] sm:$0xff]
    %v131 = vld [vmem:[#allocation11 + $0x58] sm:$0xff]
    %v132 = vld [vmem:[#allocation11 + $0x60] sm:$0xff]
    %v133 = vld [vmem:[#allocation11 + $0x68] sm:$0xff]
    %v134 = vld [vmem:[#allocation11 + $0x70] sm:$0xff]
    %v135 = vld [vmem:[#allocation11 + $0x78] sm:$0xff]
    %v136 = vld [vmem:[#allocation11 + $0x80] sm:$0xff]
    %v137 = vld [vmem:[#allocation11 + $0x88] sm:$0xff]
    %v138 = vld [vmem:[#allocation11 + $0x90] sm:$0xff]
    %v139 = vld [vmem:[#allocation11 + $0x98] sm:$0xff]
    %v140 = vld [vmem:[#allocation11 + $0xa0] sm:$0xff]
    %v141 = vld [vmem:[#allocation11 + $0xa8] sm:$0xff]
    %v142 = vld [vmem:[#allocation11 + $0xb0] sm:$0xff]
    %v143 = vld [vmem:[#allocation11 + $0xb8] sm:$0xff]
    %v144 = vld [vmem:[#allocation11 + $0xc0] sm:$0xff]
    %v145 = vld [vmem:[#allocation11 + $0xc8] sm:$0xff]
    %v146 = vld [vmem:[#allocation11 + $0xd0] sm:$0xff]
    %v147 = vld [vmem:[#allocation11 + $0xd8] sm:$0xff]
    %v148 = vld [vmem:[#allocation11 + $0xe0] sm:$0xff]
    %v149 = vld [vmem:[#allocation11 + $0xe8] sm:$0xff]
    %v150 = vld [vmem:[#allocation11 + $0xf0] sm:$0xff]
    %v151 = vld [vmem:[#allocation11 + $0xf8] sm:$0xff]
    %v152 = vld [vmem:[#allocation11 + $0x100] sm:$0xff]
    %v153 = vld [vmem:[#allocation11 + $0x108] sm:$0xff]
    %v154 = vld [vmem:[#allocation11 + $0x110] sm:$0xff]
    %v155 = vld [vmem:[#allocation11 + $0x118] sm:$0xff]
    %v156 = vld [vmem:[#allocation11 + $0x120] sm:$0xff]
    %v157 = vld [vmem:[#allocation11 + $0x128] sm:$0xff]
    %v158 = vld [vmem:[#allocation11 + $0x130] sm:$0xff]
    %v159 = vld [vmem:[#allocation11 + $0x138] sm:$0xff]
    %v160 = vld [vmem:[#allocation11 + $0x140] sm:$0xff]
    %v161 = vld [vmem:[#allocation11 + $0x148] sm:$0xff]
    %v162 = vld [vmem:[#allocation11 + $0x150] sm:$0xff]
    %v163 = vld [vmem:[#allocation11 + $0x158] sm:$0xff]
    %v164 = vld [vmem:[#allocation11 + $0x160] sm:$0xff]
    %v165 = vld [vmem:[#allocation11 + $0x168] sm:$0xff]
    %v166 = vld [vmem:[#allocation11 + $0x170] sm:$0xff]
    %v167 = vld [vmem:[#allocation11 + $0x178] sm:$0xff]
    %v168 = vld [vmem:[#allocation11 + $0x180] sm:$0xff]
    %v169 = vld [vmem:[#allocation11 + $0x188] sm:$0xff]
    %v170 = vld [vmem:[#allocation11 + $0x190] sm:$0xff]
    %v171 = vld [vmem:[#allocation11 + $0x198] sm:$0xff]
    %v172 = vld [vmem:[#allocation11 + $0x1a0] sm:$0xff]
    %v173 = vld [vmem:[#allocation11 + $0x1a8] sm:$0xff]
    %v174 = vld [vmem:[#allocation11 + $0x1b0] sm:$0xff]
    %v175 = vld [vmem:[#allocation11 + $0x1b8] sm:$0xff]
    %v176 = vld [vmem:[#allocation11 + $0x1c0] sm:$0xff]
    %v177 = vld [vmem:[#allocation11 + $0x1c8] sm:$0xff]
    %v178 = vld [vmem:[#allocation11 + $0x1d0] sm:$0xff]
    %v179 = vld [vmem:[#allocation11 + $0x1d8] sm:$0xff]
    %v180 = vld [vmem:[#allocation11 + $0x1e0] sm:$0xff]
    %v181 = vld [vmem:[#allocation11 + $0x1e8] sm:$0xff]
    %v182 = vld [vmem:[#allocation11 + $0x1f0] sm:$0xff]
    %v183 = vld [vmem:[#allocation11 + $0x1f8] sm:$0xff]
    %v184 = vld [vmem:[#allocation11 + $0x200] sm:$0xff]
    %v185 = vld [vmem:[#allocation11 + $0x208] sm:$0xff]
    %v186 = vld [vmem:[#allocation11 + $0x210] sm:$0xff]
    %v187 = vld [vmem:[#allocation11 + $0x218] sm:$0xff]
    %v188 = vld [vmem:[#allocation11 + $0x220] sm:$0xff]
    %v189 = vld [vmem:[#allocation11 + $0x228] sm:$0xff]
    %v190 = vld [vmem:[#allocation11 + $0x230] sm:$0xff]
    %v191 = vld [vmem:[#allocation11 + $0x238] sm:$0xff]
    %v192 = vld [vmem:[#allocation11 + $0x240] sm:$0xff]
    %v193 = vld [vmem:[#allocation11 + $0x248] sm:$0xff]
    %v194 = vld [vmem:[#allocation11 + $0x250] sm:$0xff]
    %v195 = vld [vmem:[#allocation11 + $0x258] sm:$0xff]
    %v196 = vld [vmem:[#allocation11 + $0x260] sm:$0xff]
    %v197 = vld [vmem:[#allocation11 + $0x268] sm:$0xff]
    %v198 = vld [vmem:[#allocation11 + $0x270] sm:$0xff]
    %v199 = vld [vmem:[#allocation11 + $0x278] sm:$0xff]
    %v200 = vld [vmem:[#allocation11 + $0x280] sm:$0xff]
    %v201 = vld [vmem:[#allocation11 + $0x288] sm:$0xff]
    %v202 = vld [vmem:[#allocation11 + $0x290] sm:$0xff]
    %v203 = vld [vmem:[#allocation11 + $0x298] sm:$0xff]
    %v204 = vld [vmem:[#allocation11 + $0x2a0] sm:$0xff]
    %v205 = vld [vmem:[#allocation11 + $0x2a8] sm:$0xff]
    %v206 = vld [vmem:[#allocation11 + $0x2b0] sm:$0xff]
    %v207 = vld [vmem:[#allocation11 + $0x2b8] sm:$0xff]
    %v208 = vld [vmem:[#allocation11 + $0x2c0] sm:$0xff]
    %v209 = vld [vmem:[#allocation11 + $0x2c8] sm:$0xff]
    %v210 = vld [vmem:[#allocation11 + $0x2d0] sm:$0xff]
    %v211 = vld [vmem:[#allocation11 + $0x2d8] sm:$0xff]
    %v212 = vld [vmem:[#allocation11 + $0x2e0] sm:$0xff]
    %v213 = vld [vmem:[#allocation11 + $0x2e8] sm:$0xff]
    %v214 = vld [vmem:[#allocation11 + $0x2f0] sm:$0xff]
    %v215 = vld [vmem:[#allocation11 + $0x2f8] sm:$0xff]
    %v216 = vld [vmem:[#allocation11 + $0x300] sm:$0xff]
    %v217 = vld [vmem:[#allocation11 + $0x308] sm:$0xff]
    %v218 = vld [vmem:[#allocation11 + $0x310] sm:$0xff]
    %v219 = vld [vmem:[#allocation11 + $0x318] sm:$0xff]
    %v220 = vld [vmem:[#allocation11 + $0x320] sm:$0xff]
    %v221 = vld [vmem:[#allocation11 + $0x328] sm:$0xff]
    %v222 = vld [vmem:[#allocation11 + $0x330] sm:$0xff]
    %v223 = vld [vmem:[#allocation11 + $0x338] sm:$0xff]
    %v224 = vld [vmem:[#allocation11 + $0x340] sm:$0xff]
    %v225 = vld [vmem:[#allocation11 + $0x348] sm:$0xff]
    %v226 = vld [vmem:[#allocation11 + $0x350] sm:$0xff]
    %v227 = vld [vmem:[#allocation11 + $0x358] sm:$0xff]
    %v228 = vld [vmem:[#allocation11 + $0x360] sm:$0xff]
    %v229 = vld [vmem:[#allocation11 + $0x368] sm:$0xff]
    %v230 = vld [vmem:[#allocation11 + $0x370] sm:$0xff]
    %v231 = vld [vmem:[#allocation11 + $0x378] sm:$0xff]
    %v232 = vld [vmem:[#allocation11 + $0x380] sm:$0xff]
    %v233 = vld [vmem:[#allocation11 + $0x388] sm:$0xff]
    %v234 = vld [vmem:[#allocation11 + $0x390] sm:$0xff]
    %v235 = vld [vmem:[#allocation11 + $0x398] sm:$0xff]
    %v236 = vld [vmem:[#allocation11 + $0x3a0] sm:$0xff]
    %v237 = vld [vmem:[#allocation11 + $0x3a8] sm:$0xff]
    %v238 = vld [vmem:[#allocation11 + $0x3b0] sm:$0xff]
    %v239 = vld [vmem:[#allocation11 + $0x3b8] sm:$0xff]
    %v240 = vld [vmem:[#allocation11 + $0x3c0] sm:$0xff]
    %v241 = vld [vmem:[#allocation11 + $0x3c8] sm:$0xff]
    %v242 = vld [vmem:[#allocation11 + $0x3d0] sm:$0xff]
    %v243 = vld [vmem:[#allocation11 + $0x3d8] sm:$0xff]
    %v244 = vld [vmem:[#allocation11 + $0x3e0] sm:$0xff]
    %v245 = vld [vmem:[#allocation11 + $0x3e8] sm:$0xff]
    %v246 = vld [vmem:[#allocation11 + $0x3f0] sm:$0xff]
    %v247 = vld [vmem:[#allocation11 + $0x3f8] sm:$0xff]
    %v248 = vld [vmem:[#allocation11 + $0x400] sm:$0xff]
    %v249 = vld [vmem:[#allocation11 + $0x408] sm:$0xff]
    %v250 = vld [vmem:[#allocation11 + $0x410] sm:$0xff]
    %v251 = vld [vmem:[#allocation11 + $0x418] sm:$0xff]
    %v252 = vld [vmem:[#allocation11 + $0x420] sm:$0xff]
    %v253 = vld [vmem:[#allocation11 + $0x428] sm:$0xff]
    %v254 = vld [vmem:[#allocation11 + $0x430] sm:$0xff]
    %v255 = vld [vmem:[#allocation11 + $0x438] sm:$0xff]
    %v256 = vld [vmem:[#allocation11 + $0x440] sm:$0xff]
    %v257 = vld [vmem:[#allocation11 + $0x448] sm:$0xff]
    %v258 = vld [vmem:[#allocation11 + $0x450] sm:$0xff]
    %v259 = vld [vmem:[#allocation11 + $0x458] sm:$0xff]
    %v260 = vld [vmem:[#allocation11 + $0x460] sm:$0xff]
    %v261 = vld [vmem:[#allocation11 + $0x468] sm:$0xff]
    %v262 = vld [vmem:[#allocation11 + $0x470] sm:$0xff]
    %v263 = vld [vmem:[#allocation11 + $0x478] sm:$0xff]
    %v264 = vld [vmem:[#allocation11 + $0x480] sm:$0xff]
    %v265 = vld [vmem:[#allocation11 + $0x488] sm:$0xff]
    %v266 = vld [vmem:[#allocation11 + $0x490] sm:$0xff]
    %v267 = vld [vmem:[#allocation11 + $0x498] sm:$0xff]
    %v268 = vld [vmem:[#allocation11 + $0x4a0] sm:$0xff]
    %v269 = vld [vmem:[#allocation11 + $0x4a8] sm:$0xff]
    %v270 = vld [vmem:[#allocation11 + $0x4b0] sm:$0xff]
    %v271 = vld [vmem:[#allocation11 + $0x4b8] sm:$0xff]
    %v272 = vld [vmem:[#allocation11 + $0x4c0] sm:$0xff]
    %v273 = vld [vmem:[#allocation11 + $0x4c8] sm:$0xff]
    %v274 = vld [vmem:[#allocation11 + $0x4d0] sm:$0xff]
    %v275 = vld [vmem:[#allocation11 + $0x4d8] sm:$0xff]
    %v276 = vld [vmem:[#allocation11 + $0x4e0] sm:$0xff]
    %v277 = vld [vmem:[#allocation11 + $0x4e8] sm:$0xff]
    %v278 = vld [vmem:[#allocation11 + $0x4f0] sm:$0xff]
    %v279 = vld [vmem:[#allocation11 + $0x4f8] sm:$0xff]
    %v280 = vld [vmem:[#allocation11 + $0x500] sm:$0xff]
    %v281 = vld [vmem:[#allocation11 + $0x508] sm:$0xff]
    %v282 = vld [vmem:[#allocation11 + $0x510] sm:$0xff]
    %v283 = vld [vmem:[#allocation11 + $0x518] sm:$0xff]
    %v284 = vld [vmem:[#allocation11 + $0x520] sm:$0xff]
    %v285 = vld [vmem:[#allocation11 + $0x528] sm:$0xff]
    %v286 = vld [vmem:[#allocation11 + $0x530] sm:$0xff]
    %v287 = vld [vmem:[#allocation11 + $0x538] sm:$0xff]
    %v288 = vld [vmem:[#allocation11 + $0x540] sm:$0xff]
    %v289 = vld [vmem:[#allocation11 + $0x548] sm:$0xff]
    %v290 = vld [vmem:[#allocation11 + $0x550] sm:$0xff]
    %v291 = vld [vmem:[#allocation11 + $0x558] sm:$0xff]
    %v292 = vld [vmem:[#allocation11 + $0x560] sm:$0xff]
    %v293 = vld [vmem:[#allocation11 + $0x568] sm:$0xff]
    %v294 = vld [vmem:[#allocation11 + $0x570] sm:$0xff]
    %v295 = vld [vmem:[#allocation11 + $0x578] sm:$0xff]
    %v296 = vld [vmem:[#allocation11 + $0x580] sm:$0xff]
    %v297 = vld [vmem:[#allocation11 + $0x588] sm:$0xff]
    %v298 = vld [vmem:[#allocation11 + $0x590] sm:$0xff]
    %v299 = vld [vmem:[#allocation11 + $0x598] sm:$0xff]
    %v300 = vld [vmem:[#allocation11 + $0x5a0] sm:$0xff]
    %v301 = vld [vmem:[#allocation11 + $0x5a8] sm:$0xff]
    %v302 = vld [vmem:[#allocation11 + $0x5b0] sm:$0xff]
    %v303 = vld [vmem:[#allocation11 + $0x5b8] sm:$0xff]
    %v304 = vld [vmem:[#allocation11 + $0x5c0] sm:$0xff]
    %v305 = vld [vmem:[#allocation11 + $0x5c8] sm:$0xff]
    %v306 = vld [vmem:[#allocation11 + $0x5d0] sm:$0xff]
    %v307 = vld [vmem:[#allocation11 + $0x5d8] sm:$0xff]
    %v308 = vld [vmem:[#allocation11 + $0x5e0] sm:$0xff]
    %v309 = vld [vmem:[#allocation11 + $0x5e8] sm:$0xff]
    %v310 = vld [vmem:[#allocation11 + $0x5f0] sm:$0xff]
    %v311 = vld [vmem:[#allocation11 + $0x5f8] sm:$0xff]
    %v312 = vld [vmem:[#allocation13] sm:$0xf]
    %v313 = vld [vmem:[#allocation14] sm:$0xff]
    %v314 = vld [vmem:[#allocation14 + $0x8] sm:$0xff]
    %v315 = vld [vmem:[#allocation14 + $0x10] sm:$0xff]
    %v316 = vld [vmem:[#allocation14 + $0x18] sm:$0xff]
    %v317 = vld [vmem:[#allocation14 + $0x20] sm:$0xff]
    %v318 = vld [vmem:[#allocation14 + $0x28] sm:$0xff]
    %v319 = vld [vmem:[#allocation14 + $0x30] sm:$0xff]
    %v320 = vld [vmem:[#allocation14 + $0x38] sm:$0xff]
    %v321 = vld [vmem:[#allocation14 + $0x40] sm:$0xff]
    %v322 = vld [vmem:[#allocation14 + $0x48] sm:$0xff]
    %v323 = vld [vmem:[#allocation14 + $0x50] sm:$0xff]
    %v324 = vld [vmem:[#allocation14 + $0x58] sm:$0xff]
    %v325 = vld [vmem:[#allocation14 + $0x60] sm:$0xff]
    %v326 = vld [vmem:[#allocation14 + $0x68] sm:$0xff]
    %v327 = vld [vmem:[#allocation14 + $0x70] sm:$0xff]
    %v328 = vld [vmem:[#allocation14 + $0x78] sm:$0xff]
    %v329 = vld [vmem:[#allocation10] sm:$0xff]
    %v330 = vld [vmem:[#allocation5] sm:$0xff]
    %v331 = vld [vmem:[#allocation4] sm:$0xff]
    %v332 = vld [vmem:[#allocation2] sm:$0xff]
    %v333 = vld [vmem:[#allocation3] sm:$0xff]
    %334 = vadd.xlane.f32.xlu0 %v330
    %v335 = vpop.xlane.xlu0 %334
    %336 = vadd.xlane.f32.xlu0 %v331
    %v337 = vpop.xlane.xlu0 %336
    %v338 = vadd.f32 %v335, %v337
    %v339 = vmul.f32 %v330, %v330
    %340 = vadd.xlane.f32.xlu0 %v339
    %v341 = vpop.xlane.xlu0 %340
    %v342 = vmul.f32 %v331, %v331
    %343 = vadd.xlane.f32.xlu0 %v342
    %v344 = vpop.xlane.xlu0 %343
    %v345 = vadd.f32 %v341, %v344
    %v346 = vmul.f32 %v338, 0.015625
    %v347 = vmul.f32 %v345, 0.015625
    %v348 = vmul.f32 %v346, %v346
    %v349 = vsub.f32 %v347, %v348
    %v350 = vadd.f32 %v349, 1e-05
    %v351 = vrsqrt.pop %v350
    %v352 = vmul.f32 %v351, %v350
    %v353 = vmul.f32 %v352, %v351
    %v354 = vmul.f32 0.5, %v353
    %v355 = vsub.f32 1.5, %v354
    %v356 = vmul.f32 %v351, %v355
    %vm357 = vweird.f32 %v350
    %vm358 = vweird.f32 %v351
    %vm359 = vmor %vm357, %vm358
    %v360 = vsel %vm359, %v351, %v356
    %v361 = vsub.f32 %v330, %v346
    %v362 = vmul.f32 %v361, %v360
    %v363 = vsub.f32 %v331, %v346
    %v364 = vmul.f32 %v363, %v360
    %v366 = vperm.slane %v312, 0
    %v367 = vperm.slane %v312, 1
    %v368 = vperm.slane %v312, 2
    %v369 = vperm.slane %v312, 3
    %374 = vmatpush.msra.mxu0 %v180
    %375 = vmatpush.msra.mxu0 %v176
    %376 = vmatpush.msra.mxu0 %v172
    %377 = vmatpush.msra.mxu0 %v168
    %378 = vmatpush.msra.mxu0 %v164
    %379 = vmatpush.msra.mxu0 %v160
    %380 = vmatpush.msra.mxu0 %v156
    %381 = vmatpush.msra.mxu0 %v152
    %382 = vmatpush.msra.mxu0 %v148
    %383 = vmatpush.msra.mxu0 %v144
    %384 = vmatpush.msra.mxu0 %v140
    %385 = vmatpush.msra.mxu0 %v136
    %386 = vmatpush.msra.mxu0 %v132
    %387 = vmatpush.msra.mxu0 %v128
    %388 = vmatpush.msra.mxu0 %v124
    %389 = vmatpush.msra.mxu0 %v120
    %390 = vmatmul.f32.gmra.mxu0 %v362
    %v391 = vpop.f32.mrf.mxu0
    %v392 = vadd.f32 %v366, %v391
    %393 = vdwg.mxu0
    %394 = vmatpush.msra.mxu0 %v244
    %395 = vmatpush.msra.mxu0 %v240
    %396 = vmatpush.msra.mxu0 %v236
    %397 = vmatpush.msra.mxu0 %v232
    %398 = vmatpush.msra.mxu0 %v228
    %399 = vmatpush.msra.mxu0 %v224
    %400 = vmatpush.msra.mxu0 %v220
    %401 = vmatpush.msra.mxu0 %v216
    %402 = vmatpush.msra.mxu0 %v212
    %403 = vmatpush.msra.mxu0 %v208
    %404 = vmatpush.msra.mxu0 %v204
    %405 = vmatpush.msra.mxu0 %v200
    %406 = vmatpush.msra.mxu0 %v196
    %407 = vmatpush.msra.mxu0 %v192
    %408 = vmatpush.msra.mxu0 %v188
    %409 = vmatpush.msra.mxu0 %v184
    %410 = vmatmul.f32.gmra.mxu0 %v364
    %v411 = vpop.f32.mrf.mxu0
    %v412 = vadd.f32 %v392, %v411
    %413 = vdwg.mxu0
    %414 = vmatpush.msra.mxu0 %v308
    %415 = vmatpush.msra.mxu0 %v304
    %416 = vmatpush.msra.mxu0 %v300
    %417 = vmatpush.msra.mxu0 %v296
    %418 = vmatpush.msra.mxu0 %v292
    %419 = vmatpush.msra.mxu0 %v288
    %420 = vmatpush.msra.mxu0 %v284
    %421 = vmatpush.msra.mxu0 %v280
    %422 = vmatpush.msra.mxu0 %v276
    %423 = vmatpush.msra.mxu0 %v272
    %424 = vmatpush.msra.mxu0 %v268
    %425 = vmatpush.msra.mxu0 %v264
    %426 = vmatpush.msra.mxu0 %v260
    %427 = vmatpush.msra.mxu0 %v256
    %428 = vmatpush.msra.mxu0 %v252
    %429 = vmatpush.msra.mxu0 %v248
    %430 = vmatmul.f32.gmra.mxu0 %v332
    %v431 = vpop.f32.mrf.mxu0
    %v432 = vadd.f32 %v412, %v431
    %433 = vdwg.mxu0
    %434 = vmatpush.msra.mxu0 %v181
    %435 = vmatpush.msra.mxu0 %v177
    %436 = vmatpush.msra.mxu0 %v173
    %437 = vmatpush.msra.mxu0 %v169
    %438 = vmatpush.msra.mxu0 %v165
    %439 = vmatpush.msra.mxu0 %v161
    %440 = vmatpush.msra.mxu0 %v157
    %441 = vmatpush.msra.mxu0 %v153
    %442 = vmatpush.msra.mxu0 %v149
    %443 = vmatpush.msra.mxu0 %v145
    %444 = vmatpush.msra.mxu0 %v141
    %445 = vmatpush.msra.mxu0 %v137
    %446 = vmatpush.msra.mxu0 %v133
    %447 = vmatpush.msra.mxu0 %v129
    %448 = vmatpush.msra.mxu0 %v125
    %449 = vmatpush.msra.mxu0 %v121
    %450 = vmatmul.f32.gmra.mxu0 %v362
    %v451 = vpop.f32.mrf.mxu0
    %v452 = vadd.f32 %v367, %v451
    %453 = vdwg.mxu0
    %454 = vmatpush.msra.mxu0 %v245
    %455 = vmatpush.msra.mxu0 %v241
    %456 = vmatpush.msra.mxu0 %v237
    %457 = vmatpush.msra.mxu0 %v233
    %458 = vmatpush.msra.mxu0 %v229
    %459 = vmatpush.msra.mxu0 %v225
    %460 = vmatpush.msra.mxu0 %v221
    %461 = vmatpush.msra.mxu0 %v217
    %462 = vmatpush.msra.mxu0 %v213
    %463 = vmatpush.msra.mxu0 %v209
    %464 = vmatpush.msra.mxu0 %v205
    %465 = vmatpush.msra.mxu0 %v201
    %466 = vmatpush.msra.mxu0 %v197
    %467 = vmatpush.msra.mxu0 %v193
    %468 = vmatpush.msra.mxu0 %v189
    %469 = vmatpush.msra.mxu0 %v185
    %470 = vmatmul.f32.gmra.mxu0 %v364
    %v471 = vpop.f32.mrf.mxu0
    %v472 = vadd.f32 %v452, %v471
    %473 = vdwg.mxu0
    %474 = vmatpush.msra.mxu0 %v309
    %475 = vmatpush.msra.mxu0 %v305
    %476 = vmatpush.msra.mxu0 %v301
    %477 = vmatpush.msra.mxu0 %v297
    %478 = vmatpush.msra.mxu0 %v293
    %479 = vmatpush.msra.mxu0 %v289
    %480 = vmatpush.msra.mxu0 %v285
    %481 = vmatpush.msra.mxu0 %v281
    %482 = vmatpush.msra.mxu0 %v277
    %483 = vmatpush.msra.mxu0 %v273
    %484 = vmatpush.msra.mxu0 %v269
    %485 = vmatpush.msra.mxu0 %v265
    %486 = vmatpush.msra.mxu0 %v261
    %487 = vmatpush.msra.mxu0 %v257
    %488 = vmatpush.msra.mxu0 %v253
    %489 = vmatpush.msra.mxu0 %v249
    %490 = vmatmul.f32.gmra.mxu0 %v332
    %v491 = vpop.f32.mrf.mxu0
    %v492 = vadd.f32 %v472, %v491
    %493 = vdwg.mxu0
    %494 = vmatpush.msra.mxu0 %v182
    %495 = vmatpush.msra.mxu0 %v178
    %496 = vmatpush.msra.mxu0 %v174
    %497 = vmatpush.msra.mxu0 %v170
    %498 = vmatpush.msra.mxu0 %v166
    %499 = vmatpush.msra.mxu0 %v162
    %500 = vmatpush.msra.mxu0 %v158
    %501 = vmatpush.msra.mxu0 %v154
    %502 = vmatpush.msra.mxu0 %v150
    %503 = vmatpush.msra.mxu0 %v146
    %504 = vmatpush.msra.mxu0 %v142
    %505 = vmatpush.msra.mxu0 %v138
    %506 = vmatpush.msra.mxu0 %v134
    %507 = vmatpush.msra.mxu0 %v130
    %508 = vmatpush.msra.mxu0 %v126
    %509 = vmatpush.msra.mxu0 %v122
    %510 = vmatmul.f32.gmra.mxu0 %v362
    %v511 = vpop.f32.mrf.mxu0
    %v512 = vadd.f32 %v368, %v511
    %513 = vdwg.mxu0
    %514 = vmatpush.msra.mxu0 %v246
    %515 = vmatpush.msra.mxu0 %v242
    %516 = vmatpush.msra.mxu0 %v238
    %517 = vmatpush.msra.mxu0 %v234
    %518 = vmatpush.msra.mxu0 %v230
    %519 = vmatpush.msra.mxu0 %v226
    %520 = vmatpush.msra.mxu0 %v222
    %521 = vmatpush.msra.mxu0 %v218
    %522 = vmatpush.msra.mxu0 %v214
    %523 = vmatpush.msra.mxu0 %v210
    %524 = vmatpush.msra.mxu0 %v206
    %525 = vmatpush.msra.mxu0 %v202
    %526 = vmatpush.msra.mxu0 %v198
    %527 = vmatpush.msra.mxu0 %v194
    %528 = vmatpush.msra.mxu0 %v190
    %529 = vmatpush.msra.mxu0 %v186
    %530 = vmatmul.f32.gmra.mxu0 %v364
    %v531 = vpop.f32.mrf.mxu0
    %v532 = vadd.f32 %v512, %v531
    %533 = vdwg.mxu0
    %534 = vmatpush.msra.mxu0 %v310
    %535 = vmatpush.msra.mxu0 %v306
    %536 = vmatpush.msra.mxu0 %v302
    %537 = vmatpush.msra.mxu0 %v298
    %538 = vmatpush.msra.mxu0 %v294
    %539 = vmatpush.msra.mxu0 %v290
    %540 = vmatpush.msra.mxu0 %v286
    %541 = vmatpush.msra.mxu0 %v282
    %542 = vmatpush.msra.mxu0 %v278
    %543 = vmatpush.msra.mxu0 %v274
    %544 = vmatpush.msra.mxu0 %v270
    %545 = vmatpush.msra.mxu0 %v266
    %546 = vmatpush.msra.mxu0 %v262
    %547 = vmatpush.msra.mxu0 %v258
    %548 = vmatpush.msra.mxu0 %v254
    %549 = vmatpush.msra.mxu0 %v250
    %550 = vmatmul.f32.gmra.mxu0 %v332
    %v551 = vpop.f32.mrf.mxu0
    %v552 = vadd.f32 %v532, %v551
    %553 = vdwg.mxu0
    %554 = vmatpush.msra.mxu0 %v183
    %555 = vmatpush.msra.mxu0 %v179
    %556 = vmatpush.msra.mxu0 %v175
    %557 = vmatpush.msra.mxu0 %v171
    %558 = vmatpush.msra.mxu0 %v167
    %559 = vmatpush.msra.mxu0 %v163
    %560 = vmatpush.msra.mxu0 %v159
    %561 = vmatpush.msra.mxu0 %v155
    %562 = vmatpush.msra.mxu0 %v151
    %563 = vmatpush.msra.mxu0 %v147
    %564 = vmatpush.msra.mxu0 %v143
    %565 = vmatpush.msra.mxu0 %v139
    %566 = vmatpush.msra.mxu0 %v135
    %567 = vmatpush.msra.mxu0 %v131
    %568 = vmatpush.msra.mxu0 %v127
    %569 = vmatpush.msra.mxu0 %v123
    %570 = vmatmul.f32.gmra.mxu0 %v362
    %v571 = vpop.f32.mrf.mxu0
    %v572 = vadd.f32 %v369, %v571
    %573 = vdwg.mxu0
    %574 = vmatpush.msra.mxu0 %v247
    %575 = vmatpush.msra.mxu0 %v243
    %576 = vmatpush.msra.mxu0 %v239
    %577 = vmatpush.msra.mxu0 %v235
    %578 = vmatpush.msra.mxu0 %v231
    %579 = vmatpush.msra.mxu0 %v227
    %580 = vmatpush.msra.mxu0 %v223
    %581 = vmatpush.msra.mxu0 %v219
    %582 = vmatpush.msra.mxu0 %v215
    %583 = vmatpush.msra.mxu0 %v211
    %584 = vmatpush.msra.mxu0 %v207
    %585 = vmatpush.msra.mxu0 %v203
    %586 = vmatpush.msra.mxu0 %v199
    %587 = vmatpush.msra.mxu0 %v195
    %588 = vmatpush.msra.mxu0 %v191
    %589 = vmatpush.msra.mxu0 %v187
    %590 = vmatmul.f32.gmra.mxu0 %v364
    %v591 = vpop.f32.mrf.mxu0
    %v592 = vadd.f32 %v572, %v591
    %593 = vdwg.mxu0
    %594 = vmatpush.msra.mxu0 %v311
    %595 = vmatpush.msra.mxu0 %v307
    %596 = vmatpush.msra.mxu0 %v303
    %597 = vmatpush.msra.mxu0 %v299
    %598 = vmatpush.msra.mxu0 %v295
    %599 = vmatpush.msra.mxu0 %v291
    %600 = vmatpush.msra.mxu0 %v287
    %601 = vmatpush.msra.mxu0 %v283
    %602 = vmatpush.msra.mxu0 %v279
    %603 = vmatpush.msra.mxu0 %v275
    %604 = vmatpush.msra.mxu0 %v271
    %605 = vmatpush.msra.mxu0 %v267
    %606 = vmatpush.msra.mxu0 %v263
    %607 = vmatpush.msra.mxu0 %v259
    %608 = vmatpush.msra.mxu0 %v255
    %609 = vmatpush.msra.mxu0 %v251
    %610 = vmatmul.f32.gmra.mxu0 %v332
    %v611 = vpop.f32.mrf.mxu0
    %v612 = vadd.f32 %v592, %v611
    %613 = vdwg.mxu0
    %v614 = vxor.u32 %v432, 2147483648
    %v615 = vmul.f32 %v614, 1.442695
    %v616 = vpow.pop %v615
    %v617 = vadd.f32 %v616, 1.0
    %v618 = vrcp.pop %v617
    %v619 = vmul.f32 %v617, %v618
    %v620 = vsub.f32 1.0, %v619
    %v621 = vmul.f32 %v618, %v620
    %v622 = vadd.f32 %v618, %v621
    %vm623 = vweird.f32 %v617
    %vm624 = vweird.f32 %v618
    %vm625 = vmor %vm623, %vm624
    %v626 = vsel %vm625, %v618, %v622
    %v627 = vand.u32 2147483647, %v617
    %vm628 = vcmp.eq.f32.partialorder %v627, 8.507059e+37
    %v629 = vand.u32 %v617, 2147483648
    %v630 = vor.u32 1.1754944e-38, %v629
    %v631 = vsel %vm628, %v630, %v626
    %v632 = vmul.f32 1.0, %v631
    %v633 = vxor.u32 %v492, 2147483648
    %v634 = vmul.f32 %v633, 1.442695
    %v635 = vpow.pop %v634
    %v636 = vadd.f32 %v635, 1.0
    %v637 = vrcp.pop %v636
    %v638 = vmul.f32 %v636, %v637
    %v639 = vsub.f32 1.0, %v638
    %v640 = vmul.f32 %v637, %v639
    %v641 = vadd.f32 %v637, %v640
    %vm642 = vweird.f32 %v636
    %vm643 = vweird.f32 %v637
    %vm644 = vmor %vm642, %vm643
    %v645 = vsel %vm644, %v637, %v641
    %v646 = vand.u32 2147483647, %v636
    %vm647 = vcmp.eq.f32.partialorder %v646, 8.507059e+37
    %v648 = vand.u32 %v636, 2147483648
    %v649 = vor.u32 1.1754944e-38, %v648
    %v650 = vsel %vm647, %v649, %v645
    %v651 = vmul.f32 1.0, %v650
    %v652 = vtanh.pop %v552
    %v653 = vxor.u32 %v612, 2147483648
    %v654 = vmul.f32 %v653, 1.442695
    %v655 = vpow.pop %v654
    %v656 = vadd.f32 %v655, 1.0
    %v657 = vrcp.pop %v656
    %v658 = vmul.f32 %v656, %v657
    %v659 = vsub.f32 1.0, %v658
    %v660 = vmul.f32 %v657, %v659
    %v661 = vadd.f32 %v657, %v660
    %vm662 = vweird.f32 %v656
    %vm663 = vweird.f32 %v657
    %vm664 = vmor %vm662, %vm663
    %v665 = vsel %vm664, %v657, %v661
    %v666 = vand.u32 2147483647, %v656
    %vm667 = vcmp.eq.f32.partialorder %v666, 8.507059e+37
    %v668 = vand.u32 %v656, 2147483648
    %v669 = vor.u32 1.1754944e-38, %v668
    %v670 = vsel %vm667, %v669, %v665
    %v671 = vmul.f32 1.0, %v670
    %v672 = vmul.f32 %v651, %v333
    %v673 = vmul.f32 %v632, %v652
    %v674 = vadd.f32 %v672, %v673
    %v675 = vtanh.pop %v674
    %v676 = vmul.f32 %v671, %v675
    %677 = vmatpush.msra.mxu0 %v328
    %678 = vmatpush.msra.mxu0 %v327
    %679 = vmatpush.msra.mxu0 %v326
    %680 = vmatpush.msra.mxu0 %v325
    %681 = vmatpush.msra.mxu0 %v324
    %682 = vmatpush.msra.mxu0 %v323
    %683 = vmatpush.msra.mxu0 %v322
    %684 = vmatpush.msra.mxu0 %v321
    %685 = vmatpush.msra.mxu0 %v320
    %686 = vmatpush.msra.mxu0 %v319
    %687 = vmatpush.msra.mxu0 %v318
    %688 = vmatpush.msra.mxu0 %v317
    %689 = vmatpush.msra.mxu0 %v316
    %690 = vmatpush.msra.mxu0 %v315
    %691 = vmatpush.msra.mxu0 %v314
    %692 = vmatpush.msra.mxu0 %v313
    %693 = vmatmul.f32.gmra.mxu0 %v676
    %v694 = vpop.f32.mrf.mxu0
    %v695 = vadd.f32 %v329, %v694
    %696 = vdwg.mxu0
    %v697 = vtanh.pop %v695
    %698 = vst [vmem:[#allocation2] sm:$0xff] %v676
    %699 = vst [vmem:[#allocation3] sm:$0xff] %v674
    %700 = vst [vmem:[#allocation4] sm:$0xff] %v697
    %701 = vst [vmem:[#allocation16] sm:$0xff] %v697
    %s702 = scalar_lea.vmem [#allocation5], 8
    %v703 = vld [vmem:[%s702] sm:$0xff]
    %v704 = vld [vmem:[#allocation4] sm:$0xff]
    %v705 = vld [vmem:[#allocation2] sm:$0xff]
    %v706 = vld [vmem:[#allocation3] sm:$0xff]
    %707 = vadd.xlane.f32.xlu0 %v703
    %v708 = vpop.xlane.xlu0 %707
    %709 = vadd.xlane.f32.xlu0 %v704
    %v710 = vpop.xlane.xlu0 %709
    %v711 = vadd.f32 %v708, %v710
    %v712 = vmul.f32 %v703, %v703
    %713 = vadd.xlane.f32.xlu0 %v712
    %v714 = vpop.xlane.xlu0 %713
    %v715 = vmul.f32 %v704, %v704
    %716 = vadd.xlane.f32.xlu0 %v715
    %v717 = vpop.xlane.xlu0 %716
    %v718 = vadd.f32 %v714, %v717
    %v719 = vmul.f32 %v711, 0.015625
    %v720 = vmul.f32 %v718, 0.015625
    %v721 = vmul.f32 %v719, %v719
    %v722 = vsub.f32 %v720, %v721
    %v723 = vadd.f32 %v722, 1e-05
    %v724 = vrsqrt.pop %v723
    %v725 = vmul.f32 %v724, %v723
    %v726 = vmul.f32 %v725, %v724
    %v727 = vmul.f32 0.5, %v726
    %v728 = vsub.f32 1.5, %v727
    %v729 = vmul.f32 %v724, %v728
    %vm730 = vweird.f32 %v723
    %vm731 = vweird.f32 %v724
    %vm732 = vmor %vm730, %vm731
    %v733 = vsel %vm732, %v724, %v729
    %v734 = vsub.f32 %v703, %v719
    %v735 = vmul.f32 %v734, %v733
    %v736 = vsub.f32 %v704, %v719
    %v737 = vmul.f32 %v736, %v733
    %738 = vmatpush.msra.mxu0 %v180
    %739 = vmatpush.msra.mxu0 %v176
    %740 = vmatpush.msra.mxu0 %v172
    %741 = vmatpush.msra.mxu0 %v168
    %742 = vmatpush.msra.mxu0 %v164
    %743 = vmatpush.msra.mxu0 %v160
    %744 = vmatpush.msra.mxu0 %v156
    %745 = vmatpush.msra.mxu0 %v152
    %746 = vmatpush.msra.mxu0 %v148
    %747 = vmatpush.msra.mxu0 %v144
    %748 = vmatpush.msra.mxu0 %v140
    %749 = vmatpush.msra.mxu0 %v136
    %750 = vmatpush.msra.mxu0 %v132
    %751 = vmatpush.msra.mxu0 %v128
    %752 = vmatpush.msra.mxu0 %v124
    %753 = vmatpush.msra.mxu0 %v120
    %754 = vmatmul.f32.gmra.mxu0 %v735
    %v755 = vpop.f32.mrf.mxu0
    %v756 = vadd.f32 %v366, %v755
    %757 = vdwg.mxu0
    %758 = vmatpush.msra.mxu0 %v244
    %759 = vmatpush.msra.mxu0 %v240
    %760 = vmatpush.msra.mxu0 %v236
    %761 = vmatpush.msra.mxu0 %v232
    %762 = vmatpush.msra.mxu0 %v228
    %763 = vmatpush.msra.mxu0 %v224
    %764 = vmatpush.msra.mxu0 %v220
    %765 = vmatpush.msra.mxu0 %v216
    %766 = vmatpush.msra.mxu0 %v212
    %767 = vmatpush.msra.mxu0 %v208
    %768 = vmatpush.msra.mxu0 %v204
    %769 = vmatpush.msra.mxu0 %v200
    %770 = vmatpush.msra.mxu0 %v196
    %771 = vmatpush.msra.mxu0 %v192
    %772 = vmatpush.msra.mxu0 %v188
    %773 = vmatpush.msra.mxu0 %v184
    %774 = vmatmul.f32.gmra.mxu0 %v737
    %v775 = vpop.f32.mrf.mxu0
    %v776 = vadd.f32 %v756, %v775
    %777 = vdwg.mxu0
    %778 = vmatpush.msra.mxu0 %v308
    %779 = vmatpush.msra.mxu0 %v304
    %780 = vmatpush.msra.mxu0 %v300
    %781 = vmatpush.msra.mxu0 %v296
    %782 = vmatpush.msra.mxu0 %v292
    %783 = vmatpush.msra.mxu0 %v288
    %784 = vmatpush.msra.mxu0 %v284
    %785 = vmatpush.msra.mxu0 %v280
    %786 = vmatpush.msra.mxu0 %v276
    %787 = vmatpush.msra.mxu0 %v272
    %788 = vmatpush.msra.mxu0 %v268
    %789 = vmatpush.msra.mxu0 %v264
    %790 = vmatpush.msra.mxu0 %v260
    %791 = vmatpush.msra.mxu0 %v256
    %792 = vmatpush.msra.mxu0 %v252
    %793 = vmatpush.msra.mxu0 %v248
    %794 = vmatmul.f32.gmra.mxu0 %v705
    %v795 = vpop.f32.mrf.mxu0
    %v796 = vadd.f32 %v776, %v795
    %797 = vdwg.mxu0
    %798 = vmatpush.msra.mxu0 %v181
    %799 = vmatpush.msra.mxu0 %v177
    %800 = vmatpush.msra.mxu0 %v173
    %801 = vmatpush.msra.mxu0 %v169
    %802 = vmatpush.msra.mxu0 %v165
    %803 = vmatpush.msra.mxu0 %v161
    %804 = vmatpush.msra.mxu0 %v157
    %805 = vmatpush.msra.mxu0 %v153
    %806 = vmatpush.msra.mxu0 %v149
    %807 = vmatpush.msra.mxu0 %v145
    %808 = vmatpush.msra.mxu0 %v141
    %809 = vmatpush.msra.mxu0 %v137
    %810 = vmatpush.msra.mxu0 %v133
    %811 = vmatpush.msra.mxu0 %v129
    %812 = vmatpush.msra.mxu0 %v125
    %813 = vmatpush.msra.mxu0 %v121
    %814 = vmatmul.f32.gmra.mxu0 %v735
    %v815 = vpop.f32.mrf.mxu0
    %v816 = vadd.f32 %v367, %v815
    %817 = vdwg.mxu0
    %818 = vmatpush.msra.mxu0 %v245
    %819 = vmatpush.msra.mxu0 %v241
    %820 = vmatpush.msra.mxu0 %v237
    %821 = vmatpush.msra.mxu0 %v233
    %822 = vmatpush.msra.mxu0 %v229
    %823 = vmatpush.msra.mxu0 %v225
    %824 = vmatpush.msra.mxu0 %v221
    %825 = vmatpush.msra.mxu0 %v217
    %826 = vmatpush.msra.mxu0 %v213
    %827 = vmatpush.msra.mxu0 %v209
    %828 = vmatpush.msra.mxu0 %v205
    %829 = vmatpush.msra.mxu0 %v201
    %830 = vmatpush.msra.mxu0 %v197
    %831 = vmatpush.msra.mxu0 %v193
    %832 = vmatpush.msra.mxu0 %v189
    %833 = vmatpush.msra.mxu0 %v185
    %834 = vmatmul.f32.gmra.mxu0 %v737
    %v835 = vpop.f32.mrf.mxu0
    %v836 = vadd.f32 %v816, %v835
    %837 = vdwg.mxu0
    %838 = vmatpush.msra.mxu0 %v309
    %839 = vmatpush.msra.mxu0 %v305
    %840 = vmatpush.msra.mxu0 %v301
    %841 = vmatpush.msra.mxu0 %v297
    %842 = vmatpush.msra.mxu0 %v293
    %843 = vmatpush.msra.mxu0 %v289
    %844 = vmatpush.msra.mxu0 %v285
    %845 = vmatpush.msra.mxu0 %v281
    %846 = vmatpush.msra.mxu0 %v277
    %847 = vmatpush.msra.mxu0 %v273
    %848 = vmatpush.msra.mxu0 %v269
    %849 = vmatpush.msra.mxu0 %v265
    %850 = vmatpush.msra.mxu0 %v261
    %851 = vmatpush.msra.mxu0 %v257
    %852 = vmatpush.msra.mxu0 %v253
    %853 = vmatpush.msra.mxu0 %v249
    %854 = vmatmul.f32.gmra.mxu0 %v705
    %v855 = vpop.f32.mrf.mxu0
    %v856 = vadd.f32 %v836, %v855
    %857 = vdwg.mxu0
    %858 = vmatpush.msra.mxu0 %v182
    %859 = vmatpush.msra.mxu0 %v178
    %860 = vmatpush.msra.mxu0 %v174
    %861 = vmatpush.msra.mxu0 %v170
    %862 = vmatpush.msra.mxu0 %v166
    %863 = vmatpush.msra.mxu0 %v162
    %864 = vmatpush.msra.mxu0 %v158
    %865 = vmatpush.msra.mxu0 %v154
    %866 = vmatpush.msra.mxu0 %v150
    %867 = vmatpush.msra.mxu0 %v146
    %868 = vmatpush.msra.mxu0 %v142
    %869 = vmatpush.msra.mxu0 %v138
    %870 = vmatpush.msra.mxu0 %v134
    %871 = vmatpush.msra.mxu0 %v130
    %872 = vmatpush.msra.mxu0 %v126
    %873 = vmatpush.msra.mxu0 %v122
    %874 = vmatmul.f32.gmra.mxu0 %v735
    %v875 = vpop.f32.mrf.mxu0
    %v876 = vadd.f32 %v368, %v875
    %877 = vdwg.mxu0
    %878 = vmatpush.msra.mxu0 %v246
    %879 = vmatpush.msra.mxu0 %v242
    %880 = vmatpush.msra.mxu0 %v238
    %881 = vmatpush.msra.mxu0 %v234
    %882 = vmatpush.msra.mxu0 %v230
    %883 = vmatpush.msra.mxu0 %v226
    %884 = vmatpush.msra.mxu0 %v222
    %885 = vmatpush.msra.mxu0 %v218
    %886 = vmatpush.msra.mxu0 %v214
    %887 = vmatpush.msra.mxu0 %v210
    %888 = vmatpush.msra.mxu0 %v206
    %889 = vmatpush.msra.mxu0 %v202
    %890 = vmatpush.msra.mxu0 %v198
    %891 = vmatpush.msra.mxu0 %v194
    %892 = vmatpush.msra.mxu0 %v190
    %893 = vmatpush.msra.mxu0 %v186
    %894 = vmatmul.f32.gmra.mxu0 %v737
    %v895 = vpop.f32.mrf.mxu0
    %v896 = vadd.f32 %v876, %v895
    %897 = vdwg.mxu0
    %898 = vmatpush.msra.mxu0 %v310
    %899 = vmatpush.msra.mxu0 %v306
    %900 = vmatpush.msra.mxu0 %v302
    %901 = vmatpush.msra.mxu0 %v298
    %902 = vmatpush.msra.mxu0 %v294
    %903 = vmatpush.msra.mxu0 %v290
    %904 = vmatpush.msra.mxu0 %v286
    %905 = vmatpush.msra.mxu0 %v282
    %906 = vmatpush.msra.mxu0 %v278
    %907 = vmatpush.msra.mxu0 %v274
    %908 = vmatpush.msra.mxu0 %v270
    %909 = vmatpush.msra.mxu0 %v266
    %910 = vmatpush.msra.mxu0 %v262
    %911 = vmatpush.msra.mxu0 %v258
    %912 = vmatpush.msra.mxu0 %v254
    %913 = vmatpush.msra.mxu0 %v250
    %914 = vmatmul.f32.gmra.mxu0 %v705
    %v915 = vpop.f32.mrf.mxu0
    %v916 = vadd.f32 %v896, %v915
    %917 = vdwg.mxu0
    %918 = vmatpush.msra.mxu0 %v183
    %919 = vmatpush.msra.mxu0 %v179
    %920 = vmatpush.msra.mxu0 %v175
    %921 = vmatpush.msra.mxu0 %v171
    %922 = vmatpush.msra.mxu0 %v167
    %923 = vmatpush.msra.mxu0 %v163
    %924 = vmatpush.msra.mxu0 %v159
    %925 = vmatpush.msra.mxu0 %v155
    %926 = vmatpush.msra.mxu0 %v151
    %927 = vmatpush.msra.mxu0 %v147
    %928 = vmatpush.msra.mxu0 %v143
    %929 = vmatpush.msra.mxu0 %v139
    %930 = vmatpush.msra.mxu0 %v135
    %931 = vmatpush.msra.mxu0 %v131
    %932 = vmatpush.msra.mxu0 %v127
    %933 = vmatpush.msra.mxu0 %v123
    %934 = vmatmul.f32.gmra.mxu0 %v735
    %v935 = vpop.f32.mrf.mxu0
    %v936 = vadd.f32 %v369, %v935
    %937 = vdwg.mxu0
    %938 = vmatpush.msra.mxu0 %v247
    %939 = vmatpush.msra.mxu0 %v243
    %940 = vmatpush.msra.mxu0 %v239
    %941 = vmatpush.msra.mxu0 %v235
    %942 = vmatpush.msra.mxu0 %v231
    %943 = vmatpush.msra.mxu0 %v227
    %944 = vmatpush.msra.mxu0 %v223
    %945 = vmatpush.msra.mxu0 %v219
    %946 = vmatpush.msra.mxu0 %v215
    %947 = vmatpush.msra.mxu0 %v211
    %948 = vmatpush.msra.mxu0 %v207
    %949 = vmatpush.msra.mxu0 %v203
    %950 = vmatpush.msra.mxu0 %v199
    %951 = vmatpush.msra.mxu0 %v195
    %952 = vmatpush.msra.mxu0 %v191
    %953 = vmatpush.msra.mxu0 %v187
    %954 = vmatmul.f32.gmra.mxu0 %v737
    %v955 = vpop.f32.mrf.mxu0
    %v956 = vadd.f32 %v936, %v955
    %957 = vdwg.mxu0
    %958 = vmatpush.msra.mxu0 %v311
    %959 = vmatpush.msra.mxu0 %v307
    %960 = vmatpush.msra.mxu0 %v303
    %961 = vmatpush.msra.mxu0 %v299
    %962 = vmatpush.msra.mxu0 %v295
    %963 = vmatpush.msra.mxu0 %v291
    %964 = vmatpush.msra.mxu0 %v287
    %965 = vmatpush.msra.mxu0 %v283
    %966 = vmatpush.msra.mxu0 %v279
    %967 = vmatpush.msra.mxu0 %v275
    %968 = vmatpush.msra.mxu0 %v271
    %969 = vmatpush.msra.mxu0 %v267
    %970 = vmatpush.msra.mxu0 %v263
    %971 = vmatpush.msra.mxu0 %v259
    %972 = vmatpush.msra.mxu0 %v255
    %973 = vmatpush.msra.mxu0 %v251
    %974 = vmatmul.f32.gmra.mxu0 %v705
    %v975 = vpop.f32.mrf.mxu0
    %v976 = vadd.f32 %v956, %v975
    %977 = vdwg.mxu0
    %v978 = vxor.u32 %v796, 2147483648
    %v979 = vmul.f32 %v978, 1.442695
    %v980 = vpow.pop %v979
    %v981 = vadd.f32 %v980, 1.0
    %v982 = vrcp.pop %v981
    %v983 = vmul.f32 %v981, %v982
    %v984 = vsub.f32 1.0, %v983
    %v985 = vmul.f32 %v982, %v984
    %v986 = vadd.f32 %v982, %v985
    %vm987 = vweird.f32 %v981
    %vm988 = vweird.f32 %v982
    %vm989 = vmor %vm987, %vm988
    %v990 = vsel %vm989, %v982, %v986
    %v991 = vand.u32 2147483647, %v981
    %vm992 = vcmp.eq.f32.partialorder %v991, 8.507059e+37
    %v993 = vand.u32 %v981, 2147483648
    %v994 = vor.u32 1.1754944e-38, %v993
    %v995 = vsel %vm992, %v994, %v990
    %v996 = vmul.f32 1.0, %v995
    %v997 = vxor.u32 %v856, 2147483648
    %v998 = vmul.f32 %v997, 1.442695
    %v999 = vpow.pop %v998
    %v1000 = vadd.f32 %v999, 1.0
    %v1001 = vrcp.pop %v1000
    %v1002 = vmul.f32 %v1000, %v1001
    %v1003 = vsub.f32 1.0, %v1002
    %v1004 = vmul.f32 %v1001, %v1003
    %v1005 = vadd.f32 %v1001, %v1004
    %vm1006 = vweird.f32 %v1000
    %vm1007 = vweird.f32 %v1001
    %vm1008 = vmor %vm1006, %vm1007
    %v1009 = vsel %vm1008, %v1001, %v1005
    %v1010 = vand.u32 2147483647, %v1000
    %vm1011 = vcmp.eq.f32.partialorder %v1010, 8.507059e+37
    %v1012 = vand.u32 %v1000, 2147483648
    %v1013 = vor.u32 1.1754944e-38, %v1012
    %v1014 = vsel %vm1011, %v1013, %v1009
    %v1015 = vmul.f32 1.0, %v1014
    %v1016 = vtanh.pop %v916
    %v1017 = vxor.u32 %v976, 2147483648
    %v1018 = vmul.f32 %v1017, 1.442695
    %v1019 = vpow.pop %v1018
    %v1020 = vadd.f32 %v1019, 1.0
    %v1021 = vrcp.pop %v1020
    %v1022 = vmul.f32 %v1020, %v1021
    %v1023 = vsub.f32 1.0, %v1022
    %v1024 = vmul.f32 %v1021, %v1023
    %v1025 = vadd.f32 %v1021, %v1024
    %vm1026 = vweird.f32 %v1020
    %vm1027 = vweird.f32 %v1021
    %vm1028 = vmor %vm1026, %vm1027
    %v1029 = vsel %vm1028, %v1021, %v1025
    %v1030 = vand.u32 2147483647, %v1020
    %vm1031 = vcmp.eq.f32.partialorder %v1030, 8.507059e+37
    %v1032 = vand.u32 %v1020, 2147483648
    %v1033 = vor.u32 1.1754944e-38, %v1032
    %v1034 = vsel %vm1031, %v1033, %v1029
    %v1035 = vmul.f32 1.0, %v1034
    %v1036 = vmul.f32 %v1015, %v706
    %v1037 = vmul.f32 %v996, %v1016
    %v1038 = vadd.f32 %v1036, %v1037
    %v1039 = vtanh.pop %v1038
    %v1040 = vmul.f32 %v1035, %v1039
    %1041 = vmatpush.msra.mxu0 %v328
    %1042 = vmatpush.msra.mxu0 %v327
    %1043 = vmatpush.msra.mxu0 %v326
    %1044 = vmatpush.msra.mxu0 %v325
    %1045 = vmatpush.msra.mxu0 %v324
    %1046 = vmatpush.msra.mxu0 %v323
    %1047 = vmatpush.msra.mxu0 %v322
    %1048 = vmatpush.msra.mxu0 %v321
    %1049 = vmatpush.msra.mxu0 %v320
    %1050 = vmatpush.msra.mxu0 %v319
    %1051 = vmatpush.msra.mxu0 %v318
    %1052 = vmatpush.msra.mxu0 %v317
    %1053 = vmatpush.msra.mxu0 %v316
    %1054 = vmatpush.msra.mxu0 %v315
    %1055 = vmatpush.msra.mxu0 %v314
    %1056 = vmatpush.msra.mxu0 %v313
    %1057 = vmatmul.f32.gmra.mxu0 %v1040
    %v1058 = vpop.f32.mrf.mxu0
    %v1059 = vadd.f32 %v329, %v1058
    %1060 = vdwg.mxu0
    %v1061 = vtanh.pop %v1059
    %1062 = vst [vmem:[#allocation2] sm:$0xff] %v1040
    %1063 = vst [vmem:[#allocation3] sm:$0xff] %v1038
    %1064 = vst [vmem:[#allocation4] sm:$0xff] %v1061
    %s1065 = scalar_lea.vmem [#allocation16], 8
    %1066 = vst [vmem:[%s1065] sm:$0xff] %v1061
    %s1067 = scalar_lea.vmem [#allocation5], 16
    %v1068 = vld [vmem:[%s1067] sm:$0xff]
    %v1069 = vld [vmem:[#allocation4] sm:$0xff]
    %v1070 = vld [vmem:[#allocation2] sm:$0xff]
    %v1071 = vld [vmem:[#allocation3] sm:$0xff]
    %1072 = vadd.xlane.f32.xlu0 %v1068
    %v1073 = vpop.xlane.xlu0 %1072
    %1074 = vadd.xlane.f32.xlu0 %v1069
    %v1075 = vpop.xlane.xlu0 %1074
    %v1076 = vadd.f32 %v1073, %v1075
    %v1077 = vmul.f32 %v1068, %v1068
    %1078 = vadd.xlane.f32.xlu0 %v1077
    %v1079 = vpop.xlane.xlu0 %1078
    %v1080 = vmul.f32 %v1069, %v1069
    %1081 = vadd.xlane.f32.xlu0 %v1080
    %v1082 = vpop.xlane.xlu0 %1081
    %v1083 = vadd.f32 %v1079, %v1082
    %v1084 = vmul.f32 %v1076, 0.015625
    %v1085 = vmul.f32 %v1083, 0.015625
    %v1086 = vmul.f32 %v1084, %v1084
    %v1087 = vsub.f32 %v1085, %v1086
    %v1088 = vadd.f32 %v1087, 1e-05
    %v1089 = vrsqrt.pop %v1088
    %v1090 = vmul.f32 %v1089, %v1088
    %v1091 = vmul.f32 %v1090, %v1089
    %v1092 = vmul.f32 0.5, %v1091
    %v1093 = vsub.f32 1.5, %v1092
    %v1094 = vmul.f32 %v1089, %v1093
    %vm1095 = vweird.f32 %v1088
    %vm1096 = vweird.f32 %v1089
    %vm1097 = vmor %vm1095, %vm1096
    %v1098 = vsel %vm1097, %v1089, %v1094
    %v1099 = vsub.f32 %v1068, %v1084
    %v1100 = vmul.f32 %v1099, %v1098
    %v1101 = vsub.f32 %v1069, %v1084
    %v1102 = vmul.f32 %v1101, %v1098
    %1103 = vmatpush.msra.mxu0 %v180
    %1104 = vmatpush.msra.mxu0 %v176
    %1105 = vmatpush.msra.mxu0 %v172
    %1106 = vmatpush.msra.mxu0 %v168
    %1107 = vmatpush.msra.mxu0 %v164
    %1108 = vmatpush.msra.mxu0 %v160
    %1109 = vmatpush.msra.mxu0 %v156
    %1110 = vmatpush.msra.mxu0 %v152
    %1111 = vmatpush.msra.mxu0 %v148
    %1112 = vmatpush.msra.mxu0 %v144
    %1113 = vmatpush.msra.mxu0 %v140
    %1114 = vmatpush.msra.mxu0 %v136
    %1115 = vmatpush.msra.mxu0 %v132
    %1116 = vmatpush.msra.mxu0 %v128
    %1117 = vmatpush.msra.mxu0 %v124
    %1118 = vmatpush.msra.mxu0 %v120
    %1119 = vmatmul.f32.gmra.mxu0 %v1100
    %v1120 = vpop.f32.mrf.mxu0
    %v1121 = vadd.f32 %v366, %v1120
    %1122 = vdwg.mxu0
    %1123 = vmatpush.msra.mxu0 %v244
    %1124 = vmatpush.msra.mxu0 %v240
    %1125 = vmatpush.msra.mxu0 %v236
    %1126 = vmatpush.msra.mxu0 %v232
    %1127 = vmatpush.msra.mxu0 %v228
    %1128 = vmatpush.msra.mxu0 %v224
    %1129 = vmatpush.msra.mxu0 %v220
    %1130 = vmatpush.msra.mxu0 %v216
    %1131 = vmatpush.msra.mxu0 %v212
    %1132 = vmatpush.msra.mxu0 %v208
    %1133 = vmatpush.msra.mxu0 %v204
    %1134 = vmatpush.msra.mxu0 %v200
    %1135 = vmatpush.msra.mxu0 %v196
    %1136 = vmatpush.msra.mxu0 %v192
    %1137 = vmatpush.msra.mxu0 %v188
    %1138 = vmatpush.msra.mxu0 %v184
    %1139 = vmatmul.f32.gmra.mxu0 %v1102
    %v1140 = vpop.f32.mrf.mxu0
    %v1141 = vadd.f32 %v1121, %v1140
    %1142 = vdwg.mxu0
    %1143 = vmatpush.msra.mxu0 %v308
    %1144 = vmatpush.msra.mxu0 %v304
    %1145 = vmatpush.msra.mxu0 %v300
    %1146 = vmatpush.msra.mxu0 %v296
    %1147 = vmatpush.msra.mxu0 %v292
    %1148 = vmatpush.msra.mxu0 %v288
    %1149 = vmatpush.msra.mxu0 %v284
    %1150 = vmatpush.msra.mxu0 %v280
    %1151 = vmatpush.msra.mxu0 %v276
    %1152 = vmatpush.msra.mxu0 %v272
    %1153 = vmatpush.msra.mxu0 %v268
    %1154 = vmatpush.msra.mxu0 %v264
    %1155 = vmatpush.msra.mxu0 %v260
    %1156 = vmatpush.msra.mxu0 %v256
    %1157 = vmatpush.msra.mxu0 %v252
    %1158 = vmatpush.msra.mxu0 %v248
    %1159 = vmatmul.f32.gmra.mxu0 %v1070
    %v1160 = vpop.f32.mrf.mxu0
    %v1161 = vadd.f32 %v1141, %v1160
    %1162 = vdwg.mxu0
    %1163 = vmatpush.msra.mxu0 %v181
    %1164 = vmatpush.msra.mxu0 %v177
    %1165 = vmatpush.msra.mxu0 %v173
    %1166 = vmatpush.msra.mxu0 %v169
    %1167 = vmatpush.msra.mxu0 %v165
    %1168 = vmatpush.msra.mxu0 %v161
    %1169 = vmatpush.msra.mxu0 %v157
    %1170 = vmatpush.msra.mxu0 %v153
    %1171 = vmatpush.msra.mxu0 %v149
    %1172 = vmatpush.msra.mxu0 %v145
    %1173 = vmatpush.msra.mxu0 %v141
    %1174 = vmatpush.msra.mxu0 %v137
    %1175 = vmatpush.msra.mxu0 %v133
    %1176 = vmatpush.msra.mxu0 %v129
    %1177 = vmatpush.msra.mxu0 %v125
    %1178 = vmatpush.msra.mxu0 %v121
    %1179 = vmatmul.f32.gmra.mxu0 %v1100
    %v1180 = vpop.f32.mrf.mxu0
    %v1181 = vadd.f32 %v367, %v1180
    %1182 = vdwg.mxu0
    %1183 = vmatpush.msra.mxu0 %v245
    %1184 = vmatpush.msra.mxu0 %v241
    %1185 = vmatpush.msra.mxu0 %v237
    %1186 = vmatpush.msra.mxu0 %v233
    %1187 = vmatpush.msra.mxu0 %v229
    %1188 = vmatpush.msra.mxu0 %v225
    %1189 = vmatpush.msra.mxu0 %v221
    %1190 = vmatpush.msra.mxu0 %v217
    %1191 = vmatpush.msra.mxu0 %v213
    %1192 = vmatpush.msra.mxu0 %v209
    %1193 = vmatpush.msra.mxu0 %v205
    %1194 = vmatpush.msra.mxu0 %v201
    %1195 = vmatpush.msra.mxu0 %v197
    %1196 = vmatpush.msra.mxu0 %v193
    %1197 = vmatpush.msra.mxu0 %v189
    %1198 = vmatpush.msra.mxu0 %v185
    %1199 = vmatmul.f32.gmra.mxu0 %v1102
    %v1200 = vpop.f32.mrf.mxu0
    %v1201 = vadd.f32 %v1181, %v1200
    %1202 = vdwg.mxu0
    %1203 = vmatpush.msra.mxu0 %v309
    %1204 = vmatpush.msra.mxu0 %v305
    %1205 = vmatpush.msra.mxu0 %v301
    %1206 = vmatpush.msra.mxu0 %v297
    %1207 = vmatpush.msra.mxu0 %v293
    %1208 = vmatpush.msra.mxu0 %v289
    %1209 = vmatpush.msra.mxu0 %v285
    %1210 = vmatpush.msra.mxu0 %v281
    %1211 = vmatpush.msra.mxu0 %v277
    %1212 = vmatpush.msra.mxu0 %v273
    %1213 = vmatpush.msra.mxu0 %v269
    %1214 = vmatpush.msra.mxu0 %v265
    %1215 = vmatpush.msra.mxu0 %v261
    %1216 = vmatpush.msra.mxu0 %v257
    %1217 = vmatpush.msra.mxu0 %v253
    %1218 = vmatpush.msra.mxu0 %v249
    %1219 = vmatmul.f32.gmra.mxu0 %v1070
    %v1220 = vpop.f32.mrf.mxu0
    %v1221 = vadd.f32 %v1201, %v1220
    %1222 = vdwg.mxu0
    %1223 = vmatpush.msra.mxu0 %v182
    %1224 = vmatpush.msra.mxu0 %v178
    %1225 = vmatpush.msra.mxu0 %v174
    %1226 = vmatpush.msra.mxu0 %v170
    %1227 = vmatpush.msra.mxu0 %v166
    %1228 = vmatpush.msra.mxu0 %v162
    %1229 = vmatpush.msra.mxu0 %v158
    %1230 = vmatpush.msra.mxu0 %v154
    %1231 = vmatpush.msra.mxu0 %v150
    %1232 = vmatpush.msra.mxu0 %v146
    %1233 = vmatpush.msra.mxu0 %v142
    %1234 = vmatpush.msra.mxu0 %v138
    %1235 = vmatpush.msra.mxu0 %v134
    %1236 = vmatpush.msra.mxu0 %v130
    %1237 = vmatpush.msra.mxu0 %v126
    %1238 = vmatpush.msra.mxu0 %v122
    %1239 = vmatmul.f32.gmra.mxu0 %v1100
    %v1240 = vpop.f32.mrf.mxu0
    %v1241 = vadd.f32 %v368, %v1240
    %1242 = vdwg.mxu0
    %1243 = vmatpush.msra.mxu0 %v246
    %1244 = vmatpush.msra.mxu0 %v242
    %1245 = vmatpush.msra.mxu0 %v238
    %1246 = vmatpush.msra.mxu0 %v234
    %1247 = vmatpush.msra.mxu0 %v230
    %1248 = vmatpush.msra.mxu0 %v226
    %1249 = vmatpush.msra.mxu0 %v222
    %1250 = vmatpush.msra.mxu0 %v218
    %1251 = vmatpush.msra.mxu0 %v214
    %1252 = vmatpush.msra.mxu0 %v210
    %1253 = vmatpush.msra.mxu0 %v206
    %1254 = vmatpush.msra.mxu0 %v202
    %1255 = vmatpush.msra.mxu0 %v198
    %1256 = vmatpush.msra.mxu0 %v194
    %1257 = vmatpush.msra.mxu0 %v190
    %1258 = vmatpush.msra.mxu0 %v186
    %1259 = vmatmul.f32.gmra.mxu0 %v1102
    %v1260 = vpop.f32.mrf.mxu0
    %v1261 = vadd.f32 %v1241, %v1260
    %1262 = vdwg.mxu0
    %1263 = vmatpush.msra.mxu0 %v310
    %1264 = vmatpush.msra.mxu0 %v306
    %1265 = vmatpush.msra.mxu0 %v302
    %1266 = vmatpush.msra.mxu0 %v298
    %1267 = vmatpush.msra.mxu0 %v294
    %1268 = vmatpush.msra.mxu0 %v290
    %1269 = vmatpush.msra.mxu0 %v286
    %1270 = vmatpush.msra.mxu0 %v282
    %1271 = vmatpush.msra.mxu0 %v278
    %1272 = vmatpush.msra.mxu0 %v274
    %1273 = vmatpush.msra.mxu0 %v270
    %1274 = vmatpush.msra.mxu0 %v266
    %1275 = vmatpush.msra.mxu0 %v262
    %1276 = vmatpush.msra.mxu0 %v258
    %1277 = vmatpush.msra.mxu0 %v254
    %1278 = vmatpush.msra.mxu0 %v250
    %1279 = vmatmul.f32.gmra.mxu0 %v1070
    %v1280 = vpop.f32.mrf.mxu0
    %v1281 = vadd.f32 %v1261, %v1280
    %1282 = vdwg.mxu0
    %1283 = vmatpush.msra.mxu0 %v183
    %1284 = vmatpush.msra.mxu0 %v179
    %1285 = vmatpush.msra.mxu0 %v175
    %1286 = vmatpush.msra.mxu0 %v171
    %1287 = vmatpush.msra.mxu0 %v167
    %1288 = vmatpush.msra.mxu0 %v163
    %1289 = vmatpush.msra.mxu0 %v159
    %1290 = vmatpush.msra.mxu0 %v155
    %1291 = vmatpush.msra.mxu0 %v151
    %1292 = vmatpush.msra.mxu0 %v147
    %1293 = vmatpush.msra.mxu0 %v143
    %1294 = vmatpush.msra.mxu0 %v139
    %1295 = vmatpush.msra.mxu0 %v135
    %1296 = vmatpush.msra.mxu0 %v131
    %1297 = vmatpush.msra.mxu0 %v127
    %1298 = vmatpush.msra.mxu0 %v123
    %1299 = vmatmul.f32.gmra.mxu0 %v1100
    %v1300 = vpop.f32.mrf.mxu0
    %v1301 = vadd.f32 %v369, %v1300
    %1302 = vdwg.mxu0
    %1303 = vmatpush.msra.mxu0 %v247
    %1304 = vmatpush.msra.mxu0 %v243
    %1305 = vmatpush.msra.mxu0 %v239
    %1306 = vmatpush.msra.mxu0 %v235
    %1307 = vmatpush.msra.mxu0 %v231
    %1308 = vmatpush.msra.mxu0 %v227
    %1309 = vmatpush.msra.mxu0 %v223
    %1310 = vmatpush.msra.mxu0 %v219
    %1311 = vmatpush.msra.mxu0 %v215
    %1312 = vmatpush.msra.mxu0 %v211
    %1313 = vmatpush.msra.mxu0 %v207
    %1314 = vmatpush.msra.mxu0 %v203
    %1315 = vmatpush.msra.mxu0 %v199
    %1316 = vmatpush.msra.mxu0 %v195
    %1317 = vmatpush.msra.mxu0 %v191
    %1318 = vmatpush.msra.mxu0 %v187
    %1319 = vmatmul.f32.gmra.mxu0 %v1102
    %v1320 = vpop.f32.mrf.mxu0
    %v1321 = vadd.f32 %v1301, %v1320
    %1322 = vdwg.mxu0
    %1323 = vmatpush.msra.mxu0 %v311
    %1324 = vmatpush.msra.mxu0 %v307
    %1325 = vmatpush.msra.mxu0 %v303
    %1326 = vmatpush.msra.mxu0 %v299
    %1327 = vmatpush.msra.mxu0 %v295
    %1328 = vmatpush.msra.mxu0 %v291
    %1329 = vmatpush.msra.mxu0 %v287
    %1330 = vmatpush.msra.mxu0 %v283
    %1331 = vmatpush.msra.mxu0 %v279
    %1332 = vmatpush.msra.mxu0 %v275
    %1333 = vmatpush.msra.mxu0 %v271
    %1334 = vmatpush.msra.mxu0 %v267
    %1335 = vmatpush.msra.mxu0 %v263
    %1336 = vmatpush.msra.mxu0 %v259
    %1337 = vmatpush.msra.mxu0 %v255
    %1338 = vmatpush.msra.mxu0 %v251
    %1339 = vmatmul.f32.gmra.mxu0 %v1070
    %v1340 = vpop.f32.mrf.mxu0
    %v1341 = vadd.f32 %v1321, %v1340
    %1342 = vdwg.mxu0
    %v1343 = vxor.u32 %v1161, 2147483648
    %v1344 = vmul.f32 %v1343, 1.442695
    %v1345 = vpow.pop %v1344
    %v1346 = vadd.f32 %v1345, 1.0
    %v1347 = vrcp.pop %v1346
    %v1348 = vmul.f32 %v1346, %v1347
    %v1349 = vsub.f32 1.0, %v1348
    %v1350 = vmul.f32 %v1347, %v1349
    %v1351 = vadd.f32 %v1347, %v1350
    %vm1352 = vweird.f32 %v1346
    %vm1353 = vweird.f32 %v1347
    %vm1354 = vmor %vm1352, %vm1353
    %v1355 = vsel %vm1354, %v1347, %v1351
    %v1356 = vand.u32 2147483647, %v1346
    %vm1357 = vcmp.eq.f32.partialorder %v1356, 8.507059e+37
    %v1358 = vand.u32 %v1346, 2147483648
    %v1359 = vor.u32 1.1754944e-38, %v1358
    %v1360 = vsel %vm1357, %v1359, %v1355
    %v1361 = vmul.f32 1.0, %v1360
    %v1362 = vxor.u32 %v1221, 2147483648
    %v1363 = vmul.f32 %v1362, 1.442695
    %v1364 = vpow.pop %v1363
    %v1365 = vadd.f32 %v1364, 1.0
    %v1366 = vrcp.pop %v1365
    %v1367 = vmul.f32 %v1365, %v1366
    %v1368 = vsub.f32 1.0, %v1367
    %v1369 = vmul.f32 %v1366, %v1368
    %v1370 = vadd.f32 %v1366, %v1369
    %vm1371 = vweird.f32 %v1365
    %vm1372 = vweird.f32 %v1366
    %vm1373 = vmor %vm1371, %vm1372
    %v1374 = vsel %vm1373, %v1366, %v1370
    %v1375 = vand.u32 2147483647, %v1365
    %vm1376 = vcmp.eq.f32.partialorder %v1375, 8.507059e+37
    %v1377 = vand.u32 %v1365, 2147483648
    %v1378 = vor.u32 1.1754944e-38, %v1377
    %v1379 = vsel %vm1376, %v1378, %v1374
    %v1380 = vmul.f32 1.0, %v1379
    %v1381 = vtanh.pop %v1281
    %v1382 = vxor.u32 %v1341, 2147483648
    %v1383 = vmul.f32 %v1382, 1.442695
    %v1384 = vpow.pop %v1383
    %v1385 = vadd.f32 %v1384, 1.0
    %v1386 = vrcp.pop %v1385
    %v1387 = vmul.f32 %v1385, %v1386
    %v1388 = vsub.f32 1.0, %v1387
    %v1389 = vmul.f32 %v1386, %v1388
    %v1390 = vadd.f32 %v1386, %v1389
    %vm1391 = vweird.f32 %v1385
    %vm1392 = vweird.f32 %v1386
    %vm1393 = vmor %vm1391, %vm1392
    %v1394 = vsel %vm1393, %v1386, %v1390
    %v1395 = vand.u32 2147483647, %v1385
    %vm1396 = vcmp.eq.f32.partialorder %v1395, 8.507059e+37
    %v1397 = vand.u32 %v1385, 2147483648
    %v1398 = vor.u32 1.1754944e-38, %v1397
    %v1399 = vsel %vm1396, %v1398, %v1394
    %v1400 = vmul.f32 1.0, %v1399
    %v1401 = vmul.f32 %v1380, %v1071
    %v1402 = vmul.f32 %v1361, %v1381
    %v1403 = vadd.f32 %v1401, %v1402
    %v1404 = vtanh.pop %v1403
    %v1405 = vmul.f32 %v1400, %v1404
    %1406 = vmatpush.msra.mxu0 %v328
    %1407 = vmatpush.msra.mxu0 %v327
    %1408 = vmatpush.msra.mxu0 %v326
    %1409 = vmatpush.msra.mxu0 %v325
    %1410 = vmatpush.msra.mxu0 %v324
    %1411 = vmatpush.msra.mxu0 %v323
    %1412 = vmatpush.msra.mxu0 %v322
    %1413 = vmatpush.msra.mxu0 %v321
    %1414 = vmatpush.msra.mxu0 %v320
    %1415 = vmatpush.msra.mxu0 %v319
    %1416 = vmatpush.msra.mxu0 %v318
    %1417 = vmatpush.msra.mxu0 %v317
    %1418 = vmatpush.msra.mxu0 %v316
    %1419 = vmatpush.msra.mxu0 %v315
    %1420 = vmatpush.msra.mxu0 %v314
    %1421 = vmatpush.msra.mxu0 %v313
    %1422 = vmatmul.f32.gmra.mxu0 %v1405
    %v1423 = vpop.f32.mrf.mxu0
    %v1424 = vadd.f32 %v329, %v1423
    %1425 = vdwg.mxu0
    %v1426 = vtanh.pop %v1424
    %1427 = vst [vmem:[#allocation2] sm:$0xff] %v1405
    %1428 = vst [vmem:[#allocation3] sm:$0xff] %v1403
    %1429 = vst [vmem:[#allocation4] sm:$0xff] %v1426
    %s1430 = scalar_lea.vmem [#allocation16], 16
    %1431 = vst [vmem:[%s1430] sm:$0xff] %v1426
    %s1432 = scalar_lea.vmem [#allocation5], 24
    %v1433 = vld [vmem:[%s1432] sm:$0xff]
    %v1434 = vld [vmem:[#allocation4] sm:$0xff]
    %v1435 = vld [vmem:[#allocation2] sm:$0xff]
    %v1436 = vld [vmem:[#allocation3] sm:$0xff]
    %1437 = vadd.xlane.f32.xlu0 %v1433
    %v1438 = vpop.xlane.xlu0 %1437
    %1439 = vadd.xlane.f32.xlu0 %v1434
    %v1440 = vpop.xlane.xlu0 %1439
    %v1441 = vadd.f32 %v1438, %v1440
    %v1442 = vmul.f32 %v1433, %v1433
    %1443 = vadd.xlane.f32.xlu0 %v1442
    %v1444 = vpop.xlane.xlu0 %1443
    %v1445 = vmul.f32 %v1434, %v1434
    %1446 = vadd.xlane.f32.xlu0 %v1445
    %v1447 = vpop.xlane.xlu0 %1446
    %v1448 = vadd.f32 %v1444, %v1447
    %v1449 = vmul.f32 %v1441, 0.015625
    %v1450 = vmul.f32 %v1448, 0.015625
    %v1451 = vmul.f32 %v1449, %v1449
    %v1452 = vsub.f32 %v1450, %v1451
    %v1453 = vadd.f32 %v1452, 1e-05
    %v1454 = vrsqrt.pop %v1453
    %v1455 = vmul.f32 %v1454, %v1453
    %v1456 = vmul.f32 %v1455, %v1454
    %v1457 = vmul.f32 0.5, %v1456
    %v1458 = vsub.f32 1.5, %v1457
    %v1459 = vmul.f32 %v1454, %v1458
    %vm1460 = vweird.f32 %v1453
    %vm1461 = vweird.f32 %v1454
    %vm1462 = vmor %vm1460, %vm1461
    %v1463 = vsel %vm1462, %v1454, %v1459
    %v1464 = vsub.f32 %v1433, %v1449
    %v1465 = vmul.f32 %v1464, %v1463
    %v1466 = vsub.f32 %v1434, %v1449
    %v1467 = vmul.f32 %v1466, %v1463
    %1468 = vmatpush.msra.mxu0 %v180
    %1469 = vmatpush.msra.mxu0 %v176
    %1470 = vmatpush.msra.mxu0 %v172
    %1471 = vmatpush.msra.mxu0 %v168
    %1472 = vmatpush.msra.mxu0 %v164
    %1473 = vmatpush.msra.mxu0 %v160
    %1474 = vmatpush.msra.mxu0 %v156
    %1475 = vmatpush.msra.mxu0 %v152
    %1476 = vmatpush.msra.mxu0 %v148
    %1477 = vmatpush.msra.mxu0 %v144
    %1478 = vmatpush.msra.mxu0 %v140
    %1479 = vmatpush.msra.mxu0 %v136
    %1480 = vmatpush.msra.mxu0 %v132
    %1481 = vmatpush.msra.mxu0 %v128
    %1482 = vmatpush.msra.mxu0 %v124
    %1483 = vmatpush.msra.mxu0 %v120
    %1484 = vmatmul.f32.gmra.mxu0 %v1465
    %v1485 = vpop.f32.mrf.mxu0
    %v1486 = vadd.f32 %v366, %v1485
    %1487 = vdwg.mxu0
    %1488 = vmatpush.msra.mxu0 %v244
    %1489 = vmatpush.msra.mxu0 %v240
    %1490 = vmatpush.msra.mxu0 %v236
    %1491 = vmatpush.msra.mxu0 %v232
    %1492 = vmatpush.msra.mxu0 %v228
    %1493 = vmatpush.msra.mxu0 %v224
    %1494 = vmatpush.msra.mxu0 %v220
    %1495 = vmatpush.msra.mxu0 %v216
    %1496 = vmatpush.msra.mxu0 %v212
    %1497 = vmatpush.msra.mxu0 %v208
    %1498 = vmatpush.msra.mxu0 %v204
    %1499 = vmatpush.msra.mxu0 %v200
    %1500 = vmatpush.msra.mxu0 %v196
    %1501 = vmatpush.msra.mxu0 %v192
    %1502 = vmatpush.msra.mxu0 %v188
    %1503 = vmatpush.msra.mxu0 %v184
    %1504 = vmatmul.f32.gmra.mxu0 %v1467
    %v1505 = vpop.f32.mrf.mxu0
    %v1506 = vadd.f32 %v1486, %v1505
    %1507 = vdwg.mxu0
    %1508 = vmatpush.msra.mxu0 %v308
    %1509 = vmatpush.msra.mxu0 %v304
    %1510 = vmatpush.msra.mxu0 %v300
    %1511 = vmatpush.msra.mxu0 %v296
    %1512 = vmatpush.msra.mxu0 %v292
    %1513 = vmatpush.msra.mxu0 %v288
    %1514 = vmatpush.msra.mxu0 %v284
    %1515 = vmatpush.msra.mxu0 %v280
    %1516 = vmatpush.msra.mxu0 %v276
    %1517 = vmatpush.msra.mxu0 %v272
    %1518 = vmatpush.msra.mxu0 %v268
    %1519 = vmatpush.msra.mxu0 %v264
    %1520 = vmatpush.msra.mxu0 %v260
    %1521 = vmatpush.msra.mxu0 %v256
    %1522 = vmatpush.msra.mxu0 %v252
    %1523 = vmatpush.msra.mxu0 %v248
    %1524 = vmatmul.f32.gmra.mxu0 %v1435
    %v1525 = vpop.f32.mrf.mxu0
    %v1526 = vadd.f32 %v1506, %v1525
    %1527 = vdwg.mxu0
    %1528 = vmatpush.msra.mxu0 %v181
    %1529 = vmatpush.msra.mxu0 %v177
    %1530 = vmatpush.msra.mxu0 %v173
    %1531 = vmatpush.msra.mxu0 %v169
    %1532 = vmatpush.msra.mxu0 %v165
    %1533 = vmatpush.msra.mxu0 %v161
    %1534 = vmatpush.msra.mxu0 %v157
    %1535 = vmatpush.msra.mxu0 %v153
    %1536 = vmatpush.msra.mxu0 %v149
    %1537 = vmatpush.msra.mxu0 %v145
    %1538 = vmatpush.msra.mxu0 %v141
    %1539 = vmatpush.msra.mxu0 %v137
    %1540 = vmatpush.msra.mxu0 %v133
    %1541 = vmatpush.msra.mxu0 %v129
    %1542 = vmatpush.msra.mxu0 %v125
    %1543 = vmatpush.msra.mxu0 %v121
    %1544 = vmatmul.f32.gmra.mxu0 %v1465
    %v1545 = vpop.f32.mrf.mxu0
    %v1546 = vadd.f32 %v367, %v1545
    %1547 = vdwg.mxu0
    %1548 = vmatpush.msra.mxu0 %v245
    %1549 = vmatpush.msra.mxu0 %v241
    %1550 = vmatpush.msra.mxu0 %v237
    %1551 = vmatpush.msra.mxu0 %v233
    %1552 = vmatpush.msra.mxu0 %v229
    %1553 = vmatpush.msra.mxu0 %v225
    %1554 = vmatpush.msra.mxu0 %v221
    %1555 = vmatpush.msra.mxu0 %v217
    %1556 = vmatpush.msra.mxu0 %v213
    %1557 = vmatpush.msra.mxu0 %v209
    %1558 = vmatpush.msra.mxu0 %v205
    %1559 = vmatpush.msra.mxu0 %v201
    %1560 = vmatpush.msra.mxu0 %v197
    %1561 = vmatpush.msra.mxu0 %v193
    %1562 = vmatpush.msra.mxu0 %v189
    %1563 = vmatpush.msra.mxu0 %v185
    %1564 = vmatmul.f32.gmra.mxu0 %v1467
    %v1565 = vpop.f32.mrf.mxu0
    %v1566 = vadd.f32 %v1546, %v1565
    %1567 = vdwg.mxu0
    %1568 = vmatpush.msra.mxu0 %v309
    %1569 = vmatpush.msra.mxu0 %v305
    %1570 = vmatpush.msra.mxu0 %v301
    %1571 = vmatpush.msra.mxu0 %v297
    %1572 = vmatpush.msra.mxu0 %v293
    %1573 = vmatpush.msra.mxu0 %v289
    %1574 = vmatpush.msra.mxu0 %v285
    %1575 = vmatpush.msra.mxu0 %v281
    %1576 = vmatpush.msra.mxu0 %v277
    %1577 = vmatpush.msra.mxu0 %v273
    %1578 = vmatpush.msra.mxu0 %v269
    %1579 = vmatpush.msra.mxu0 %v265
    %1580 = vmatpush.msra.mxu0 %v261
    %1581 = vmatpush.msra.mxu0 %v257
    %1582 = vmatpush.msra.mxu0 %v253
    %1583 = vmatpush.msra.mxu0 %v249
    %1584 = vmatmul.f32.gmra.mxu0 %v1435
    %v1585 = vpop.f32.mrf.mxu0
    %v1586 = vadd.f32 %v1566, %v1585
    %1587 = vdwg.mxu0
    %1588 = vmatpush.msra.mxu0 %v182
    %1589 = vmatpush.msra.mxu0 %v178
    %1590 = vmatpush.msra.mxu0 %v174
    %1591 = vmatpush.msra.mxu0 %v170
    %1592 = vmatpush.msra.mxu0 %v166
    %1593 = vmatpush.msra.mxu0 %v162
    %1594 = vmatpush.msra.mxu0 %v158
    %1595 = vmatpush.msra.mxu0 %v154
    %1596 = vmatpush.msra.mxu0 %v150
    %1597 = vmatpush.msra.mxu0 %v146
    %1598 = vmatpush.msra.mxu0 %v142
    %1599 = vmatpush.msra.mxu0 %v138
    %1600 = vmatpush.msra.mxu0 %v134
    %1601 = vmatpush.msra.mxu0 %v130
    %1602 = vmatpush.msra.mxu0 %v126
    %1603 = vmatpush.msra.mxu0 %v122
    %1604 = vmatmul.f32.gmra.mxu0 %v1465
    %v1605 = vpop.f32.mrf.mxu0
    %v1606 = vadd.f32 %v368, %v1605
    %1607 = vdwg.mxu0
    %1608 = vmatpush.msra.mxu0 %v246
    %1609 = vmatpush.msra.mxu0 %v242
    %1610 = vmatpush.msra.mxu0 %v238
    %1611 = vmatpush.msra.mxu0 %v234
    %1612 = vmatpush.msra.mxu0 %v230
    %1613 = vmatpush.msra.mxu0 %v226
    %1614 = vmatpush.msra.mxu0 %v222
    %1615 = vmatpush.msra.mxu0 %v218
    %1616 = vmatpush.msra.mxu0 %v214
    %1617 = vmatpush.msra.mxu0 %v210
    %1618 = vmatpush.msra.mxu0 %v206
    %1619 = vmatpush.msra.mxu0 %v202
    %1620 = vmatpush.msra.mxu0 %v198
    %1621 = vmatpush.msra.mxu0 %v194
    %1622 = vmatpush.msra.mxu0 %v190
    %1623 = vmatpush.msra.mxu0 %v186
    %1624 = vmatmul.f32.gmra.mxu0 %v1467
    %v1625 = vpop.f32.mrf.mxu0
    %v1626 = vadd.f32 %v1606, %v1625
    %1627 = vdwg.mxu0
    %1628 = vmatpush.msra.mxu0 %v310
    %1629 = vmatpush.msra.mxu0 %v306
    %1630 = vmatpush.msra.mxu0 %v302
    %1631 = vmatpush.msra.mxu0 %v298
    %1632 = vmatpush.msra.mxu0 %v294
    %1633 = vmatpush.msra.mxu0 %v290
    %1634 = vmatpush.msra.mxu0 %v286
    %1635 = vmatpush.msra.mxu0 %v282
    %1636 = vmatpush.msra.mxu0 %v278
    %1637 = vmatpush.msra.mxu0 %v274
    %1638 = vmatpush.msra.mxu0 %v270
    %1639 = vmatpush.msra.mxu0 %v266
    %1640 = vmatpush.msra.mxu0 %v262
    %1641 = vmatpush.msra.mxu0 %v258
    %1642 = vmatpush.msra.mxu0 %v254
    %1643 = vmatpush.msra.mxu0 %v250
    %1644 = vmatmul.f32.gmra.mxu0 %v1435
    %v1645 = vpop.f32.mrf.mxu0
    %v1646 = vadd.f32 %v1626, %v1645
    %1647 = vdwg.mxu0
    %1648 = vmatpush.msra.mxu0 %v183
    %1649 = vmatpush.msra.mxu0 %v179
    %1650 = vmatpush.msra.mxu0 %v175
    %1651 = vmatpush.msra.mxu0 %v171
    %1652 = vmatpush.msra.mxu0 %v167
    %1653 = vmatpush.msra.mxu0 %v163
    %1654 = vmatpush.msra.mxu0 %v159
    %1655 = vmatpush.msra.mxu0 %v155
    %1656 = vmatpush.msra.mxu0 %v151
    %1657 = vmatpush.msra.mxu0 %v147
    %1658 = vmatpush.msra.mxu0 %v143
    %1659 = vmatpush.msra.mxu0 %v139
    %1660 = vmatpush.msra.mxu0 %v135
    %1661 = vmatpush.msra.mxu0 %v131
    %1662 = vmatpush.msra.mxu0 %v127
    %1663 = vmatpush.msra.mxu0 %v123
    %1664 = vmatmul.f32.gmra.mxu0 %v1465
    %v1665 = vpop.f32.mrf.mxu0
    %v1666 = vadd.f32 %v369, %v1665
    %1667 = vdwg.mxu0
    %1668 = vmatpush.msra.mxu0 %v247
    %1669 = vmatpush.msra.mxu0 %v243
    %1670 = vmatpush.msra.mxu0 %v239
    %1671 = vmatpush.msra.mxu0 %v235
    %1672 = vmatpush.msra.mxu0 %v231
    %1673 = vmatpush.msra.mxu0 %v227
    %1674 = vmatpush.msra.mxu0 %v223
    %1675 = vmatpush.msra.mxu0 %v219
    %1676 = vmatpush.msra.mxu0 %v215
    %1677 = vmatpush.msra.mxu0 %v211
    %1678 = vmatpush.msra.mxu0 %v207
    %1679 = vmatpush.msra.mxu0 %v203
    %1680 = vmatpush.msra.mxu0 %v199
    %1681 = vmatpush.msra.mxu0 %v195
    %1682 = vmatpush.msra.mxu0 %v191
    %1683 = vmatpush.msra.mxu0 %v187
    %1684 = vmatmul.f32.gmra.mxu0 %v1467
    %v1685 = vpop.f32.mrf.mxu0
    %v1686 = vadd.f32 %v1666, %v1685
    %1687 = vdwg.mxu0
    %1688 = vmatpush.msra.mxu0 %v311
    %1689 = vmatpush.msra.mxu0 %v307
    %1690 = vmatpush.msra.mxu0 %v303
    %1691 = vmatpush.msra.mxu0 %v299
    %1692 = vmatpush.msra.mxu0 %v295
    %1693 = vmatpush.msra.mxu0 %v291
    %1694 = vmatpush.msra.mxu0 %v287
    %1695 = vmatpush.msra.mxu0 %v283
    %1696 = vmatpush.msra.mxu0 %v279
    %1697 = vmatpush.msra.mxu0 %v275
    %1698 = vmatpush.msra.mxu0 %v271
    %1699 = vmatpush.msra.mxu0 %v267
    %1700 = vmatpush.msra.mxu0 %v263
    %1701 = vmatpush.msra.mxu0 %v259
    %1702 = vmatpush.msra.mxu0 %v255
    %1703 = vmatpush.msra.mxu0 %v251
    %1704 = vmatmul.f32.gmra.mxu0 %v1435
    %v1705 = vpop.f32.mrf.mxu0
    %v1706 = vadd.f32 %v1686, %v1705
    %1707 = vdwg.mxu0
    %v1708 = vxor.u32 %v1526, 2147483648
    %v1709 = vmul.f32 %v1708, 1.442695
    %v1710 = vpow.pop %v1709
    %v1711 = vadd.f32 %v1710, 1.0
    %v1712 = vrcp.pop %v1711
    %v1713 = vmul.f32 %v1711, %v1712
    %v1714 = vsub.f32 1.0, %v1713
    %v1715 = vmul.f32 %v1712, %v1714
    %v1716 = vadd.f32 %v1712, %v1715
    %vm1717 = vweird.f32 %v1711
    %vm1718 = vweird.f32 %v1712
    %vm1719 = vmor %vm1717, %vm1718
    %v1720 = vsel %vm1719, %v1712, %v1716
    %v1721 = vand.u32 2147483647, %v1711
    %vm1722 = vcmp.eq.f32.partialorder %v1721, 8.507059e+37
    %v1723 = vand.u32 %v1711, 2147483648
    %v1724 = vor.u32 1.1754944e-38, %v1723
    %v1725 = vsel %vm1722, %v1724, %v1720
    %v1726 = vmul.f32 1.0, %v1725
    %v1727 = vxor.u32 %v1586, 2147483648
    %v1728 = vmul.f32 %v1727, 1.442695
    %v1729 = vpow.pop %v1728
    %v1730 = vadd.f32 %v1729, 1.0
    %v1731 = vrcp.pop %v1730
    %v1732 = vmul.f32 %v1730, %v1731
    %v1733 = vsub.f32 1.0, %v1732
    %v1734 = vmul.f32 %v1731, %v1733
    %v1735 = vadd.f32 %v1731, %v1734
    %vm1736 = vweird.f32 %v1730
    %vm1737 = vweird.f32 %v1731
    %vm1738 = vmor %vm1736, %vm1737
    %v1739 = vsel %vm1738, %v1731, %v1735
    %v1740 = vand.u32 2147483647, %v1730
    %vm1741 = vcmp.eq.f32.partialorder %v1740, 8.507059e+37
    %v1742 = vand.u32 %v1730, 2147483648
    %v1743 = vor.u32 1.1754944e-38, %v1742
    %v1744 = vsel %vm1741, %v1743, %v1739
    %v1745 = vmul.f32 1.0, %v1744
    %v1746 = vtanh.pop %v1646
    %v1747 = vxor.u32 %v1706, 2147483648
    %v1748 = vmul.f32 %v1747, 1.442695
    %v1749 = vpow.pop %v1748
    %v1750 = vadd.f32 %v1749, 1.0
    %v1751 = vrcp.pop %v1750
    %v1752 = vmul.f32 %v1750, %v1751
    %v1753 = vsub.f32 1.0, %v1752
    %v1754 = vmul.f32 %v1751, %v1753
    %v1755 = vadd.f32 %v1751, %v1754
    %vm1756 = vweird.f32 %v1750
    %vm1757 = vweird.f32 %v1751
    %vm1758 = vmor %vm1756, %vm1757
    %v1759 = vsel %vm1758, %v1751, %v1755
    %v1760 = vand.u32 2147483647, %v1750
    %vm1761 = vcmp.eq.f32.partialorder %v1760, 8.507059e+37
    %v1762 = vand.u32 %v1750, 2147483648
    %v1763 = vor.u32 1.1754944e-38, %v1762
    %v1764 = vsel %vm1761, %v1763, %v1759
    %v1765 = vmul.f32 1.0, %v1764
    %v1766 = vmul.f32 %v1745, %v1436
    %v1767 = vmul.f32 %v1726, %v1746
    %v1768 = vadd.f32 %v1766, %v1767
    %v1769 = vtanh.pop %v1768
    %v1770 = vmul.f32 %v1765, %v1769
    %1771 = vmatpush.msra.mxu0 %v328
    %1772 = vmatpush.msra.mxu0 %v327
    %1773 = vmatpush.msra.mxu0 %v326
    %1774 = vmatpush.msra.mxu0 %v325
    %1775 = vmatpush.msra.mxu0 %v324
    %1776 = vmatpush.msra.mxu0 %v323
    %1777 = vmatpush.msra.mxu0 %v322
    %1778 = vmatpush.msra.mxu0 %v321
    %1779 = vmatpush.msra.mxu0 %v320
    %1780 = vmatpush.msra.mxu0 %v319
    %1781 = vmatpush.msra.mxu0 %v318
    %1782 = vmatpush.msra.mxu0 %v317
    %1783 = vmatpush.msra.mxu0 %v316
    %1784 = vmatpush.msra.mxu0 %v315
    %1785 = vmatpush.msra.mxu0 %v314
    %1786 = vmatpush.msra.mxu0 %v313
    %1787 = vmatmul.f32.gmra.mxu0 %v1770
    %v1788 = vpop.f32.mrf.mxu0
    %v1789 = vadd.f32 %v329, %v1788
    %1790 = vdwg.mxu0
    %v1791 = vtanh.pop %v1789
    %1792 = vst [vmem:[#allocation2] sm:$0xff] %v1770
    %1793 = vst [vmem:[#allocation3] sm:$0xff] %v1768
    %1794 = vst [vmem:[#allocation4] sm:$0xff] %v1791
    %s1795 = scalar_lea.vmem [#allocation16], 24
    %1796 = vst [vmem:[%s1795] sm:$0xff] %v1791
    %s1797 = scalar_lea.vmem [#allocation5], 32
    %v1798 = vld [vmem:[%s1797] sm:$0xff]
    %v1799 = vld [vmem:[#allocation4] sm:$0xff]
    %v1800 = vld [vmem:[#allocation2] sm:$0xff]
    %v1801 = vld [vmem:[#allocation3] sm:$0xff]
    %1802 = vadd.xlane.f32.xlu0 %v1798
    %v1803 = vpop.xlane.xlu0 %1802
    %1804 = vadd.xlane.f32.xlu0 %v1799
    %v1805 = vpop.xlane.xlu0 %1804
    %v1806 = vadd.f32 %v1803, %v1805
    %v1807 = vmul.f32 %v1798, %v1798
    %1808 = vadd.xlane.f32.xlu0 %v1807
    %v1809 = vpop.xlane.xlu0 %1808
    %v1810 = vmul.f32 %v1799, %v1799
    %1811 = vadd.xlane.f32.xlu0 %v1810
    %v1812 = vpop.xlane.xlu0 %1811
    %v1813 = vadd.f32 %v1809, %v1812
    %v1814 = vmul.f32 %v1806, 0.015625
    %v1815 = vmul.f32 %v1813, 0.015625
    %v1816 = vmul.f32 %v1814, %v1814
    %v1817 = vsub.f32 %v1815, %v1816
    %v1818 = vadd.f32 %v1817, 1e-05
    %v1819 = vrsqrt.pop %v1818
    %v1820 = vmul.f32 %v1819, %v1818
    %v1821 = vmul.f32 %v1820, %v1819
    %v1822 = vmul.f32 0.5, %v1821
    %v1823 = vsub.f32 1.5, %v1822
    %v1824 = vmul.f32 %v1819, %v1823
    %vm1825 = vweird.f32 %v1818
    %vm1826 = vweird.f32 %v1819
    %vm1827 = vmor %vm1825, %vm1826
    %v1828 = vsel %vm1827, %v1819, %v1824
    %v1829 = vsub.f32 %v1798, %v1814
    %v1830 = vmul.f32 %v1829, %v1828
    %v1831 = vsub.f32 %v1799, %v1814
    %v1832 = vmul.f32 %v1831, %v1828
    %1833 = vmatpush.msra.mxu0 %v180
    %1834 = vmatpush.msra.mxu0 %v176
    %1835 = vmatpush.msra.mxu0 %v172
    %1836 = vmatpush.msra.mxu0 %v168
    %1837 = vmatpush.msra.mxu0 %v164
    %1838 = vmatpush.msra.mxu0 %v160
    %1839 = vmatpush.msra.mxu0 %v156
    %1840 = vmatpush.msra.mxu0 %v152
    %1841 = vmatpush.msra.mxu0 %v148
    %1842 = vmatpush.msra.mxu0 %v144
    %1843 = vmatpush.msra.mxu0 %v140
    %1844 = vmatpush.msra.mxu0 %v136
    %1845 = vmatpush.msra.mxu0 %v132
    %1846 = vmatpush.msra.mxu0 %v128
    %1847 = vmatpush.msra.mxu0 %v124
    %1848 = vmatpush.msra.mxu0 %v120
    %1849 = vmatmul.f32.gmra.mxu0 %v1830
    %v1850 = vpop.f32.mrf.mxu0
    %v1851 = vadd.f32 %v366, %v1850
    %1852 = vdwg.mxu0
    %1853 = vmatpush.msra.mxu0 %v244
    %1854 = vmatpush.msra.mxu0 %v240
    %1855 = vmatpush.msra.mxu0 %v236
    %1856 = vmatpush.msra.mxu0 %v232
    %1857 = vmatpush.msra.mxu0 %v228
    %1858 = vmatpush.msra.mxu0 %v224
    %1859 = vmatpush.msra.mxu0 %v220
    %1860 = vmatpush.msra.mxu0 %v216
    %1861 = vmatpush.msra.mxu0 %v212
    %1862 = vmatpush.msra.mxu0 %v208
    %1863 = vmatpush.msra.mxu0 %v204
    %1864 = vmatpush.msra.mxu0 %v200
    %1865 = vmatpush.msra.mxu0 %v196
    %1866 = vmatpush.msra.mxu0 %v192
    %1867 = vmatpush.msra.mxu0 %v188
    %1868 = vmatpush.msra.mxu0 %v184
    %1869 = vmatmul.f32.gmra.mxu0 %v1832
    %v1870 = vpop.f32.mrf.mxu0
    %v1871 = vadd.f32 %v1851, %v1870
    %1872 = vdwg.mxu0
    %1873 = vmatpush.msra.mxu0 %v308
    %1874 = vmatpush.msra.mxu0 %v304
    %1875 = vmatpush.msra.mxu0 %v300
    %1876 = vmatpush.msra.mxu0 %v296
    %1877 = vmatpush.msra.mxu0 %v292
    %1878 = vmatpush.msra.mxu0 %v288
    %1879 = vmatpush.msra.mxu0 %v284
    %1880 = vmatpush.msra.mxu0 %v280
    %1881 = vmatpush.msra.mxu0 %v276
    %1882 = vmatpush.msra.mxu0 %v272
    %1883 = vmatpush.msra.mxu0 %v268
    %1884 = vmatpush.msra.mxu0 %v264
    %1885 = vmatpush.msra.mxu0 %v260
    %1886 = vmatpush.msra.mxu0 %v256
    %1887 = vmatpush.msra.mxu0 %v252
    %1888 = vmatpush.msra.mxu0 %v248
    %1889 = vmatmul.f32.gmra.mxu0 %v1800
    %v1890 = vpop.f32.mrf.mxu0
    %v1891 = vadd.f32 %v1871, %v1890
    %1892 = vdwg.mxu0
    %1893 = vmatpush.msra.mxu0 %v181
    %1894 = vmatpush.msra.mxu0 %v177
    %1895 = vmatpush.msra.mxu0 %v173
    %1896 = vmatpush.msra.mxu0 %v169
    %1897 = vmatpush.msra.mxu0 %v165
    %1898 = vmatpush.msra.mxu0 %v161
    %1899 = vmatpush.msra.mxu0 %v157
    %1900 = vmatpush.msra.mxu0 %v153
    %1901 = vmatpush.msra.mxu0 %v149
    %1902 = vmatpush.msra.mxu0 %v145
    %1903 = vmatpush.msra.mxu0 %v141
    %1904 = vmatpush.msra.mxu0 %v137
    %1905 = vmatpush.msra.mxu0 %v133
    %1906 = vmatpush.msra.mxu0 %v129
    %1907 = vmatpush.msra.mxu0 %v125
    %1908 = vmatpush.msra.mxu0 %v121
    %1909 = vmatmul.f32.gmra.mxu0 %v1830
    %v1910 = vpop.f32.mrf.mxu0
    %v1911 = vadd.f32 %v367, %v1910
    %1912 = vdwg.mxu0
    %1913 = vmatpush.msra.mxu0 %v245
    %1914 = vmatpush.msra.mxu0 %v241
    %1915 = vmatpush.msra.mxu0 %v237
    %1916 = vmatpush.msra.mxu0 %v233
    %1917 = vmatpush.msra.mxu0 %v229
    %1918 = vmatpush.msra.mxu0 %v225
    %1919 = vmatpush.msra.mxu0 %v221
    %1920 = vmatpush.msra.mxu0 %v217
    %1921 = vmatpush.msra.mxu0 %v213
    %1922 = vmatpush.msra.mxu0 %v209
    %1923 = vmatpush.msra.mxu0 %v205
    %1924 = vmatpush.msra.mxu0 %v201
    %1925 = vmatpush.msra.mxu0 %v197
    %1926 = vmatpush.msra.mxu0 %v193
    %1927 = vmatpush.msra.mxu0 %v189
    %1928 = vmatpush.msra.mxu0 %v185
    %1929 = vmatmul.f32.gmra.mxu0 %v1832
    %v1930 = vpop.f32.mrf.mxu0
    %v1931 = vadd.f32 %v1911, %v1930
    %1932 = vdwg.mxu0
    %1933 = vmatpush.msra.mxu0 %v309
    %1934 = vmatpush.msra.mxu0 %v305
    %1935 = vmatpush.msra.mxu0 %v301
    %1936 = vmatpush.msra.mxu0 %v297
    %1937 = vmatpush.msra.mxu0 %v293
    %1938 = vmatpush.msra.mxu0 %v289
    %1939 = vmatpush.msra.mxu0 %v285
    %1940 = vmatpush.msra.mxu0 %v281
    %1941 = vmatpush.msra.mxu0 %v277
    %1942 = vmatpush.msra.mxu0 %v273
    %1943 = vmatpush.msra.mxu0 %v269
    %1944 = vmatpush.msra.mxu0 %v265
    %1945 = vmatpush.msra.mxu0 %v261
    %1946 = vmatpush.msra.mxu0 %v257
    %1947 = vmatpush.msra.mxu0 %v253
    %1948 = vmatpush.msra.mxu0 %v249
    %1949 = vmatmul.f32.gmra.mxu0 %v1800
    %v1950 = vpop.f32.mrf.mxu0
    %v1951 = vadd.f32 %v1931, %v1950
    %1952 = vdwg.mxu0
    %1953 = vmatpush.msra.mxu0 %v182
    %1954 = vmatpush.msra.mxu0 %v178
    %1955 = vmatpush.msra.mxu0 %v174
    %1956 = vmatpush.msra.mxu0 %v170
    %1957 = vmatpush.msra.mxu0 %v166
    %1958 = vmatpush.msra.mxu0 %v162
    %1959 = vmatpush.msra.mxu0 %v158
    %1960 = vmatpush.msra.mxu0 %v154
    %1961 = vmatpush.msra.mxu0 %v150
    %1962 = vmatpush.msra.mxu0 %v146
    %1963 = vmatpush.msra.mxu0 %v142
    %1964 = vmatpush.msra.mxu0 %v138
    %1965 = vmatpush.msra.mxu0 %v134
    %1966 = vmatpush.msra.mxu0 %v130
    %1967 = vmatpush.msra.mxu0 %v126
    %1968 = vmatpush.msra.mxu0 %v122
    %1969 = vmatmul.f32.gmra.mxu0 %v1830
    %v1970 = vpop.f32.mrf.mxu0
    %v1971 = vadd.f32 %v368, %v1970
    %1972 = vdwg.mxu0
    %1973 = vmatpush.msra.mxu0 %v246
    %1974 = vmatpush.msra.mxu0 %v242
    %1975 = vmatpush.msra.mxu0 %v238
    %1976 = vmatpush.msra.mxu0 %v234
    %1977 = vmatpush.msra.mxu0 %v230
    %1978 = vmatpush.msra.mxu0 %v226
    %1979 = vmatpush.msra.mxu0 %v222
    %1980 = vmatpush.msra.mxu0 %v218
    %1981 = vmatpush.msra.mxu0 %v214
    %1982 = vmatpush.msra.mxu0 %v210
    %1983 = vmatpush.msra.mxu0 %v206
    %1984 = vmatpush.msra.mxu0 %v202
    %1985 = vmatpush.msra.mxu0 %v198
    %1986 = vmatpush.msra.mxu0 %v194
    %1987 = vmatpush.msra.mxu0 %v190
    %1988 = vmatpush.msra.mxu0 %v186
    %1989 = vmatmul.f32.gmra.mxu0 %v1832
    %v1990 = vpop.f32.mrf.mxu0
    %v1991 = vadd.f32 %v1971, %v1990
    %1992 = vdwg.mxu0
    %1993 = vmatpush.msra.mxu0 %v310
    %1994 = vmatpush.msra.mxu0 %v306
    %1995 = vmatpush.msra.mxu0 %v302
    %1996 = vmatpush.msra.mxu0 %v298
    %1997 = vmatpush.msra.mxu0 %v294
    %1998 = vmatpush.msra.mxu0 %v290
    %1999 = vmatpush.msra.mxu0 %v286
    %2000 = vmatpush.msra.mxu0 %v282
    %2001 = vmatpush.msra.mxu0 %v278
    %2002 = vmatpush.msra.mxu0 %v274
    %2003 = vmatpush.msra.mxu0 %v270
    %2004 = vmatpush.msra.mxu0 %v266
    %2005 = vmatpush.msra.mxu0 %v262
    %2006 = vmatpush.msra.mxu0 %v258
    %2007 = vmatpush.msra.mxu0 %v254
    %2008 = vmatpush.msra.mxu0 %v250
    %2009 = vmatmul.f32.gmra.mxu0 %v1800
    %v2010 = vpop.f32.mrf.mxu0
    %v2011 = vadd.f32 %v1991, %v2010
    %2012 = vdwg.mxu0
    %2013 = vmatpush.msra.mxu0 %v183
    %2014 = vmatpush.msra.mxu0 %v179
    %2015 = vmatpush.msra.mxu0 %v175
    %2016 = vmatpush.msra.mxu0 %v171
    %2017 = vmatpush.msra.mxu0 %v167
    %2018 = vmatpush.msra.mxu0 %v163
    %2019 = vmatpush.msra.mxu0 %v159
    %2020 = vmatpush.msra.mxu0 %v155
    %2021 = vmatpush.msra.mxu0 %v151
    %2022 = vmatpush.msra.mxu0 %v147
    %2023 = vmatpush.msra.mxu0 %v143
    %2024 = vmatpush.msra.mxu0 %v139
    %2025 = vmatpush.msra.mxu0 %v135
    %2026 = vmatpush.msra.mxu0 %v131
    %2027 = vmatpush.msra.mxu0 %v127
    %2028 = vmatpush.msra.mxu0 %v123
    %2029 = vmatmul.f32.gmra.mxu0 %v1830
    %v2030 = vpop.f32.mrf.mxu0
    %v2031 = vadd.f32 %v369, %v2030
    %2032 = vdwg.mxu0
    %2033 = vmatpush.msra.mxu0 %v247
    %2034 = vmatpush.msra.mxu0 %v243
    %2035 = vmatpush.msra.mxu0 %v239
    %2036 = vmatpush.msra.mxu0 %v235
    %2037 = vmatpush.msra.mxu0 %v231
    %2038 = vmatpush.msra.mxu0 %v227
    %2039 = vmatpush.msra.mxu0 %v223
    %2040 = vmatpush.msra.mxu0 %v219
    %2041 = vmatpush.msra.mxu0 %v215
    %2042 = vmatpush.msra.mxu0 %v211
    %2043 = vmatpush.msra.mxu0 %v207
    %2044 = vmatpush.msra.mxu0 %v203
    %2045 = vmatpush.msra.mxu0 %v199
    %2046 = vmatpush.msra.mxu0 %v195
    %2047 = vmatpush.msra.mxu0 %v191
    %2048 = vmatpush.msra.mxu0 %v187
    %2049 = vmatmul.f32.gmra.mxu0 %v1832
    %v2050 = vpop.f32.mrf.mxu0
    %v2051 = vadd.f32 %v2031, %v2050
    %2052 = vdwg.mxu0
    %2053 = vmatpush.msra.mxu0 %v311
    %2054 = vmatpush.msra.mxu0 %v307
    %2055 = vmatpush.msra.mxu0 %v303
    %2056 = vmatpush.msra.mxu0 %v299
    %2057 = vmatpush.msra.mxu0 %v295
    %2058 = vmatpush.msra.mxu0 %v291
    %2059 = vmatpush.msra.mxu0 %v287
    %2060 = vmatpush.msra.mxu0 %v283
    %2061 = vmatpush.msra.mxu0 %v279
    %2062 = vmatpush.msra.mxu0 %v275
    %2063 = vmatpush.msra.mxu0 %v271
    %2064 = vmatpush.msra.mxu0 %v267
    %2065 = vmatpush.msra.mxu0 %v263
    %2066 = vmatpush.msra.mxu0 %v259
    %2067 = vmatpush.msra.mxu0 %v255
    %2068 = vmatpush.msra.mxu0 %v251
    %2069 = vmatmul.f32.gmra.mxu0 %v1800
    %v2070 = vpop.f32.mrf.mxu0
    %v2071 = vadd.f32 %v2051, %v2070
    %2072 = vdwg.mxu0
    %v2073 = vxor.u32 %v1891, 2147483648
    %v2074 = vmul.f32 %v2073, 1.442695
    %v2075 = vpow.pop %v2074
    %v2076 = vadd.f32 %v2075, 1.0
    %v2077 = vrcp.pop %v2076
    %v2078 = vmul.f32 %v2076, %v2077
    %v2079 = vsub.f32 1.0, %v2078
    %v2080 = vmul.f32 %v2077, %v2079
    %v2081 = vadd.f32 %v2077, %v2080
    %vm2082 = vweird.f32 %v2076
    %vm2083 = vweird.f32 %v2077
    %vm2084 = vmor %vm2082, %vm2083
    %v2085 = vsel %vm2084, %v2077, %v2081
    %v2086 = vand.u32 2147483647, %v2076
    %vm2087 = vcmp.eq.f32.partialorder %v2086, 8.507059e+37
    %v2088 = vand.u32 %v2076, 2147483648
    %v2089 = vor.u32 1.1754944e-38, %v2088
    %v2090 = vsel %vm2087, %v2089, %v2085
    %v2091 = vmul.f32 1.0, %v2090
    %v2092 = vxor.u32 %v1951, 2147483648
    %v2093 = vmul.f32 %v2092, 1.442695
    %v2094 = vpow.pop %v2093
    %v2095 = vadd.f32 %v2094, 1.0
    %v2096 = vrcp.pop %v2095
    %v2097 = vmul.f32 %v2095, %v2096
    %v2098 = vsub.f32 1.0, %v2097
    %v2099 = vmul.f32 %v2096, %v2098
    %v2100 = vadd.f32 %v2096, %v2099
    %vm2101 = vweird.f32 %v2095
    %vm2102 = vweird.f32 %v2096
    %vm2103 = vmor %vm2101, %vm2102
    %v2104 = vsel %vm2103, %v2096, %v2100
    %v2105 = vand.u32 2147483647, %v2095
    %vm2106 = vcmp.eq.f32.partialorder %v2105, 8.507059e+37
    %v2107 = vand.u32 %v2095, 2147483648
    %v2108 = vor.u32 1.1754944e-38, %v2107
    %v2109 = vsel %vm2106, %v2108, %v2104
    %v2110 = vmul.f32 1.0, %v2109
    %v2111 = vtanh.pop %v2011
    %v2112 = vxor.u32 %v2071, 2147483648
    %v2113 = vmul.f32 %v2112, 1.442695
    %v2114 = vpow.pop %v2113
    %v2115 = vadd.f32 %v2114, 1.0
    %v2116 = vrcp.pop %v2115
    %v2117 = vmul.f32 %v2115, %v2116
    %v2118 = vsub.f32 1.0, %v2117
    %v2119 = vmul.f32 %v2116, %v2118
    %v2120 = vadd.f32 %v2116, %v2119
    %vm2121 = vweird.f32 %v2115
    %vm2122 = vweird.f32 %v2116
    %vm2123 = vmor %vm2121, %vm2122
    %v2124 = vsel %vm2123, %v2116, %v2120
    %v2125 = vand.u32 2147483647, %v2115
    %vm2126 = vcmp.eq.f32.partialorder %v2125, 8.507059e+37
    %v2127 = vand.u32 %v2115, 2147483648
    %v2128 = vor.u32 1.1754944e-38, %v2127
    %v2129 = vsel %vm2126, %v2128, %v2124
    %v2130 = vmul.f32 1.0, %v2129
    %v2131 = vmul.f32 %v2110, %v1801
    %v2132 = vmul.f32 %v2091, %v2111
    %v2133 = vadd.f32 %v2131, %v2132
    %v2134 = vtanh.pop %v2133
    %v2135 = vmul.f32 %v2130, %v2134
    %2136 = vmatpush.msra.mxu0 %v328
    %2137 = vmatpush.msra.mxu0 %v327
    %2138 = vmatpush.msra.mxu0 %v326
    %2139 = vmatpush.msra.mxu0 %v325
    %2140 = vmatpush.msra.mxu0 %v324
    %2141 = vmatpush.msra.mxu0 %v323
    %2142 = vmatpush.msra.mxu0 %v322
    %2143 = vmatpush.msra.mxu0 %v321
    %2144 = vmatpush.msra.mxu0 %v320
    %2145 = vmatpush.msra.mxu0 %v319
    %2146 = vmatpush.msra.mxu0 %v318
    %2147 = vmatpush.msra.mxu0 %v317
    %2148 = vmatpush.msra.mxu0 %v316
    %2149 = vmatpush.msra.mxu0 %v315
    %2150 = vmatpush.msra.mxu0 %v314
    %2151 = vmatpush.msra.mxu0 %v313
    %2152 = vmatmul.f32.gmra.mxu0 %v2135
    %v2153 = vpop.f32.mrf.mxu0
    %v2154 = vadd.f32 %v329, %v2153
    %2155 = vdwg.mxu0
    %v2156 = vtanh.pop %v2154
    %2157 = vst [vmem:[#allocation2] sm:$0xff] %v2135
    %2158 = vst [vmem:[#allocation3] sm:$0xff] %v2133
    %2159 = vst [vmem:[#allocation4] sm:$0xff] %v2156
    %s2160 = scalar_lea.vmem [#allocation16], 32
    %2161 = vst [vmem:[%s2160] sm:$0xff] %v2156
    %s2162 = scalar_lea.vmem [#allocation5], 40
    %v2163 = vld [vmem:[%s2162] sm:$0xff]
    %v2164 = vld [vmem:[#allocation4] sm:$0xff]
    %v2165 = vld [vmem:[#allocation2] sm:$0xff]
    %v2166 = vld [vmem:[#allocation3] sm:$0xff]
    %2167 = vadd.xlane.f32.xlu0 %v2163
    %v2168 = vpop.xlane.xlu0 %2167
    %2169 = vadd.xlane.f32.xlu0 %v2164
    %v2170 = vpop.xlane.xlu0 %2169
    %v2171 = vadd.f32 %v2168, %v2170
    %v2172 = vmul.f32 %v2163, %v2163
    %2173 = vadd.xlane.f32.xlu0 %v2172
    %v2174 = vpop.xlane.xlu0 %2173
    %v2175 = vmul.f32 %v2164, %v2164
    %2176 = vadd.xlane.f32.xlu0 %v2175
    %v2177 = vpop.xlane.xlu0 %2176
    %v2178 = vadd.f32 %v2174, %v2177
    %v2179 = vmul.f32 %v2171, 0.015625
    %v2180 = vmul.f32 %v2178, 0.015625
    %v2181 = vmul.f32 %v2179, %v2179
    %v2182 = vsub.f32 %v2180, %v2181
    %v2183 = vadd.f32 %v2182, 1e-05
    %v2184 = vrsqrt.pop %v2183
    %v2185 = vmul.f32 %v2184, %v2183
    %v2186 = vmul.f32 %v2185, %v2184
    %v2187 = vmul.f32 0.5, %v2186
    %v2188 = vsub.f32 1.5, %v2187
    %v2189 = vmul.f32 %v2184, %v2188
    %vm2190 = vweird.f32 %v2183
    %vm2191 = vweird.f32 %v2184
    %vm2192 = vmor %vm2190, %vm2191
    %v2193 = vsel %vm2192, %v2184, %v2189
    %v2194 = vsub.f32 %v2163, %v2179
    %v2195 = vmul.f32 %v2194, %v2193
    %v2196 = vsub.f32 %v2164, %v2179
    %v2197 = vmul.f32 %v2196, %v2193
    %2198 = vmatpush.msra.mxu0 %v180
    %2199 = vmatpush.msra.mxu0 %v176
    %2200 = vmatpush.msra.mxu0 %v172
    %2201 = vmatpush.msra.mxu0 %v168
    %2202 = vmatpush.msra.mxu0 %v164
    %2203 = vmatpush.msra.mxu0 %v160
    %2204 = vmatpush.msra.mxu0 %v156
    %2205 = vmatpush.msra.mxu0 %v152
    %2206 = vmatpush.msra.mxu0 %v148
    %2207 = vmatpush.msra.mxu0 %v144
    %2208 = vmatpush.msra.mxu0 %v140
    %2209 = vmatpush.msra.mxu0 %v136
    %2210 = vmatpush.msra.mxu0 %v132
    %2211 = vmatpush.msra.mxu0 %v128
    %2212 = vmatpush.msra.mxu0 %v124
    %2213 = vmatpush.msra.mxu0 %v120
    %2214 = vmatmul.f32.gmra.mxu0 %v2195
    %v2215 = vpop.f32.mrf.mxu0
    %v2216 = vadd.f32 %v366, %v2215
    %2217 = vdwg.mxu0
    %2218 = vmatpush.msra.mxu0 %v244
    %2219 = vmatpush.msra.mxu0 %v240
    %2220 = vmatpush.msra.mxu0 %v236
    %2221 = vmatpush.msra.mxu0 %v232
    %2222 = vmatpush.msra.mxu0 %v228
    %2223 = vmatpush.msra.mxu0 %v224
    %2224 = vmatpush.msra.mxu0 %v220
    %2225 = vmatpush.msra.mxu0 %v216
    %2226 = vmatpush.msra.mxu0 %v212
    %2227 = vmatpush.msra.mxu0 %v208
    %2228 = vmatpush.msra.mxu0 %v204
    %2229 = vmatpush.msra.mxu0 %v200
    %2230 = vmatpush.msra.mxu0 %v196
    %2231 = vmatpush.msra.mxu0 %v192
    %2232 = vmatpush.msra.mxu0 %v188
    %2233 = vmatpush.msra.mxu0 %v184
    %2234 = vmatmul.f32.gmra.mxu0 %v2197
    %v2235 = vpop.f32.mrf.mxu0
    %v2236 = vadd.f32 %v2216, %v2235
    %2237 = vdwg.mxu0
    %2238 = vmatpush.msra.mxu0 %v308
    %2239 = vmatpush.msra.mxu0 %v304
    %2240 = vmatpush.msra.mxu0 %v300
    %2241 = vmatpush.msra.mxu0 %v296
    %2242 = vmatpush.msra.mxu0 %v292
    %2243 = vmatpush.msra.mxu0 %v288
    %2244 = vmatpush.msra.mxu0 %v284
    %2245 = vmatpush.msra.mxu0 %v280
    %2246 = vmatpush.msra.mxu0 %v276
    %2247 = vmatpush.msra.mxu0 %v272
    %2248 = vmatpush.msra.mxu0 %v268
    %2249 = vmatpush.msra.mxu0 %v264
    %2250 = vmatpush.msra.mxu0 %v260
    %2251 = vmatpush.msra.mxu0 %v256
    %2252 = vmatpush.msra.mxu0 %v252
    %2253 = vmatpush.msra.mxu0 %v248
    %2254 = vmatmul.f32.gmra.mxu0 %v2165
    %v2255 = vpop.f32.mrf.mxu0
    %v2256 = vadd.f32 %v2236, %v2255
    %2257 = vdwg.mxu0
    %2258 = vmatpush.msra.mxu0 %v181
    %2259 = vmatpush.msra.mxu0 %v177
    %2260 = vmatpush.msra.mxu0 %v173
    %2261 = vmatpush.msra.mxu0 %v169
    %2262 = vmatpush.msra.mxu0 %v165
    %2263 = vmatpush.msra.mxu0 %v161
    %2264 = vmatpush.msra.mxu0 %v157
    %2265 = vmatpush.msra.mxu0 %v153
    %2266 = vmatpush.msra.mxu0 %v149
    %2267 = vmatpush.msra.mxu0 %v145
    %2268 = vmatpush.msra.mxu0 %v141
    %2269 = vmatpush.msra.mxu0 %v137
    %2270 = vmatpush.msra.mxu0 %v133
    %2271 = vmatpush.msra.mxu0 %v129
    %2272 = vmatpush.msra.mxu0 %v125
    %2273 = vmatpush.msra.mxu0 %v121
    %2274 = vmatmul.f32.gmra.mxu0 %v2195
    %v2275 = vpop.f32.mrf.mxu0
    %v2276 = vadd.f32 %v367, %v2275
    %2277 = vdwg.mxu0
    %2278 = vmatpush.msra.mxu0 %v245
    %2279 = vmatpush.msra.mxu0 %v241
    %2280 = vmatpush.msra.mxu0 %v237
    %2281 = vmatpush.msra.mxu0 %v233
    %2282 = vmatpush.msra.mxu0 %v229
    %2283 = vmatpush.msra.mxu0 %v225
    %2284 = vmatpush.msra.mxu0 %v221
    %2285 = vmatpush.msra.mxu0 %v217
    %2286 = vmatpush.msra.mxu0 %v213
    %2287 = vmatpush.msra.mxu0 %v209
    %2288 = vmatpush.msra.mxu0 %v205
    %2289 = vmatpush.msra.mxu0 %v201
    %2290 = vmatpush.msra.mxu0 %v197
    %2291 = vmatpush.msra.mxu0 %v193
    %2292 = vmatpush.msra.mxu0 %v189
    %2293 = vmatpush.msra.mxu0 %v185
    %2294 = vmatmul.f32.gmra.mxu0 %v2197
    %v2295 = vpop.f32.mrf.mxu0
    %v2296 = vadd.f32 %v2276, %v2295
    %2297 = vdwg.mxu0
    %2298 = vmatpush.msra.mxu0 %v309
    %2299 = vmatpush.msra.mxu0 %v305
    %2300 = vmatpush.msra.mxu0 %v301
    %2301 = vmatpush.msra.mxu0 %v297
    %2302 = vmatpush.msra.mxu0 %v293
    %2303 = vmatpush.msra.mxu0 %v289
    %2304 = vmatpush.msra.mxu0 %v285
    %2305 = vmatpush.msra.mxu0 %v281
    %2306 = vmatpush.msra.mxu0 %v277
    %2307 = vmatpush.msra.mxu0 %v273
    %2308 = vmatpush.msra.mxu0 %v269
    %2309 = vmatpush.msra.mxu0 %v265
    %2310 = vmatpush.msra.mxu0 %v261
    %2311 = vmatpush.msra.mxu0 %v257
    %2312 = vmatpush.msra.mxu0 %v253
    %2313 = vmatpush.msra.mxu0 %v249
    %2314 = vmatmul.f32.gmra.mxu0 %v2165
    %v2315 = vpop.f32.mrf.mxu0
    %v2316 = vadd.f32 %v2296, %v2315
    %2317 = vdwg.mxu0
    %2318 = vmatpush.msra.mxu0 %v182
    %2319 = vmatpush.msra.mxu0 %v178
    %2320 = vmatpush.msra.mxu0 %v174
    %2321 = vmatpush.msra.mxu0 %v170
    %2322 = vmatpush.msra.mxu0 %v166
    %2323 = vmatpush.msra.mxu0 %v162
    %2324 = vmatpush.msra.mxu0 %v158
    %2325 = vmatpush.msra.mxu0 %v154
    %2326 = vmatpush.msra.mxu0 %v150
    %2327 = vmatpush.msra.mxu0 %v146
    %2328 = vmatpush.msra.mxu0 %v142
    %2329 = vmatpush.msra.mxu0 %v138
    %2330 = vmatpush.msra.mxu0 %v134
    %2331 = vmatpush.msra.mxu0 %v130
    %2332 = vmatpush.msra.mxu0 %v126
    %2333 = vmatpush.msra.mxu0 %v122
    %2334 = vmatmul.f32.gmra.mxu0 %v2195
    %v2335 = vpop.f32.mrf.mxu0
    %v2336 = vadd.f32 %v368, %v2335
    %2337 = vdwg.mxu0
    %2338 = vmatpush.msra.mxu0 %v246
    %2339 = vmatpush.msra.mxu0 %v242
    %2340 = vmatpush.msra.mxu0 %v238
    %2341 = vmatpush.msra.mxu0 %v234
    %2342 = vmatpush.msra.mxu0 %v230
    %2343 = vmatpush.msra.mxu0 %v226
    %2344 = vmatpush.msra.mxu0 %v222
    %2345 = vmatpush.msra.mxu0 %v218
    %2346 = vmatpush.msra.mxu0 %v214
    %2347 = vmatpush.msra.mxu0 %v210
    %2348 = vmatpush.msra.mxu0 %v206
    %2349 = vmatpush.msra.mxu0 %v202
    %2350 = vmatpush.msra.mxu0 %v198
    %2351 = vmatpush.msra.mxu0 %v194
    %2352 = vmatpush.msra.mxu0 %v190
    %2353 = vmatpush.msra.mxu0 %v186
    %2354 = vmatmul.f32.gmra.mxu0 %v2197
    %v2355 = vpop.f32.mrf.mxu0
    %v2356 = vadd.f32 %v2336, %v2355
    %2357 = vdwg.mxu0
    %2358 = vmatpush.msra.mxu0 %v310
    %2359 = vmatpush.msra.mxu0 %v306
    %2360 = vmatpush.msra.mxu0 %v302
    %2361 = vmatpush.msra.mxu0 %v298
    %2362 = vmatpush.msra.mxu0 %v294
    %2363 = vmatpush.msra.mxu0 %v290
    %2364 = vmatpush.msra.mxu0 %v286
    %2365 = vmatpush.msra.mxu0 %v282
    %2366 = vmatpush.msra.mxu0 %v278
    %2367 = vmatpush.msra.mxu0 %v274
    %2368 = vmatpush.msra.mxu0 %v270
    %2369 = vmatpush.msra.mxu0 %v266
    %2370 = vmatpush.msra.mxu0 %v262
    %2371 = vmatpush.msra.mxu0 %v258
    %2372 = vmatpush.msra.mxu0 %v254
    %2373 = vmatpush.msra.mxu0 %v250
    %2374 = vmatmul.f32.gmra.mxu0 %v2165
    %v2375 = vpop.f32.mrf.mxu0
    %v2376 = vadd.f32 %v2356, %v2375
    %2377 = vdwg.mxu0
    %2378 = vmatpush.msra.mxu0 %v183
    %2379 = vmatpush.msra.mxu0 %v179
    %2380 = vmatpush.msra.mxu0 %v175
    %2381 = vmatpush.msra.mxu0 %v171
    %2382 = vmatpush.msra.mxu0 %v167
    %2383 = vmatpush.msra.mxu0 %v163
    %2384 = vmatpush.msra.mxu0 %v159
    %2385 = vmatpush.msra.mxu0 %v155
    %2386 = vmatpush.msra.mxu0 %v151
    %2387 = vmatpush.msra.mxu0 %v147
    %2388 = vmatpush.msra.mxu0 %v143
    %2389 = vmatpush.msra.mxu0 %v139
    %2390 = vmatpush.msra.mxu0 %v135
    %2391 = vmatpush.msra.mxu0 %v131
    %2392 = vmatpush.msra.mxu0 %v127
    %2393 = vmatpush.msra.mxu0 %v123
    %2394 = vmatmul.f32.gmra.mxu0 %v2195
    %v2395 = vpop.f32.mrf.mxu0
    %v2396 = vadd.f32 %v369, %v2395
    %2397 = vdwg.mxu0
    %2398 = vmatpush.msra.mxu0 %v247
    %2399 = vmatpush.msra.mxu0 %v243
    %2400 = vmatpush.msra.mxu0 %v239
    %2401 = vmatpush.msra.mxu0 %v235
    %2402 = vmatpush.msra.mxu0 %v231
    %2403 = vmatpush.msra.mxu0 %v227
    %2404 = vmatpush.msra.mxu0 %v223
    %2405 = vmatpush.msra.mxu0 %v219
    %2406 = vmatpush.msra.mxu0 %v215
    %2407 = vmatpush.msra.mxu0 %v211
    %2408 = vmatpush.msra.mxu0 %v207
    %2409 = vmatpush.msra.mxu0 %v203
    %2410 = vmatpush.msra.mxu0 %v199
    %2411 = vmatpush.msra.mxu0 %v195
    %2412 = vmatpush.msra.mxu0 %v191
    %2413 = vmatpush.msra.mxu0 %v187
    %2414 = vmatmul.f32.gmra.mxu0 %v2197
    %v2415 = vpop.f32.mrf.mxu0
    %v2416 = vadd.f32 %v2396, %v2415
    %2417 = vdwg.mxu0
    %2418 = vmatpush.msra.mxu0 %v311
    %2419 = vmatpush.msra.mxu0 %v307
    %2420 = vmatpush.msra.mxu0 %v303
    %2421 = vmatpush.msra.mxu0 %v299
    %2422 = vmatpush.msra.mxu0 %v295
    %2423 = vmatpush.msra.mxu0 %v291
    %2424 = vmatpush.msra.mxu0 %v287
    %2425 = vmatpush.msra.mxu0 %v283
    %2426 = vmatpush.msra.mxu0 %v279
    %2427 = vmatpush.msra.mxu0 %v275
    %2428 = vmatpush.msra.mxu0 %v271
    %2429 = vmatpush.msra.mxu0 %v267
    %2430 = vmatpush.msra.mxu0 %v263
    %2431 = vmatpush.msra.mxu0 %v259
    %2432 = vmatpush.msra.mxu0 %v255
    %2433 = vmatpush.msra.mxu0 %v251
    %2434 = vmatmul.f32.gmra.mxu0 %v2165
    %v2435 = vpop.f32.mrf.mxu0
    %v2436 = vadd.f32 %v2416, %v2435
    %2437 = vdwg.mxu0
    %v2438 = vxor.u32 %v2256, 2147483648
    %v2439 = vmul.f32 %v2438, 1.442695
    %v2440 = vpow.pop %v2439
    %v2441 = vadd.f32 %v2440, 1.0
    %v2442 = vrcp.pop %v2441
    %v2443 = vmul.f32 %v2441, %v2442
    %v2444 = vsub.f32 1.0, %v2443
    %v2445 = vmul.f32 %v2442, %v2444
    %v2446 = vadd.f32 %v2442, %v2445
    %vm2447 = vweird.f32 %v2441
    %vm2448 = vweird.f32 %v2442
    %vm2449 = vmor %vm2447, %vm2448
    %v2450 = vsel %vm2449, %v2442, %v2446
    %v2451 = vand.u32 2147483647, %v2441
    %vm2452 = vcmp.eq.f32.partialorder %v2451, 8.507059e+37
    %v2453 = vand.u32 %v2441, 2147483648
    %v2454 = vor.u32 1.1754944e-38, %v2453
    %v2455 = vsel %vm2452, %v2454, %v2450
    %v2456 = vmul.f32 1.0, %v2455
    %v2457 = vxor.u32 %v2316, 2147483648
    %v2458 = vmul.f32 %v2457, 1.442695
    %v2459 = vpow.pop %v2458
    %v2460 = vadd.f32 %v2459, 1.0
    %v2461 = vrcp.pop %v2460
    %v2462 = vmul.f32 %v2460, %v2461
    %v2463 = vsub.f32 1.0, %v2462
    %v2464 = vmul.f32 %v2461, %v2463
    %v2465 = vadd.f32 %v2461, %v2464
    %vm2466 = vweird.f32 %v2460
    %vm2467 = vweird.f32 %v2461
    %vm2468 = vmor %vm2466, %vm2467
    %v2469 = vsel %vm2468, %v2461, %v2465
    %v2470 = vand.u32 2147483647, %v2460
    %vm2471 = vcmp.eq.f32.partialorder %v2470, 8.507059e+37
    %v2472 = vand.u32 %v2460, 2147483648
    %v2473 = vor.u32 1.1754944e-38, %v2472
    %v2474 = vsel %vm2471, %v2473, %v2469
    %v2475 = vmul.f32 1.0, %v2474
    %v2476 = vtanh.pop %v2376
    %v2477 = vxor.u32 %v2436, 2147483648
    %v2478 = vmul.f32 %v2477, 1.442695
    %v2479 = vpow.pop %v2478
    %v2480 = vadd.f32 %v2479, 1.0
    %v2481 = vrcp.pop %v2480
    %v2482 = vmul.f32 %v2480, %v2481
    %v2483 = vsub.f32 1.0, %v2482
    %v2484 = vmul.f32 %v2481, %v2483
    %v2485 = vadd.f32 %v2481, %v2484
    %vm2486 = vweird.f32 %v2480
    %vm2487 = vweird.f32 %v2481
    %vm2488 = vmor %vm2486, %vm2487
    %v2489 = vsel %vm2488, %v2481, %v2485
    %v2490 = vand.u32 2147483647, %v2480
    %vm2491 = vcmp.eq.f32.partialorder %v2490, 8.507059e+37
    %v2492 = vand.u32 %v2480, 2147483648
    %v2493 = vor.u32 1.1754944e-38, %v2492
    %v2494 = vsel %vm2491, %v2493, %v2489
    %v2495 = vmul.f32 1.0, %v2494
    %v2496 = vmul.f32 %v2475, %v2166
    %v2497 = vmul.f32 %v2456, %v2476
    %v2498 = vadd.f32 %v2496, %v2497
    %v2499 = vtanh.pop %v2498
    %v2500 = vmul.f32 %v2495, %v2499
    %2501 = vmatpush.msra.mxu0 %v328
    %2502 = vmatpush.msra.mxu0 %v327
    %2503 = vmatpush.msra.mxu0 %v326
    %2504 = vmatpush.msra.mxu0 %v325
    %2505 = vmatpush.msra.mxu0 %v324
    %2506 = vmatpush.msra.mxu0 %v323
    %2507 = vmatpush.msra.mxu0 %v322
    %2508 = vmatpush.msra.mxu0 %v321
    %2509 = vmatpush.msra.mxu0 %v320
    %2510 = vmatpush.msra.mxu0 %v319
    %2511 = vmatpush.msra.mxu0 %v318
    %2512 = vmatpush.msra.mxu0 %v317
    %2513 = vmatpush.msra.mxu0 %v316
    %2514 = vmatpush.msra.mxu0 %v315
    %2515 = vmatpush.msra.mxu0 %v314
    %2516 = vmatpush.msra.mxu0 %v313
    %2517 = vmatmul.f32.gmra.mxu0 %v2500
    %v2518 = vpop.f32.mrf.mxu0
    %v2519 = vadd.f32 %v329, %v2518
    %2520 = vdwg.mxu0
    %v2521 = vtanh.pop %v2519
    %2522 = vst [vmem:[#allocation2] sm:$0xff] %v2500
    %2523 = vst [vmem:[#allocation3] sm:$0xff] %v2498
    %2524 = vst [vmem:[#allocation4] sm:$0xff] %v2521
    %s2525 = scalar_lea.vmem [#allocation16], 40
    %2526 = vst [vmem:[%s2525] sm:$0xff] %v2521
    %s2527 = scalar_lea.vmem [#allocation5], 48
    %v2528 = vld [vmem:[%s2527] sm:$0xff]
    %v2529 = vld [vmem:[#allocation4] sm:$0xff]
    %v2530 = vld [vmem:[#allocation2] sm:$0xff]
    %v2531 = vld [vmem:[#allocation3] sm:$0xff]
    %2532 = vadd.xlane.f32.xlu0 %v2528
    %v2533 = vpop.xlane.xlu0 %2532
    %2534 = vadd.xlane.f32.xlu0 %v2529
    %v2535 = vpop.xlane.xlu0 %2534
    %v2536 = vadd.f32 %v2533, %v2535
    %v2537 = vmul.f32 %v2528, %v2528
    %2538 = vadd.xlane.f32.xlu0 %v2537
    %v2539 = vpop.xlane.xlu0 %2538
    %v2540 = vmul.f32 %v2529, %v2529
    %2541 = vadd.xlane.f32.xlu0 %v2540
    %v2542 = vpop.xlane.xlu0 %2541
    %v2543 = vadd.f32 %v2539, %v2542
    %v2544 = vmul.f32 %v2536, 0.015625
    %v2545 = vmul.f32 %v2543, 0.015625
    %v2546 = vmul.f32 %v2544, %v2544
    %v2547 = vsub.f32 %v2545, %v2546
    %v2548 = vadd.f32 %v2547, 1e-05
    %v2549 = vrsqrt.pop %v2548
    %v2550 = vmul.f32 %v2549, %v2548
    %v2551 = vmul.f32 %v2550, %v2549
    %v2552 = vmul.f32 0.5, %v2551
    %v2553 = vsub.f32 1.5, %v2552
    %v2554 = vmul.f32 %v2549, %v2553
    %vm2555 = vweird.f32 %v2548
    %vm2556 = vweird.f32 %v2549
    %vm2557 = vmor %vm2555, %vm2556
    %v2558 = vsel %vm2557, %v2549, %v2554
    %v2559 = vsub.f32 %v2528, %v2544
    %v2560 = vmul.f32 %v2559, %v2558
    %v2561 = vsub.f32 %v2529, %v2544
    %v2562 = vmul.f32 %v2561, %v2558
    %2563 = vmatpush.msra.mxu0 %v180
    %2564 = vmatpush.msra.mxu0 %v176
    %2565 = vmatpush.msra.mxu0 %v172
    %2566 = vmatpush.msra.mxu0 %v168
    %2567 = vmatpush.msra.mxu0 %v164
    %2568 = vmatpush.msra.mxu0 %v160
    %2569 = vmatpush.msra.mxu0 %v156
    %2570 = vmatpush.msra.mxu0 %v152
    %2571 = vmatpush.msra.mxu0 %v148
    %2572 = vmatpush.msra.mxu0 %v144
    %2573 = vmatpush.msra.mxu0 %v140
    %2574 = vmatpush.msra.mxu0 %v136
    %2575 = vmatpush.msra.mxu0 %v132
    %2576 = vmatpush.msra.mxu0 %v128
    %2577 = vmatpush.msra.mxu0 %v124
    %2578 = vmatpush.msra.mxu0 %v120
    %2579 = vmatmul.f32.gmra.mxu0 %v2560
    %v2580 = vpop.f32.mrf.mxu0
    %v2581 = vadd.f32 %v366, %v2580
    %2582 = vdwg.mxu0
    %2583 = vmatpush.msra.mxu0 %v244
    %2584 = vmatpush.msra.mxu0 %v240
    %2585 = vmatpush.msra.mxu0 %v236
    %2586 = vmatpush.msra.mxu0 %v232
    %2587 = vmatpush.msra.mxu0 %v228
    %2588 = vmatpush.msra.mxu0 %v224
    %2589 = vmatpush.msra.mxu0 %v220
    %2590 = vmatpush.msra.mxu0 %v216
    %2591 = vmatpush.msra.mxu0 %v212
    %2592 = vmatpush.msra.mxu0 %v208
    %2593 = vmatpush.msra.mxu0 %v204
    %2594 = vmatpush.msra.mxu0 %v200
    %2595 = vmatpush.msra.mxu0 %v196
    %2596 = vmatpush.msra.mxu0 %v192
    %2597 = vmatpush.msra.mxu0 %v188
    %2598 = vmatpush.msra.mxu0 %v184
    %2599 = vmatmul.f32.gmra.mxu0 %v2562
    %v2600 = vpop.f32.mrf.mxu0
    %v2601 = vadd.f32 %v2581, %v2600
    %2602 = vdwg.mxu0
    %2603 = vmatpush.msra.mxu0 %v308
    %2604 = vmatpush.msra.mxu0 %v304
    %2605 = vmatpush.msra.mxu0 %v300
    %2606 = vmatpush.msra.mxu0 %v296
    %2607 = vmatpush.msra.mxu0 %v292
    %2608 = vmatpush.msra.mxu0 %v288
    %2609 = vmatpush.msra.mxu0 %v284
    %2610 = vmatpush.msra.mxu0 %v280
    %2611 = vmatpush.msra.mxu0 %v276
    %2612 = vmatpush.msra.mxu0 %v272
    %2613 = vmatpush.msra.mxu0 %v268
    %2614 = vmatpush.msra.mxu0 %v264
    %2615 = vmatpush.msra.mxu0 %v260
    %2616 = vmatpush.msra.mxu0 %v256
    %2617 = vmatpush.msra.mxu0 %v252
    %2618 = vmatpush.msra.mxu0 %v248
    %2619 = vmatmul.f32.gmra.mxu0 %v2530
    %v2620 = vpop.f32.mrf.mxu0
    %v2621 = vadd.f32 %v2601, %v2620
    %2622 = vdwg.mxu0
    %2623 = vmatpush.msra.mxu0 %v181
    %2624 = vmatpush.msra.mxu0 %v177
    %2625 = vmatpush.msra.mxu0 %v173
    %2626 = vmatpush.msra.mxu0 %v169
    %2627 = vmatpush.msra.mxu0 %v165
    %2628 = vmatpush.msra.mxu0 %v161
    %2629 = vmatpush.msra.mxu0 %v157
    %2630 = vmatpush.msra.mxu0 %v153
    %2631 = vmatpush.msra.mxu0 %v149
    %2632 = vmatpush.msra.mxu0 %v145
    %2633 = vmatpush.msra.mxu0 %v141
    %2634 = vmatpush.msra.mxu0 %v137
    %2635 = vmatpush.msra.mxu0 %v133
    %2636 = vmatpush.msra.mxu0 %v129
    %2637 = vmatpush.msra.mxu0 %v125
    %2638 = vmatpush.msra.mxu0 %v121
    %2639 = vmatmul.f32.gmra.mxu0 %v2560
    %v2640 = vpop.f32.mrf.mxu0
    %v2641 = vadd.f32 %v367, %v2640
    %2642 = vdwg.mxu0
    %2643 = vmatpush.msra.mxu0 %v245
    %2644 = vmatpush.msra.mxu0 %v241
    %2645 = vmatpush.msra.mxu0 %v237
    %2646 = vmatpush.msra.mxu0 %v233
    %2647 = vmatpush.msra.mxu0 %v229
    %2648 = vmatpush.msra.mxu0 %v225
    %2649 = vmatpush.msra.mxu0 %v221
    %2650 = vmatpush.msra.mxu0 %v217
    %2651 = vmatpush.msra.mxu0 %v213
    %2652 = vmatpush.msra.mxu0 %v209
    %2653 = vmatpush.msra.mxu0 %v205
    %2654 = vmatpush.msra.mxu0 %v201
    %2655 = vmatpush.msra.mxu0 %v197
    %2656 = vmatpush.msra.mxu0 %v193
    %2657 = vmatpush.msra.mxu0 %v189
    %2658 = vmatpush.msra.mxu0 %v185
    %2659 = vmatmul.f32.gmra.mxu0 %v2562
    %v2660 = vpop.f32.mrf.mxu0
    %v2661 = vadd.f32 %v2641, %v2660
    %2662 = vdwg.mxu0
    %2663 = vmatpush.msra.mxu0 %v309
    %2664 = vmatpush.msra.mxu0 %v305
    %2665 = vmatpush.msra.mxu0 %v301
    %2666 = vmatpush.msra.mxu0 %v297
    %2667 = vmatpush.msra.mxu0 %v293
    %2668 = vmatpush.msra.mxu0 %v289
    %2669 = vmatpush.msra.mxu0 %v285
    %2670 = vmatpush.msra.mxu0 %v281
    %2671 = vmatpush.msra.mxu0 %v277
    %2672 = vmatpush.msra.mxu0 %v273
    %2673 = vmatpush.msra.mxu0 %v269
    %2674 = vmatpush.msra.mxu0 %v265
    %2675 = vmatpush.msra.mxu0 %v261
    %2676 = vmatpush.msra.mxu0 %v257
    %2677 = vmatpush.msra.mxu0 %v253
    %2678 = vmatpush.msra.mxu0 %v249
    %2679 = vmatmul.f32.gmra.mxu0 %v2530
    %v2680 = vpop.f32.mrf.mxu0
    %v2681 = vadd.f32 %v2661, %v2680
    %2682 = vdwg.mxu0
    %2683 = vmatpush.msra.mxu0 %v182
    %2684 = vmatpush.msra.mxu0 %v178
    %2685 = vmatpush.msra.mxu0 %v174
    %2686 = vmatpush.msra.mxu0 %v170
    %2687 = vmatpush.msra.mxu0 %v166
    %2688 = vmatpush.msra.mxu0 %v162
    %2689 = vmatpush.msra.mxu0 %v158
    %2690 = vmatpush.msra.mxu0 %v154
    %2691 = vmatpush.msra.mxu0 %v150
    %2692 = vmatpush.msra.mxu0 %v146
    %2693 = vmatpush.msra.mxu0 %v142
    %2694 = vmatpush.msra.mxu0 %v138
    %2695 = vmatpush.msra.mxu0 %v134
    %2696 = vmatpush.msra.mxu0 %v130
    %2697 = vmatpush.msra.mxu0 %v126
    %2698 = vmatpush.msra.mxu0 %v122
    %2699 = vmatmul.f32.gmra.mxu0 %v2560
    %v2700 = vpop.f32.mrf.mxu0
    %v2701 = vadd.f32 %v368, %v2700
    %2702 = vdwg.mxu0
    %2703 = vmatpush.msra.mxu0 %v246
    %2704 = vmatpush.msra.mxu0 %v242
    %2705 = vmatpush.msra.mxu0 %v238
    %2706 = vmatpush.msra.mxu0 %v234
    %2707 = vmatpush.msra.mxu0 %v230
    %2708 = vmatpush.msra.mxu0 %v226
    %2709 = vmatpush.msra.mxu0 %v222
    %2710 = vmatpush.msra.mxu0 %v218
    %2711 = vmatpush.msra.mxu0 %v214
    %2712 = vmatpush.msra.mxu0 %v210
    %2713 = vmatpush.msra.mxu0 %v206
    %2714 = vmatpush.msra.mxu0 %v202
    %2715 = vmatpush.msra.mxu0 %v198
    %2716 = vmatpush.msra.mxu0 %v194
    %2717 = vmatpush.msra.mxu0 %v190
    %2718 = vmatpush.msra.mxu0 %v186
    %2719 = vmatmul.f32.gmra.mxu0 %v2562
    %v2720 = vpop.f32.mrf.mxu0
    %v2721 = vadd.f32 %v2701, %v2720
    %2722 = vdwg.mxu0
    %2723 = vmatpush.msra.mxu0 %v310
    %2724 = vmatpush.msra.mxu0 %v306
    %2725 = vmatpush.msra.mxu0 %v302
    %2726 = vmatpush.msra.mxu0 %v298
    %2727 = vmatpush.msra.mxu0 %v294
    %2728 = vmatpush.msra.mxu0 %v290
    %2729 = vmatpush.msra.mxu0 %v286
    %2730 = vmatpush.msra.mxu0 %v282
    %2731 = vmatpush.msra.mxu0 %v278
    %2732 = vmatpush.msra.mxu0 %v274
    %2733 = vmatpush.msra.mxu0 %v270
    %2734 = vmatpush.msra.mxu0 %v266
    %2735 = vmatpush.msra.mxu0 %v262
    %2736 = vmatpush.msra.mxu0 %v258
    %2737 = vmatpush.msra.mxu0 %v254
    %2738 = vmatpush.msra.mxu0 %v250
    %2739 = vmatmul.f32.gmra.mxu0 %v2530
    %v2740 = vpop.f32.mrf.mxu0
    %v2741 = vadd.f32 %v2721, %v2740
    %2742 = vdwg.mxu0
    %2743 = vmatpush.msra.mxu0 %v183
    %2744 = vmatpush.msra.mxu0 %v179
    %2745 = vmatpush.msra.mxu0 %v175
    %2746 = vmatpush.msra.mxu0 %v171
    %2747 = vmatpush.msra.mxu0 %v167
    %2748 = vmatpush.msra.mxu0 %v163
    %2749 = vmatpush.msra.mxu0 %v159
    %2750 = vmatpush.msra.mxu0 %v155
    %2751 = vmatpush.msra.mxu0 %v151
    %2752 = vmatpush.msra.mxu0 %v147
    %2753 = vmatpush.msra.mxu0 %v143
    %2754 = vmatpush.msra.mxu0 %v139
    %2755 = vmatpush.msra.mxu0 %v135
    %2756 = vmatpush.msra.mxu0 %v131
    %2757 = vmatpush.msra.mxu0 %v127
    %2758 = vmatpush.msra.mxu0 %v123
    %2759 = vmatmul.f32.gmra.mxu0 %v2560
    %v2760 = vpop.f32.mrf.mxu0
    %v2761 = vadd.f32 %v369, %v2760
    %2762 = vdwg.mxu0
    %2763 = vmatpush.msra.mxu0 %v247
    %2764 = vmatpush.msra.mxu0 %v243
    %2765 = vmatpush.msra.mxu0 %v239
    %2766 = vmatpush.msra.mxu0 %v235
    %2767 = vmatpush.msra.mxu0 %v231
    %2768 = vmatpush.msra.mxu0 %v227
    %2769 = vmatpush.msra.mxu0 %v223
    %2770 = vmatpush.msra.mxu0 %v219
    %2771 = vmatpush.msra.mxu0 %v215
    %2772 = vmatpush.msra.mxu0 %v211
    %2773 = vmatpush.msra.mxu0 %v207
    %2774 = vmatpush.msra.mxu0 %v203
    %2775 = vmatpush.msra.mxu0 %v199
    %2776 = vmatpush.msra.mxu0 %v195
    %2777 = vmatpush.msra.mxu0 %v191
    %2778 = vmatpush.msra.mxu0 %v187
    %2779 = vmatmul.f32.gmra.mxu0 %v2562
    %v2780 = vpop.f32.mrf.mxu0
    %v2781 = vadd.f32 %v2761, %v2780
    %2782 = vdwg.mxu0
    %2783 = vmatpush.msra.mxu0 %v311
    %2784 = vmatpush.msra.mxu0 %v307
    %2785 = vmatpush.msra.mxu0 %v303
    %2786 = vmatpush.msra.mxu0 %v299
    %2787 = vmatpush.msra.mxu0 %v295
    %2788 = vmatpush.msra.mxu0 %v291
    %2789 = vmatpush.msra.mxu0 %v287
    %2790 = vmatpush.msra.mxu0 %v283
    %2791 = vmatpush.msra.mxu0 %v279
    %2792 = vmatpush.msra.mxu0 %v275
    %2793 = vmatpush.msra.mxu0 %v271
    %2794 = vmatpush.msra.mxu0 %v267
    %2795 = vmatpush.msra.mxu0 %v263
    %2796 = vmatpush.msra.mxu0 %v259
    %2797 = vmatpush.msra.mxu0 %v255
    %2798 = vmatpush.msra.mxu0 %v251
    %2799 = vmatmul.f32.gmra.mxu0 %v2530
    %v2800 = vpop.f32.mrf.mxu0
    %v2801 = vadd.f32 %v2781, %v2800
    %2802 = vdwg.mxu0
    %v2803 = vxor.u32 %v2621, 2147483648
    %v2804 = vmul.f32 %v2803, 1.442695
    %v2805 = vpow.pop %v2804
    %v2806 = vadd.f32 %v2805, 1.0
    %v2807 = vrcp.pop %v2806
    %v2808 = vmul.f32 %v2806, %v2807
    %v2809 = vsub.f32 1.0, %v2808
    %v2810 = vmul.f32 %v2807, %v2809
    %v2811 = vadd.f32 %v2807, %v2810
    %vm2812 = vweird.f32 %v2806
    %vm2813 = vweird.f32 %v2807
    %vm2814 = vmor %vm2812, %vm2813
    %v2815 = vsel %vm2814, %v2807, %v2811
    %v2816 = vand.u32 2147483647, %v2806
    %vm2817 = vcmp.eq.f32.partialorder %v2816, 8.507059e+37
    %v2818 = vand.u32 %v2806, 2147483648
    %v2819 = vor.u32 1.1754944e-38, %v2818
    %v2820 = vsel %vm2817, %v2819, %v2815
    %v2821 = vmul.f32 1.0, %v2820
    %v2822 = vxor.u32 %v2681, 2147483648
    %v2823 = vmul.f32 %v2822, 1.442695
    %v2824 = vpow.pop %v2823
    %v2825 = vadd.f32 %v2824, 1.0
    %v2826 = vrcp.pop %v2825
    %v2827 = vmul.f32 %v2825, %v2826
    %v2828 = vsub.f32 1.0, %v2827
    %v2829 = vmul.f32 %v2826, %v2828
    %v2830 = vadd.f32 %v2826, %v2829
    %vm2831 = vweird.f32 %v2825
    %vm2832 = vweird.f32 %v2826
    %vm2833 = vmor %vm2831, %vm2832
    %v2834 = vsel %vm2833, %v2826, %v2830
    %v2835 = vand.u32 2147483647, %v2825
    %vm2836 = vcmp.eq.f32.partialorder %v2835, 8.507059e+37
    %v2837 = vand.u32 %v2825, 2147483648
    %v2838 = vor.u32 1.1754944e-38, %v2837
    %v2839 = vsel %vm2836, %v2838, %v2834
    %v2840 = vmul.f32 1.0, %v2839
    %v2841 = vtanh.pop %v2741
    %v2842 = vxor.u32 %v2801, 2147483648
    %v2843 = vmul.f32 %v2842, 1.442695
    %v2844 = vpow.pop %v2843
    %v2845 = vadd.f32 %v2844, 1.0
    %v2846 = vrcp.pop %v2845
    %v2847 = vmul.f32 %v2845, %v2846
    %v2848 = vsub.f32 1.0, %v2847
    %v2849 = vmul.f32 %v2846, %v2848
    %v2850 = vadd.f32 %v2846, %v2849
    %vm2851 = vweird.f32 %v2845
    %vm2852 = vweird.f32 %v2846
    %vm2853 = vmor %vm2851, %vm2852
    %v2854 = vsel %vm2853, %v2846, %v2850
    %v2855 = vand.u32 2147483647, %v2845
    %vm2856 = vcmp.eq.f32.partialorder %v2855, 8.507059e+37
    %v2857 = vand.u32 %v2845, 2147483648
    %v2858 = vor.u32 1.1754944e-38, %v2857
    %v2859 = vsel %vm2856, %v2858, %v2854
    %v2860 = vmul.f32 1.0, %v2859
    %v2861 = vmul.f32 %v2840, %v2531
    %v2862 = vmul.f32 %v2821, %v2841
    %v2863 = vadd.f32 %v2861, %v2862
    %v2864 = vtanh.pop %v2863
    %v2865 = vmul.f32 %v2860, %v2864
    %2866 = vmatpush.msra.mxu0 %v328
    %2867 = vmatpush.msra.mxu0 %v327
    %2868 = vmatpush.msra.mxu0 %v326
    %2869 = vmatpush.msra.mxu0 %v325
    %2870 = vmatpush.msra.mxu0 %v324
    %2871 = vmatpush.msra.mxu0 %v323
    %2872 = vmatpush.msra.mxu0 %v322
    %2873 = vmatpush.msra.mxu0 %v321
    %2874 = vmatpush.msra.mxu0 %v320
    %2875 = vmatpush.msra.mxu0 %v319
    %2876 = vmatpush.msra.mxu0 %v318
    %2877 = vmatpush.msra.mxu0 %v317
    %2878 = vmatpush.msra.mxu0 %v316
    %2879 = vmatpush.msra.mxu0 %v315
    %2880 = vmatpush.msra.mxu0 %v314
    %2881 = vmatpush.msra.mxu0 %v313
    %2882 = vmatmul.f32.gmra.mxu0 %v2865
    %v2883 = vpop.f32.mrf.mxu0
    %v2884 = vadd.f32 %v329, %v2883
    %2885 = vdwg.mxu0
    %v2886 = vtanh.pop %v2884
    %2887 = vst [vmem:[#allocation2] sm:$0xff] %v2865
    %2888 = vst [vmem:[#allocation3] sm:$0xff] %v2863
    %2889 = vst [vmem:[#allocation4] sm:$0xff] %v2886
    %s2890 = scalar_lea.vmem [#allocation16], 48
    %2891 = vst [vmem:[%s2890] sm:$0xff] %v2886
    %s2892 = scalar_lea.vmem [#allocation5], 56
    %v2893 = vld [vmem:[%s2892] sm:$0xff]
    %v2894 = vld [vmem:[#allocation4] sm:$0xff]
    %v2895 = vld [vmem:[#allocation2] sm:$0xff]
    %v2896 = vld [vmem:[#allocation3] sm:$0xff]
    %2897 = vadd.xlane.f32.xlu0 %v2893
    %v2898 = vpop.xlane.xlu0 %2897
    %2899 = vadd.xlane.f32.xlu0 %v2894
    %v2900 = vpop.xlane.xlu0 %2899
    %v2901 = vadd.f32 %v2898, %v2900
    %v2902 = vmul.f32 %v2893, %v2893
    %2903 = vadd.xlane.f32.xlu0 %v2902
    %v2904 = vpop.xlane.xlu0 %2903
    %v2905 = vmul.f32 %v2894, %v2894
    %2906 = vadd.xlane.f32.xlu0 %v2905
    %v2907 = vpop.xlane.xlu0 %2906
    %v2908 = vadd.f32 %v2904, %v2907
    %v2909 = vmul.f32 %v2901, 0.015625
    %v2910 = vmul.f32 %v2908, 0.015625
    %v2911 = vmul.f32 %v2909, %v2909
    %v2912 = vsub.f32 %v2910, %v2911
    %v2913 = vadd.f32 %v2912, 1e-05
    %v2914 = vrsqrt.pop %v2913
    %v2915 = vmul.f32 %v2914, %v2913
    %v2916 = vmul.f32 %v2915, %v2914
    %v2917 = vmul.f32 0.5, %v2916
    %v2918 = vsub.f32 1.5, %v2917
    %v2919 = vmul.f32 %v2914, %v2918
    %vm2920 = vweird.f32 %v2913
    %vm2921 = vweird.f32 %v2914
    %vm2922 = vmor %vm2920, %vm2921
    %v2923 = vsel %vm2922, %v2914, %v2919
    %v2924 = vsub.f32 %v2893, %v2909
    %v2925 = vmul.f32 %v2924, %v2923
    %v2926 = vsub.f32 %v2894, %v2909
    %v2927 = vmul.f32 %v2926, %v2923
    %2928 = vmatpush.msra.mxu0 %v180
    %2929 = vmatpush.msra.mxu0 %v176
    %2930 = vmatpush.msra.mxu0 %v172
    %2931 = vmatpush.msra.mxu0 %v168
    %2932 = vmatpush.msra.mxu0 %v164
    %2933 = vmatpush.msra.mxu0 %v160
    %2934 = vmatpush.msra.mxu0 %v156
    %2935 = vmatpush.msra.mxu0 %v152
    %2936 = vmatpush.msra.mxu0 %v148
    %2937 = vmatpush.msra.mxu0 %v144
    %2938 = vmatpush.msra.mxu0 %v140
    %2939 = vmatpush.msra.mxu0 %v136
    %2940 = vmatpush.msra.mxu0 %v132
    %2941 = vmatpush.msra.mxu0 %v128
    %2942 = vmatpush.msra.mxu0 %v124
    %2943 = vmatpush.msra.mxu0 %v120
    %2944 = vmatmul.f32.gmra.mxu0 %v2925
    %v2945 = vpop.f32.mrf.mxu0
    %v2946 = vadd.f32 %v366, %v2945
    %2947 = vdwg.mxu0
    %2948 = vmatpush.msra.mxu0 %v244
    %2949 = vmatpush.msra.mxu0 %v240
    %2950 = vmatpush.msra.mxu0 %v236
    %2951 = vmatpush.msra.mxu0 %v232
    %2952 = vmatpush.msra.mxu0 %v228
    %2953 = vmatpush.msra.mxu0 %v224
    %2954 = vmatpush.msra.mxu0 %v220
    %2955 = vmatpush.msra.mxu0 %v216
    %2956 = vmatpush.msra.mxu0 %v212
    %2957 = vmatpush.msra.mxu0 %v208
    %2958 = vmatpush.msra.mxu0 %v204
    %2959 = vmatpush.msra.mxu0 %v200
    %2960 = vmatpush.msra.mxu0 %v196
    %2961 = vmatpush.msra.mxu0 %v192
    %2962 = vmatpush.msra.mxu0 %v188
    %2963 = vmatpush.msra.mxu0 %v184
    %2964 = vmatmul.f32.gmra.mxu0 %v2927
    %v2965 = vpop.f32.mrf.mxu0
    %v2966 = vadd.f32 %v2946, %v2965
    %2967 = vdwg.mxu0
    %2968 = vmatpush.msra.mxu0 %v308
    %2969 = vmatpush.msra.mxu0 %v304
    %2970 = vmatpush.msra.mxu0 %v300
    %2971 = vmatpush.msra.mxu0 %v296
    %2972 = vmatpush.msra.mxu0 %v292
    %2973 = vmatpush.msra.mxu0 %v288
    %2974 = vmatpush.msra.mxu0 %v284
    %2975 = vmatpush.msra.mxu0 %v280
    %2976 = vmatpush.msra.mxu0 %v276
    %2977 = vmatpush.msra.mxu0 %v272
    %2978 = vmatpush.msra.mxu0 %v268
    %2979 = vmatpush.msra.mxu0 %v264
    %2980 = vmatpush.msra.mxu0 %v260
    %2981 = vmatpush.msra.mxu0 %v256
    %2982 = vmatpush.msra.mxu0 %v252
    %2983 = vmatpush.msra.mxu0 %v248
    %2984 = vmatmul.f32.gmra.mxu0 %v2895
    %v2985 = vpop.f32.mrf.mxu0
    %v2986 = vadd.f32 %v2966, %v2985
    %2987 = vdwg.mxu0
    %2988 = vmatpush.msra.mxu0 %v181
    %2989 = vmatpush.msra.mxu0 %v177
    %2990 = vmatpush.msra.mxu0 %v173
    %2991 = vmatpush.msra.mxu0 %v169
    %2992 = vmatpush.msra.mxu0 %v165
    %2993 = vmatpush.msra.mxu0 %v161
    %2994 = vmatpush.msra.mxu0 %v157
    %2995 = vmatpush.msra.mxu0 %v153
    %2996 = vmatpush.msra.mxu0 %v149
    %2997 = vmatpush.msra.mxu0 %v145
    %2998 = vmatpush.msra.mxu0 %v141
    %2999 = vmatpush.msra.mxu0 %v137
    %3000 = vmatpush.msra.mxu0 %v133
    %3001 = vmatpush.msra.mxu0 %v129
    %3002 = vmatpush.msra.mxu0 %v125
    %3003 = vmatpush.msra.mxu0 %v121
    %3004 = vmatmul.f32.gmra.mxu0 %v2925
    %v3005 = vpop.f32.mrf.mxu0
    %v3006 = vadd.f32 %v367, %v3005
    %3007 = vdwg.mxu0
    %3008 = vmatpush.msra.mxu0 %v245
    %3009 = vmatpush.msra.mxu0 %v241
    %3010 = vmatpush.msra.mxu0 %v237
    %3011 = vmatpush.msra.mxu0 %v233
    %3012 = vmatpush.msra.mxu0 %v229
    %3013 = vmatpush.msra.mxu0 %v225
    %3014 = vmatpush.msra.mxu0 %v221
    %3015 = vmatpush.msra.mxu0 %v217
    %3016 = vmatpush.msra.mxu0 %v213
    %3017 = vmatpush.msra.mxu0 %v209
    %3018 = vmatpush.msra.mxu0 %v205
    %3019 = vmatpush.msra.mxu0 %v201
    %3020 = vmatpush.msra.mxu0 %v197
    %3021 = vmatpush.msra.mxu0 %v193
    %3022 = vmatpush.msra.mxu0 %v189
    %3023 = vmatpush.msra.mxu0 %v185
    %3024 = vmatmul.f32.gmra.mxu0 %v2927
    %v3025 = vpop.f32.mrf.mxu0
    %v3026 = vadd.f32 %v3006, %v3025
    %3027 = vdwg.mxu0
    %3028 = vmatpush.msra.mxu0 %v309
    %3029 = vmatpush.msra.mxu0 %v305
    %3030 = vmatpush.msra.mxu0 %v301
    %3031 = vmatpush.msra.mxu0 %v297
    %3032 = vmatpush.msra.mxu0 %v293
    %3033 = vmatpush.msra.mxu0 %v289
    %3034 = vmatpush.msra.mxu0 %v285
    %3035 = vmatpush.msra.mxu0 %v281
    %3036 = vmatpush.msra.mxu0 %v277
    %3037 = vmatpush.msra.mxu0 %v273
    %3038 = vmatpush.msra.mxu0 %v269
    %3039 = vmatpush.msra.mxu0 %v265
    %3040 = vmatpush.msra.mxu0 %v261
    %3041 = vmatpush.msra.mxu0 %v257
    %3042 = vmatpush.msra.mxu0 %v253
    %3043 = vmatpush.msra.mxu0 %v249
    %3044 = vmatmul.f32.gmra.mxu0 %v2895
    %v3045 = vpop.f32.mrf.mxu0
    %v3046 = vadd.f32 %v3026, %v3045
    %3047 = vdwg.mxu0
    %3048 = vmatpush.msra.mxu0 %v182
    %3049 = vmatpush.msra.mxu0 %v178
    %3050 = vmatpush.msra.mxu0 %v174
    %3051 = vmatpush.msra.mxu0 %v170
    %3052 = vmatpush.msra.mxu0 %v166
    %3053 = vmatpush.msra.mxu0 %v162
    %3054 = vmatpush.msra.mxu0 %v158
    %3055 = vmatpush.msra.mxu0 %v154
    %3056 = vmatpush.msra.mxu0 %v150
    %3057 = vmatpush.msra.mxu0 %v146
    %3058 = vmatpush.msra.mxu0 %v142
    %3059 = vmatpush.msra.mxu0 %v138
    %3060 = vmatpush.msra.mxu0 %v134
    %3061 = vmatpush.msra.mxu0 %v130
    %3062 = vmatpush.msra.mxu0 %v126
    %3063 = vmatpush.msra.mxu0 %v122
    %3064 = vmatmul.f32.gmra.mxu0 %v2925
    %v3065 = vpop.f32.mrf.mxu0
    %v3066 = vadd.f32 %v368, %v3065
    %3067 = vdwg.mxu0
    %3068 = vmatpush.msra.mxu0 %v246
    %3069 = vmatpush.msra.mxu0 %v242
    %3070 = vmatpush.msra.mxu0 %v238
    %3071 = vmatpush.msra.mxu0 %v234
    %3072 = vmatpush.msra.mxu0 %v230
    %3073 = vmatpush.msra.mxu0 %v226
    %3074 = vmatpush.msra.mxu0 %v222
    %3075 = vmatpush.msra.mxu0 %v218
    %3076 = vmatpush.msra.mxu0 %v214
    %3077 = vmatpush.msra.mxu0 %v210
    %3078 = vmatpush.msra.mxu0 %v206
    %3079 = vmatpush.msra.mxu0 %v202
    %3080 = vmatpush.msra.mxu0 %v198
    %3081 = vmatpush.msra.mxu0 %v194
    %3082 = vmatpush.msra.mxu0 %v190
    %3083 = vmatpush.msra.mxu0 %v186
    %3084 = vmatmul.f32.gmra.mxu0 %v2927
    %v3085 = vpop.f32.mrf.mxu0
    %v3086 = vadd.f32 %v3066, %v3085
    %3087 = vdwg.mxu0
    %3088 = vmatpush.msra.mxu0 %v310
    %3089 = vmatpush.msra.mxu0 %v306
    %3090 = vmatpush.msra.mxu0 %v302
    %3091 = vmatpush.msra.mxu0 %v298
    %3092 = vmatpush.msra.mxu0 %v294
    %3093 = vmatpush.msra.mxu0 %v290
    %3094 = vmatpush.msra.mxu0 %v286
    %3095 = vmatpush.msra.mxu0 %v282
    %3096 = vmatpush.msra.mxu0 %v278
    %3097 = vmatpush.msra.mxu0 %v274
    %3098 = vmatpush.msra.mxu0 %v270
    %3099 = vmatpush.msra.mxu0 %v266
    %3100 = vmatpush.msra.mxu0 %v262
    %3101 = vmatpush.msra.mxu0 %v258
    %3102 = vmatpush.msra.mxu0 %v254
    %3103 = vmatpush.msra.mxu0 %v250
    %3104 = vmatmul.f32.gmra.mxu0 %v2895
    %v3105 = vpop.f32.mrf.mxu0
    %v3106 = vadd.f32 %v3086, %v3105
    %3107 = vdwg.mxu0
    %3108 = vmatpush.msra.mxu0 %v183
    %3109 = vmatpush.msra.mxu0 %v179
    %3110 = vmatpush.msra.mxu0 %v175
    %3111 = vmatpush.msra.mxu0 %v171
    %3112 = vmatpush.msra.mxu0 %v167
    %3113 = vmatpush.msra.mxu0 %v163
    %3114 = vmatpush.msra.mxu0 %v159
    %3115 = vmatpush.msra.mxu0 %v155
    %3116 = vmatpush.msra.mxu0 %v151
    %3117 = vmatpush.msra.mxu0 %v147
    %3118 = vmatpush.msra.mxu0 %v143
    %3119 = vmatpush.msra.mxu0 %v139
    %3120 = vmatpush.msra.mxu0 %v135
    %3121 = vmatpush.msra.mxu0 %v131
    %3122 = vmatpush.msra.mxu0 %v127
    %3123 = vmatpush.msra.mxu0 %v123
    %3124 = vmatmul.f32.gmra.mxu0 %v2925
    %v3125 = vpop.f32.mrf.mxu0
    %v3126 = vadd.f32 %v369, %v3125
    %3127 = vdwg.mxu0
    %3128 = vmatpush.msra.mxu0 %v247
    %3129 = vmatpush.msra.mxu0 %v243
    %3130 = vmatpush.msra.mxu0 %v239
    %3131 = vmatpush.msra.mxu0 %v235
    %3132 = vmatpush.msra.mxu0 %v231
    %3133 = vmatpush.msra.mxu0 %v227
    %3134 = vmatpush.msra.mxu0 %v223
    %3135 = vmatpush.msra.mxu0 %v219
    %3136 = vmatpush.msra.mxu0 %v215
    %3137 = vmatpush.msra.mxu0 %v211
    %3138 = vmatpush.msra.mxu0 %v207
    %3139 = vmatpush.msra.mxu0 %v203
    %3140 = vmatpush.msra.mxu0 %v199
    %3141 = vmatpush.msra.mxu0 %v195
    %3142 = vmatpush.msra.mxu0 %v191
    %3143 = vmatpush.msra.mxu0 %v187
    %3144 = vmatmul.f32.gmra.mxu0 %v2927
    %v3145 = vpop.f32.mrf.mxu0
    %v3146 = vadd.f32 %v3126, %v3145
    %3147 = vdwg.mxu0
    %3148 = vmatpush.msra.mxu0 %v311
    %3149 = vmatpush.msra.mxu0 %v307
    %3150 = vmatpush.msra.mxu0 %v303
    %3151 = vmatpush.msra.mxu0 %v299
    %3152 = vmatpush.msra.mxu0 %v295
    %3153 = vmatpush.msra.mxu0 %v291
    %3154 = vmatpush.msra.mxu0 %v287
    %3155 = vmatpush.msra.mxu0 %v283
    %3156 = vmatpush.msra.mxu0 %v279
    %3157 = vmatpush.msra.mxu0 %v275
    %3158 = vmatpush.msra.mxu0 %v271
    %3159 = vmatpush.msra.mxu0 %v267
    %3160 = vmatpush.msra.mxu0 %v263
    %3161 = vmatpush.msra.mxu0 %v259
    %3162 = vmatpush.msra.mxu0 %v255
    %3163 = vmatpush.msra.mxu0 %v251
    %3164 = vmatmul.f32.gmra.mxu0 %v2895
    %v3165 = vpop.f32.mrf.mxu0
    %v3166 = vadd.f32 %v3146, %v3165
    %3167 = vdwg.mxu0
    %v3168 = vxor.u32 %v2986, 2147483648
    %v3169 = vmul.f32 %v3168, 1.442695
    %v3170 = vpow.pop %v3169
    %v3171 = vadd.f32 %v3170, 1.0
    %v3172 = vrcp.pop %v3171
    %v3173 = vmul.f32 %v3171, %v3172
    %v3174 = vsub.f32 1.0, %v3173
    %v3175 = vmul.f32 %v3172, %v3174
    %v3176 = vadd.f32 %v3172, %v3175
    %vm3177 = vweird.f32 %v3171
    %vm3178 = vweird.f32 %v3172
    %vm3179 = vmor %vm3177, %vm3178
    %v3180 = vsel %vm3179, %v3172, %v3176
    %v3181 = vand.u32 2147483647, %v3171
    %vm3182 = vcmp.eq.f32.partialorder %v3181, 8.507059e+37
    %v3183 = vand.u32 %v3171, 2147483648
    %v3184 = vor.u32 1.1754944e-38, %v3183
    %v3185 = vsel %vm3182, %v3184, %v3180
    %v3186 = vmul.f32 1.0, %v3185
    %v3187 = vxor.u32 %v3046, 2147483648
    %v3188 = vmul.f32 %v3187, 1.442695
    %v3189 = vpow.pop %v3188
    %v3190 = vadd.f32 %v3189, 1.0
    %v3191 = vrcp.pop %v3190
    %v3192 = vmul.f32 %v3190, %v3191
    %v3193 = vsub.f32 1.0, %v3192
    %v3194 = vmul.f32 %v3191, %v3193
    %v3195 = vadd.f32 %v3191, %v3194
    %vm3196 = vweird.f32 %v3190
    %vm3197 = vweird.f32 %v3191
    %vm3198 = vmor %vm3196, %vm3197
    %v3199 = vsel %vm3198, %v3191, %v3195
    %v3200 = vand.u32 2147483647, %v3190
    %vm3201 = vcmp.eq.f32.partialorder %v3200, 8.507059e+37
    %v3202 = vand.u32 %v3190, 2147483648
    %v3203 = vor.u32 1.1754944e-38, %v3202
    %v3204 = vsel %vm3201, %v3203, %v3199
    %v3205 = vmul.f32 1.0, %v3204
    %v3206 = vtanh.pop %v3106
    %v3207 = vxor.u32 %v3166, 2147483648
    %v3208 = vmul.f32 %v3207, 1.442695
    %v3209 = vpow.pop %v3208
    %v3210 = vadd.f32 %v3209, 1.0
    %v3211 = vrcp.pop %v3210
    %v3212 = vmul.f32 %v3210, %v3211
    %v3213 = vsub.f32 1.0, %v3212
    %v3214 = vmul.f32 %v3211, %v3213
    %v3215 = vadd.f32 %v3211, %v3214
    %vm3216 = vweird.f32 %v3210
    %vm3217 = vweird.f32 %v3211
    %vm3218 = vmor %vm3216, %vm3217
    %v3219 = vsel %vm3218, %v3211, %v3215
    %v3220 = vand.u32 2147483647, %v3210
    %vm3221 = vcmp.eq.f32.partialorder %v3220, 8.507059e+37
    %v3222 = vand.u32 %v3210, 2147483648
    %v3223 = vor.u32 1.1754944e-38, %v3222
    %v3224 = vsel %vm3221, %v3223, %v3219
    %v3225 = vmul.f32 1.0, %v3224
    %v3226 = vmul.f32 %v3205, %v2896
    %v3227 = vmul.f32 %v3186, %v3206
    %v3228 = vadd.f32 %v3226, %v3227
    %v3229 = vtanh.pop %v3228
    %v3230 = vmul.f32 %v3225, %v3229
    %3231 = vmatpush.msra.mxu0 %v328
    %3232 = vmatpush.msra.mxu0 %v327
    %3233 = vmatpush.msra.mxu0 %v326
    %3234 = vmatpush.msra.mxu0 %v325
    %3235 = vmatpush.msra.mxu0 %v324
    %3236 = vmatpush.msra.mxu0 %v323
    %3237 = vmatpush.msra.mxu0 %v322
    %3238 = vmatpush.msra.mxu0 %v321
    %3239 = vmatpush.msra.mxu0 %v320
    %3240 = vmatpush.msra.mxu0 %v319
    %3241 = vmatpush.msra.mxu0 %v318
    %3242 = vmatpush.msra.mxu0 %v317
    %3243 = vmatpush.msra.mxu0 %v316
    %3244 = vmatpush.msra.mxu0 %v315
    %3245 = vmatpush.msra.mxu0 %v314
    %3246 = vmatpush.msra.mxu0 %v313
    %3247 = vmatmul.f32.gmra.mxu0 %v3230
    %v3248 = vpop.f32.mrf.mxu0
    %v3249 = vadd.f32 %v329, %v3248
    %3250 = vdwg.mxu0
    %v3251 = vtanh.pop %v3249
    %3252 = vst [vmem:[#allocation2] sm:$0xff] %v3230
    %3253 = vst [vmem:[#allocation3] sm:$0xff] %v3228
    %3254 = vst [vmem:[#allocation4] sm:$0xff] %v3251
    %s3255 = scalar_lea.vmem [#allocation16], 56
    %3256 = vst [vmem:[%s3255] sm:$0xff] %v3251
    // Predicated region
    $region54: #{tpu_custom_call.1} parent=1 // pred_check
      _
    $region55: #{tpu_custom_call.1} parent=1 // pred_check_branch
      %3258 = sbr.rel (0) target = $region57
    $region56: #{tpu_custom_call.1} parent=1 // pred_region
      %3260 = vsyncadd [#allocation7], 0
      %s3261 = sshll.u32 [#allocation16], 4
      %s3262 = int_to_ptr.vmem [resolvable:$true] %s3261
      %s3263 = sshll.u32 %s6, 4
      %s3264 = int_to_ptr.hbm [resolvable:$true] %s3263
      %3269 = dma.vmem_to_hbm [thread:$0]  %s3262, 1024, %s3264, [#allocation7], 128, 128, 8
    $region57: #{tpu_custom_call.1} parent=1 // pred_fallthru
      _
    // Predicated region
    $region58: #{tpu_custom_call.1} parent=1 // pred_check
      _
    $region59: #{tpu_custom_call.1} parent=1 // pred_check_branch
      %3271 = sbr.rel (0) target = $region61
    $region60: #{tpu_custom_call.1} parent=1 // pred_region
      %3273 = dma.done [#allocation7], 1024
    $region61: #{tpu_custom_call.1} parent=1 // pred_fallthru
      _
    %3274 = vsyncpa [#allocation6], 1
    %3275 = vsyncpa [#allocation9], 1
    %3276 = vsyncpa [#allocation12], 1
    %3277 = vsyncpa [#allocation15], 1
    %3278 = vsyncpa [#allocation7], 1

</llo_original>
